<compile_context>
chip_gen: v7x
topology: tpu7x:2x2x1
jax: 0.10.0
libtpu: 0.0.40
codegen_flags: <defaults>
</compile_context>

<pallas_src>
import jax
import jax.numpy as jnp
from jax import lax
from jax.experimental import pallas as pl
from jax.experimental.pallas import tpu as pltpu

LN_EPS = 1e-5  # torch.nn.LayerNorm default


def _axial_entity_kernel(feat_ref, mk_ref, mv_ref, ffn_w_ref, ffn_b_ref,
                         ln_g_ref, ln_b_ref, clf_w_ref, clf_b_ref,
                         feat_out_ref, logits_out_ref):
    Bb, N1, N2, C = feat_ref.shape
    L = mk_ref.shape[0]
    S2 = mk_ref.shape[-1]              # 2*S (height || width memory units, lane dense)
    S = S2 // 2
    NL = clf_w_ref.shape[-1]           # real number of labels (no lane padding)
    R = Bb * N1 * N2                   # batch folded into matmul rows

    x0 = feat_ref[...].astype(jnp.float32).reshape(R, C)

    # Static lane mask: lanes [0, S) = "height" axial branch, [S, 2S) = "width".
    # Hoisted out of the layer loop (JAX does not CSE broadcast_in_dim).
    lane_h = lax.broadcasted_iota(jnp.int32, (1, 1, 1, S2), 3) < S
    inv_c = 1.0 / C

    def _layer(l, x):
        xb = x.astype(jnp.bfloat16)
        # Fused mk matmul for both axial directions: (R, C) @ (C, 2S).
        a = jnp.dot(xb, mk_ref[l], preferred_element_type=jnp.float32)
        a = a.reshape(Bb, N1, N2, S2)

        # Fused, full-lane-width axial softmax: height half over axis=1,
        # width half over axis=2 (no half-width slices / concat relayouts).
        m = jnp.where(lane_h,
                      jnp.max(a, axis=1, keepdims=True),
                      jnp.max(a, axis=2, keepdims=True))
        e = jnp.exp(a - m)
        den = jnp.where(lane_h,
                        jnp.sum(e, axis=1, keepdims=True),
                        jnp.sum(e, axis=2, keepdims=True))
        p = e * pl.reciprocal(den, approx=True)
        # Per-branch L1 normalization over the S memory units.  Exact division
        # here so the approximate softmax reciprocal error does not compound.
        h_sum = jnp.sum(jnp.where(lane_h, p, 0.0), axis=-1, keepdims=True)
        w_sum = jnp.sum(p, axis=-1, keepdims=True) - h_sum
        p = p / jnp.where(lane_h, h_sum, w_sum)

        # Fused mv matmul: out_h + out_w == [p_h | p_w] @ [mv_h ; mv_w]; residual.
        x = x + jnp.dot(p.reshape(R, S2).astype(jnp.bfloat16), mv_ref[l],
                        preferred_element_type=jnp.float32)

        # Per-layer FFN (Linear C->C) followed by LayerNorm (same structure as
        # the previously-validated forward: x = LN(FFN(x + attn))).
        y = jnp.dot(x.astype(jnp.bfloat16), ffn_w_ref[l],
                    preferred_element_type=jnp.float32) + ffn_b_ref[l]
        mu = jnp.sum(y, axis=-1, keepdims=True) * inv_c
        yc = y - mu
        var = jnp.sum(yc * yc, axis=-1, keepdims=True) * inv_c
        return yc * lax.rsqrt(var + LN_EPS) * ln_g_ref[l] + ln_b_ref[l]

    # L = 6: fully unrolled so the LLO scheduler can overlap layers.
    x = lax.fori_loop(0, L, _layer, x0, unroll=True)

    # Outer residual: feature = axial_transformer(feature) + feature.
    feat_out = x + x0
    feat_out_ref[...] = feat_out.reshape(Bb, N1, N2, C).astype(feat_out_ref.dtype)

    # classifier_t over the real label columns only, plus the diagonal
    # self-mask (i == j zeroed) built from small broadcastable iotas.
    logits = jnp.dot(feat_out.astype(jnp.bfloat16), clf_w_ref[...],
                     preferred_element_type=jnp.float32) + clf_b_ref[...]
    logits = logits.reshape(Bb, N1, N2, NL)
    row = lax.broadcasted_iota(jnp.int32, (1, N1, N2, NL), 1)
    col = lax.broadcasted_iota(jnp.int32, (1, N1, N2, NL), 2)
    logits = jnp.where(row == col, 0.0, logits)
    logits_out_ref[...] = logits.astype(logits_out_ref.dtype)


# ---------------------------------------------------------------------------
# Wrapper-side helpers.
# ---------------------------------------------------------------------------

def fuse_params(params):
    """One-time weight fusion / transpose / bf16 cast (hoisted out of forward)."""
    f32, bf16 = jnp.float32, jnp.bfloat16
    mk = jnp.concatenate([params["mk"][:, 0], params["mk"][:, 1]], axis=-1)   # (L, C, 2S)
    mv = jnp.concatenate([params["mv"][:, 0], params["mv"][:, 1]], axis=1)    # (L, 2S, C)
    return dict(
        mk=mk.astype(bf16),
        mv=mv.astype(bf16),
        ffn_w=params["ffn_w"].astype(bf16),   # (L, C, C)
        ffn_b=params["ffn_b"].astype(f32),    # (L, 1, C)
        ln_g=params["ln_g"].astype(f32),      # (L, 1, C)
        ln_b=params["ln_b"].astype(f32),      # (L, 1, C)
        clf_w=params["clf_w"].astype(bf16),   # (C, NL)
        clf_b=params["clf_b"].astype(f32),    # (1, NL)
    )


def _vmem_bytes(b_blk, N1, N2, C, S2, NL, weight_bytes):
    """Per-step VMEM estimate: double-buffered I/O blocks + ~6 live f32
    (rows, max(C, 2S)) temporaries + single-buffered weights."""
    rows = b_blk * N1 * N2
    io = 2 * rows * (2 * C + NL) * 4
    tmp = 6 * rows * max(C, S2) * 4
    return io + tmp + weight_bytes


def _pick_b_blk(B, N1, N2, C, S2, NL, weight_bytes, budget=40 << 20):
    """Largest batch block that fits the VMEM budget while keeping >=2 grid
    steps (pipelining; v7x 2-TC sharding), preferring an even grid length.
    Budget is conservative for v7x (64 MiB physical VMEM)."""
    divisors = [b for b in range(1, B + 1) if B % b == 0]
    fits = [b for b in divisors
            if _vmem_bytes(b, N1, N2, C, S2, NL, weight_bytes) <= budget]
    if not fits:
        return 1
    multi = [b for b in fits if B // b >= 2]
    if multi:
        even = [b for b in multi if (B // b) % 2 == 0]
        return max(even) if even else max(multi)
    return max(fits)


def entity_pair_enhance_forward(feature, nes, fused, *, b_blk=None):
    """feature: (B, N, N, C) channel-last.  Returns (feature_out, logits_t)."""
    B, N1, N2, C = feature.shape
    L, _, S2 = fused["mk"].shape
    num_labels = fused["clf_w"].shape[-1]

    weight_bytes = sum(int(v.size) * v.dtype.itemsize for v in fused.values())
    if b_blk is None:
        b_blk = _pick_b_blk(B, N1, N2, C, S2, num_labels, weight_bytes)
    assert B % b_blk == 0
    grid = (B // b_blk,)

    est = _vmem_bytes(b_blk, N1, N2, C, S2, num_labels, weight_bytes)
    vmem_limit = int(min(56 << 20, max(est + (8 << 20), 16 << 20)))

    def rep(arr):
        # Replicated weights: constant index_map, single-buffered (never refetched).
        nd = arr.ndim
        return pl.BlockSpec(arr.shape, lambda b, _nd=nd: (0,) * _nd,
                            pipeline_mode=pl.Buffered(1))

    rows = B * N1 * N2
    flops = rows * (2 * L * (C * S2 + S2 * C + C * C) + 2 * C * num_labels)
    transcendentals = rows * L * S2
    bytes_accessed = int(feature.size * 4 * 2 + rows * num_labels * 4 + weight_bytes)

    feat_out, logits = pl.pallas_call(
        _axial_entity_kernel,
        out_shape=(
            jax.ShapeDtypeStruct((B, N1, N2, C), feature.dtype),
            jax.ShapeDtypeStruct((B, N1, N2, num_labels), feature.dtype),
        ),
        grid_spec=pltpu.PrefetchScalarGridSpec(
            num_scalar_prefetch=0,
            grid=grid,
            in_specs=[
                pl.BlockSpec((b_blk, N1, N2, C), lambda b: (b, 0, 0, 0)),
                rep(fused["mk"]), rep(fused["mv"]), rep(fused["ffn_w"]),
                rep(fused["ffn_b"]), rep(fused["ln_g"]), rep(fused["ln_b"]),
                rep(fused["clf_w"]), rep(fused["clf_b"]),
            ],
            out_specs=[
                pl.BlockSpec((b_blk, N1, N2, C), lambda b: (b, 0, 0, 0)),
                pl.BlockSpec((b_blk, N1, N2, num_labels), lambda b: (b, 0, 0, 0)),
            ],
        ),
        compiler_params=pltpu.CompilerParams(
            dimension_semantics=("parallel",),
            vmem_limit_bytes=vmem_limit),
        cost_estimate=pl.CostEstimate(
            flops=int(flops),
            transcendentals=int(transcendentals),
            bytes_accessed=bytes_accessed),
    )(feature, fused["mk"], fused["mv"], fused["ffn_w"], fused["ffn_b"],
      fused["ln_g"], fused["ln_b"], fused["clf_w"], fused["clf_b"])

    # Ragged per-batch slicing/concat (data-dependent output shape) stays in
    # plain JAX: nes are Python ints here, so all shapes are static.
    pieces = [logits[b, :int(nes[b]), :int(nes[b]), :].reshape(-1, num_labels)
              for b in range(B)]
    return feat_out, jnp.concatenate(pieces, axis=0)


def init_params(key, C, S, L, num_labels):
    ks = jax.random.split(key, 6)
    bound = 1.0 / (C ** 0.5)
    return dict(
        # mk / mv: SingleHeadExternalAttention init (normal std=0.001, no bias),
        # stored pre-transposed so the kernel does x @ W.
        mk=0.001 * jax.random.normal(ks[0], (L, 2, C, S), jnp.float32),
        mv=0.001 * jax.random.normal(ks[1], (L, 2, S, C), jnp.float32),
        # FFN Linear(C, C): torch default U(-1/sqrt(C), 1/sqrt(C)); pre-transposed.
        ffn_w=jax.random.uniform(ks[2], (L, C, C), jnp.float32, -bound, bound),
        ffn_b=jax.random.uniform(ks[3], (L, 1, C), jnp.float32, -bound, bound),
        # LayerNorm affine params.
        ln_g=jnp.ones((L, 1, C), jnp.float32),
        ln_b=jnp.zeros((L, 1, C), jnp.float32),
        # classifier_t Linear(hidden, num_labels), pre-transposed.
        clf_w=jax.random.uniform(ks[4], (C, num_labels), jnp.float32, -bound, bound),
        clf_b=jax.random.uniform(ks[5], (1, num_labels), jnp.float32, -bound, bound),
    )


if __name__ == "__main__":
    B, N, C, num_labels, S, L, heads = 2, 8, 32, 4, 64, 6, 8
    assert C % heads == 0

    key = jax.random.PRNGKey(0)
    k_feat, k_params = jax.random.split(key, 2)
    feature = jax.random.normal(k_feat, (B, N, N, C), jnp.float32)
    nes = [8, 5]  # entities per batch element (<= N); diagonal mask is in-kernel

    params = init_params(k_params, C, S, L, num_labels)
    fused = fuse_params(params)  # one-time weight fusion, hoisted out of the forward

    feat_out, logits_classifier_t = entity_pair_enhance_forward(feature, nes, fused)
    jax.block_until_ready((feat_out, logits_classifier_t))

    assert feat_out.shape == (B, N, N, C)
    assert logits_classifier_t.shape == (
        nes[0] * nes[0] + nes[1] * nes[1], num_labels)
    print("KERNEL_OK")
</pallas_src>

<mosaic_0001>
module attributes {stable_mosaic.version = 11 : i64} {
  func.func @_axial_entity_kernel(%arg0: i32, %arg1: memref<1x8x8x32xf32, #tpu.memory_space<vmem>>, %arg2: memref<6x32x128xbf16, #tpu.memory_space<vmem>>, %arg3: memref<6x128x32xbf16, #tpu.memory_space<vmem>>, %arg4: memref<6x32x32xbf16, #tpu.memory_space<vmem>>, %arg5: memref<6x1x32xf32, #tpu.memory_space<vmem>>, %arg6: memref<6x1x32xf32, #tpu.memory_space<vmem>>, %arg7: memref<6x1x32xf32, #tpu.memory_space<vmem>>, %arg8: memref<32x4xbf16, #tpu.memory_space<vmem>>, %arg9: memref<1x4xf32, #tpu.memory_space<vmem>>, %arg10: memref<1x8x8x32xf32, #tpu.memory_space<vmem>>, %arg11: memref<1x8x8x4xf32, #tpu.memory_space<vmem>>) attributes {dimension_semantics = [#tpu.dimension_semantics<parallel>], iteration_bounds = array<i64: 2>, scalar_prefetch = 0 : i64, scratch_operands = 0 : i64, tpu.core_type = #tpu.core_type<tc>, window_params = [{transform_indices = @transform_0, window_bounds = array<i64: 1, 8, 8, 32>}, {pipeline_mode = #tpu.pipeline_mode<synchronous>, transform_indices = @transform_1, window_bounds = array<i64: 6, 32, 128>}, {pipeline_mode = #tpu.pipeline_mode<synchronous>, transform_indices = @transform_2, window_bounds = array<i64: 6, 128, 32>}, {pipeline_mode = #tpu.pipeline_mode<synchronous>, transform_indices = @transform_3, window_bounds = array<i64: 6, 32, 32>}, {pipeline_mode = #tpu.pipeline_mode<synchronous>, transform_indices = @transform_4, window_bounds = array<i64: 6, 1, 32>}, {pipeline_mode = #tpu.pipeline_mode<synchronous>, transform_indices = @transform_5, window_bounds = array<i64: 6, 1, 32>}, {pipeline_mode = #tpu.pipeline_mode<synchronous>, transform_indices = @transform_6, window_bounds = array<i64: 6, 1, 32>}, {pipeline_mode = #tpu.pipeline_mode<synchronous>, transform_indices = @transform_7, window_bounds = array<i64: 32, 4>}, {pipeline_mode = #tpu.pipeline_mode<synchronous>, transform_indices = @transform_8, window_bounds = array<i64: 1, 4>}, {transform_indices = @transform_9, window_bounds = array<i64: 1, 8, 8, 32>}, {transform_indices = @transform_10, window_bounds = array<i64: 1, 8, 8, 4>}]} {
    %c0 = arith.constant 0 : index
    %c0_0 = arith.constant 0 : index
    %c0_1 = arith.constant 0 : index
    %c0_2 = arith.constant 0 : index
    %0 = vector.load %arg1[%c0, %c0_0, %c0_1, %c0_2] : memref<1x8x8x32xf32, #tpu.memory_space<vmem>>, vector<1x8x8x32xf32>
    %1 = vector.shape_cast %0 : vector<1x8x8x32xf32> to vector<64x32xf32>
    %2 = tpu.iota {dimensions = array<i32: 3>} : vector<1x1x1x128xi32>
    %c64_i32 = arith.constant 64 : i32
    %3 = vector.broadcast %c64_i32 : i32 to vector<1x1x1x128xi32>
    %4 = arith.cmpi slt, %2, %3 : vector<1x1x1x128xi32>
    %c0_i32 = arith.constant 0 : i32
    %5 = arith.truncf %1 : vector<64x32xf32> to vector<64x32xbf16>
    %6 = arith.index_cast %c0_i32 : i32 to index
    %c0_3 = arith.constant 0 : index
    %c0_4 = arith.constant 0 : index
    %7 = vector.load %arg2[%6, %c0_3, %c0_4] : memref<6x32x128xbf16, #tpu.memory_space<vmem>>, vector<1x32x128xbf16>
    %8 = vector.shape_cast %7 : vector<1x32x128xbf16> to vector<32x128xbf16>
    %cst = arith.constant dense<0.000000e+00> : vector<64x128xf32>
    %9 = tpu.matmul %5, %8, %cst {dimension_numbers = #tpu.dot_dimension_numbers<[1], [0], [0], [1], [0, 0, 1, 1], [], []>} : vector<64x32xbf16>, vector<32x128xbf16>, vector<64x128xf32> -> vector<64x128xf32>
    %10 = vector.shape_cast %9 : vector<64x128xf32> to vector<1x8x8x128xf32>
    %cst_5 = arith.constant dense<0xFF800000> : vector<1x8x128xf32>
    %11 = vector.multi_reduction <maximumf>, %10, %cst_5 [1] : vector<1x8x8x128xf32> to vector<1x8x128xf32>
    %12 = vector.shape_cast %11 : vector<1x8x128xf32> to vector<1x1x8x128xf32>
    %cst_6 = arith.constant dense<0xFF800000> : vector<1x8x128xf32>
    %13 = vector.multi_reduction <maximumf>, %10, %cst_6 [2] : vector<1x8x8x128xf32> to vector<1x8x128xf32>
    %14 = vector.shape_cast %13 : vector<1x8x128xf32> to vector<1x8x1x128xf32>
    %15 = vector.shape_cast %4 : vector<1x1x1x128xi1> to vector<1x1x1x128xi1>
    %16 = vector.broadcast %15 : vector<1x1x1x128xi1> to vector<1x8x8x128xi1>
    %17 = vector.shape_cast %12 : vector<1x1x8x128xf32> to vector<1x1x8x128xf32>
    %18 = vector.broadcast %17 : vector<1x1x8x128xf32> to vector<1x8x8x128xf32>
    %19 = vector.shape_cast %14 : vector<1x8x1x128xf32> to vector<1x8x1x128xf32>
    %20 = vector.broadcast %19 : vector<1x8x1x128xf32> to vector<1x8x8x128xf32>
    %21 = arith.select %16, %18, %20 : vector<1x8x8x128xi1>, vector<1x8x8x128xf32>
    %22 = arith.subf %10, %21 : vector<1x8x8x128xf32>
    %23 = math.exp %22 : vector<1x8x8x128xf32>
    %cst_7 = arith.constant dense<0.000000e+00> : vector<1x8x128xf32>
    %24 = vector.multi_reduction <add>, %23, %cst_7 [1] : vector<1x8x8x128xf32> to vector<1x8x128xf32>
    %25 = vector.shape_cast %24 : vector<1x8x128xf32> to vector<1x1x8x128xf32>
    %cst_8 = arith.constant dense<0.000000e+00> : vector<1x8x128xf32>
    %26 = vector.multi_reduction <add>, %23, %cst_8 [2] : vector<1x8x8x128xf32> to vector<1x8x128xf32>
    %27 = vector.shape_cast %26 : vector<1x8x128xf32> to vector<1x8x1x128xf32>
    %28 = vector.shape_cast %4 : vector<1x1x1x128xi1> to vector<1x1x1x128xi1>
    %29 = vector.broadcast %28 : vector<1x1x1x128xi1> to vector<1x8x8x128xi1>
    %30 = vector.shape_cast %25 : vector<1x1x8x128xf32> to vector<1x1x8x128xf32>
    %31 = vector.broadcast %30 : vector<1x1x8x128xf32> to vector<1x8x8x128xf32>
    %32 = vector.shape_cast %27 : vector<1x8x1x128xf32> to vector<1x8x1x128xf32>
    %33 = vector.broadcast %32 : vector<1x8x1x128xf32> to vector<1x8x8x128xf32>
    %34 = arith.select %29, %31, %33 : vector<1x8x8x128xi1>, vector<1x8x8x128xf32>
    %35 = tpu.reciprocal %34 {approx = true} : vector<1x8x8x128xf32> -> vector<1x8x8x128xf32>
    %36 = arith.mulf %23, %35 : vector<1x8x8x128xf32>
    %cst_9 = arith.constant 0.000000e+00 : f32
    %37 = vector.shape_cast %4 : vector<1x1x1x128xi1> to vector<1x1x1x128xi1>
    %38 = vector.broadcast %37 : vector<1x1x1x128xi1> to vector<1x8x8x128xi1>
    %39 = vector.broadcast %cst_9 : f32 to vector<1x8x8x128xf32>
    %40 = arith.select %38, %36, %39 : vector<1x8x8x128xi1>, vector<1x8x8x128xf32>
    %cst_10 = arith.constant dense<0.000000e+00> : vector<1x8x8xf32>
    %41 = vector.multi_reduction <add>, %40, %cst_10 [3] : vector<1x8x8x128xf32> to vector<1x8x8xf32>
    %42 = vector.shape_cast %41 : vector<1x8x8xf32> to vector<1x8x8x1xf32>
    %cst_11 = arith.constant dense<0.000000e+00> : vector<1x8x8xf32>
    %43 = vector.multi_reduction <add>, %36, %cst_11 [3] : vector<1x8x8x128xf32> to vector<1x8x8xf32>
    %44 = vector.shape_cast %43 : vector<1x8x8xf32> to vector<1x8x8x1xf32>
    %45 = arith.subf %44, %42 : vector<1x8x8x1xf32>
    %46 = vector.shape_cast %4 : vector<1x1x1x128xi1> to vector<1x1x1x128xi1>
    %47 = vector.broadcast %46 : vector<1x1x1x128xi1> to vector<1x8x8x128xi1>
    %48 = vector.shape_cast %42 : vector<1x8x8x1xf32> to vector<1x8x8x1xf32>
    %49 = vector.broadcast %48 : vector<1x8x8x1xf32> to vector<1x8x8x128xf32>
    %50 = vector.shape_cast %45 : vector<1x8x8x1xf32> to vector<1x8x8x1xf32>
    %51 = vector.broadcast %50 : vector<1x8x8x1xf32> to vector<1x8x8x128xf32>
    %52 = arith.select %47, %49, %51 : vector<1x8x8x128xi1>, vector<1x8x8x128xf32>
    %53 = arith.divf %36, %52 : vector<1x8x8x128xf32>
    %54 = vector.shape_cast %53 : vector<1x8x8x128xf32> to vector<64x128xf32>
    %55 = arith.truncf %54 : vector<64x128xf32> to vector<64x128xbf16>
    %56 = arith.index_cast %c0_i32 : i32 to index
    %c0_12 = arith.constant 0 : index
    %c0_13 = arith.constant 0 : index
    %57 = vector.load %arg3[%56, %c0_12, %c0_13] : memref<6x128x32xbf16, #tpu.memory_space<vmem>>, vector<1x128x32xbf16>
    %58 = vector.shape_cast %57 : vector<1x128x32xbf16> to vector<128x32xbf16>
    %cst_14 = arith.constant dense<0.000000e+00> : vector<64x32xf32>
    %59 = tpu.matmul %55, %58, %cst_14 {dimension_numbers = #tpu.dot_dimension_numbers<[1], [0], [0], [1], [0, 0, 1, 1], [], []>} : vector<64x128xbf16>, vector<128x32xbf16>, vector<64x32xf32> -> vector<64x32xf32>
    %60 = arith.addf %1, %59 : vector<64x32xf32>
    %61 = arith.truncf %60 : vector<64x32xf32> to vector<64x32xbf16>
    %62 = arith.index_cast %c0_i32 : i32 to index
    %c0_15 = arith.constant 0 : index
    %c0_16 = arith.constant 0 : index
    %63 = vector.load %arg4[%62, %c0_15, %c0_16] : memref<6x32x32xbf16, #tpu.memory_space<vmem>>, vector<1x32x32xbf16>
    %64 = vector.shape_cast %63 : vector<1x32x32xbf16> to vector<32x32xbf16>
    %cst_17 = arith.constant dense<0.000000e+00> : vector<64x32xf32>
    %65 = tpu.matmul %61, %64, %cst_17 {dimension_numbers = #tpu.dot_dimension_numbers<[1], [0], [0], [1], [0, 0, 1, 1], [], []>} : vector<64x32xbf16>, vector<32x32xbf16>, vector<64x32xf32> -> vector<64x32xf32>
    %66 = arith.index_cast %c0_i32 : i32 to index
    %c0_18 = arith.constant 0 : index
    %c0_19 = arith.constant 0 : index
    %67 = vector.load %arg5[%66, %c0_18, %c0_19] : memref<6x1x32xf32, #tpu.memory_space<vmem>>, vector<1x1x32xf32>
    %68 = vector.shape_cast %67 : vector<1x1x32xf32> to vector<1x32xf32>
    %69 = vector.broadcast %68 : vector<1x32xf32> to vector<64x32xf32>
    %70 = arith.addf %65, %69 : vector<64x32xf32>
    %cst_20 = arith.constant dense<0.000000e+00> : vector<64xf32>
    %71 = vector.multi_reduction <add>, %70, %cst_20 [1] : vector<64x32xf32> to vector<64xf32>
    %72 = vector.shape_cast %71 : vector<64xf32> to vector<64x1xf32>
    %cst_21 = arith.constant 3.125000e-02 : f32
    %73 = vector.broadcast %cst_21 : f32 to vector<64x1xf32>
    %74 = arith.mulf %72, %73 : vector<64x1xf32>
    %75 = vector.broadcast %74 : vector<64x1xf32> to vector<64x32xf32>
    %76 = arith.subf %70, %75 : vector<64x32xf32>
    %77 = arith.mulf %76, %76 : vector<64x32xf32>
    %cst_22 = arith.constant dense<0.000000e+00> : vector<64xf32>
    %78 = vector.multi_reduction <add>, %77, %cst_22 [1] : vector<64x32xf32> to vector<64xf32>
    %79 = vector.shape_cast %78 : vector<64xf32> to vector<64x1xf32>
    %cst_23 = arith.constant 3.125000e-02 : f32
    %80 = vector.broadcast %cst_23 : f32 to vector<64x1xf32>
    %81 = arith.mulf %79, %80 : vector<64x1xf32>
    %cst_24 = arith.constant 9.99999974E-6 : f32
    %82 = vector.broadcast %cst_24 : f32 to vector<64x1xf32>
    %83 = arith.addf %81, %82 : vector<64x1xf32>
    %84 = math.rsqrt %83 : vector<64x1xf32>
    %85 = vector.broadcast %84 : vector<64x1xf32> to vector<64x32xf32>
    %86 = arith.mulf %76, %85 : vector<64x32xf32>
    %87 = arith.index_cast %c0_i32 : i32 to index
    %c0_25 = arith.constant 0 : index
    %c0_26 = arith.constant 0 : index
    %88 = vector.load %arg6[%87, %c0_25, %c0_26] : memref<6x1x32xf32, #tpu.memory_space<vmem>>, vector<1x1x32xf32>
    %89 = vector.shape_cast %88 : vector<1x1x32xf32> to vector<1x32xf32>
    %90 = vector.broadcast %89 : vector<1x32xf32> to vector<64x32xf32>
    %91 = arith.mulf %86, %90 : vector<64x32xf32>
    %92 = arith.index_cast %c0_i32 : i32 to index
    %c0_27 = arith.constant 0 : index
    %c0_28 = arith.constant 0 : index
    %93 = vector.load %arg7[%92, %c0_27, %c0_28] : memref<6x1x32xf32, #tpu.memory_space<vmem>>, vector<1x1x32xf32>
    %94 = vector.shape_cast %93 : vector<1x1x32xf32> to vector<1x32xf32>
    %95 = vector.broadcast %94 : vector<1x32xf32> to vector<64x32xf32>
    %96 = arith.addf %91, %95 : vector<64x32xf32>
    %c1_i32 = arith.constant 1 : i32
    %97 = arith.truncf %96 : vector<64x32xf32> to vector<64x32xbf16>
    %98 = arith.index_cast %c1_i32 : i32 to index
    %c0_29 = arith.constant 0 : index
    %c0_30 = arith.constant 0 : index
    %99 = vector.load %arg2[%98, %c0_29, %c0_30] : memref<6x32x128xbf16, #tpu.memory_space<vmem>>, vector<1x32x128xbf16>
    %100 = vector.shape_cast %99 : vector<1x32x128xbf16> to vector<32x128xbf16>
    %cst_31 = arith.constant dense<0.000000e+00> : vector<64x128xf32>
    %101 = tpu.matmul %97, %100, %cst_31 {dimension_numbers = #tpu.dot_dimension_numbers<[1], [0], [0], [1], [0, 0, 1, 1], [], []>} : vector<64x32xbf16>, vector<32x128xbf16>, vector<64x128xf32> -> vector<64x128xf32>
    %102 = vector.shape_cast %101 : vector<64x128xf32> to vector<1x8x8x128xf32>
    %cst_32 = arith.constant dense<0xFF800000> : vector<1x8x128xf32>
    %103 = vector.multi_reduction <maximumf>, %102, %cst_32 [1] : vector<1x8x8x128xf32> to vector<1x8x128xf32>
    %104 = vector.shape_cast %103 : vector<1x8x128xf32> to vector<1x1x8x128xf32>
    %cst_33 = arith.constant dense<0xFF800000> : vector<1x8x128xf32>
    %105 = vector.multi_reduction <maximumf>, %102, %cst_33 [2] : vector<1x8x8x128xf32> to vector<1x8x128xf32>
    %106 = vector.shape_cast %105 : vector<1x8x128xf32> to vector<1x8x1x128xf32>
    %107 = vector.shape_cast %4 : vector<1x1x1x128xi1> to vector<1x1x1x128xi1>
    %108 = vector.broadcast %107 : vector<1x1x1x128xi1> to vector<1x8x8x128xi1>
    %109 = vector.shape_cast %104 : vector<1x1x8x128xf32> to vector<1x1x8x128xf32>
    %110 = vector.broadcast %109 : vector<1x1x8x128xf32> to vector<1x8x8x128xf32>
    %111 = vector.shape_cast %106 : vector<1x8x1x128xf32> to vector<1x8x1x128xf32>
    %112 = vector.broadcast %111 : vector<1x8x1x128xf32> to vector<1x8x8x128xf32>
    %113 = arith.select %108, %110, %112 : vector<1x8x8x128xi1>, vector<1x8x8x128xf32>
    %114 = arith.subf %102, %113 : vector<1x8x8x128xf32>
    %115 = math.exp %114 : vector<1x8x8x128xf32>
    %cst_34 = arith.constant dense<0.000000e+00> : vector<1x8x128xf32>
    %116 = vector.multi_reduction <add>, %115, %cst_34 [1] : vector<1x8x8x128xf32> to vector<1x8x128xf32>
    %117 = vector.shape_cast %116 : vector<1x8x128xf32> to vector<1x1x8x128xf32>
    %cst_35 = arith.constant dense<0.000000e+00> : vector<1x8x128xf32>
    %118 = vector.multi_reduction <add>, %115, %cst_35 [2] : vector<1x8x8x128xf32> to vector<1x8x128xf32>
    %119 = vector.shape_cast %118 : vector<1x8x128xf32> to vector<1x8x1x128xf32>
    %120 = vector.shape_cast %4 : vector<1x1x1x128xi1> to vector<1x1x1x128xi1>
    %121 = vector.broadcast %120 : vector<1x1x1x128xi1> to vector<1x8x8x128xi1>
    %122 = vector.shape_cast %117 : vector<1x1x8x128xf32> to vector<1x1x8x128xf32>
    %123 = vector.broadcast %122 : vector<1x1x8x128xf32> to vector<1x8x8x128xf32>
    %124 = vector.shape_cast %119 : vector<1x8x1x128xf32> to vector<1x8x1x128xf32>
    %125 = vector.broadcast %124 : vector<1x8x1x128xf32> to vector<1x8x8x128xf32>
    %126 = arith.select %121, %123, %125 : vector<1x8x8x128xi1>, vector<1x8x8x128xf32>
    %127 = tpu.reciprocal %126 {approx = true} : vector<1x8x8x128xf32> -> vector<1x8x8x128xf32>
    %128 = arith.mulf %115, %127 : vector<1x8x8x128xf32>
    %cst_36 = arith.constant 0.000000e+00 : f32
    %129 = vector.shape_cast %4 : vector<1x1x1x128xi1> to vector<1x1x1x128xi1>
    %130 = vector.broadcast %129 : vector<1x1x1x128xi1> to vector<1x8x8x128xi1>
    %131 = vector.broadcast %cst_36 : f32 to vector<1x8x8x128xf32>
    %132 = arith.select %130, %128, %131 : vector<1x8x8x128xi1>, vector<1x8x8x128xf32>
    %cst_37 = arith.constant dense<0.000000e+00> : vector<1x8x8xf32>
    %133 = vector.multi_reduction <add>, %132, %cst_37 [3] : vector<1x8x8x128xf32> to vector<1x8x8xf32>
    %134 = vector.shape_cast %133 : vector<1x8x8xf32> to vector<1x8x8x1xf32>
    %cst_38 = arith.constant dense<0.000000e+00> : vector<1x8x8xf32>
    %135 = vector.multi_reduction <add>, %128, %cst_38 [3] : vector<1x8x8x128xf32> to vector<1x8x8xf32>
    %136 = vector.shape_cast %135 : vector<1x8x8xf32> to vector<1x8x8x1xf32>
    %137 = arith.subf %136, %134 : vector<1x8x8x1xf32>
    %138 = vector.shape_cast %4 : vector<1x1x1x128xi1> to vector<1x1x1x128xi1>
    %139 = vector.broadcast %138 : vector<1x1x1x128xi1> to vector<1x8x8x128xi1>
    %140 = vector.shape_cast %134 : vector<1x8x8x1xf32> to vector<1x8x8x1xf32>
    %141 = vector.broadcast %140 : vector<1x8x8x1xf32> to vector<1x8x8x128xf32>
    %142 = vector.shape_cast %137 : vector<1x8x8x1xf32> to vector<1x8x8x1xf32>
    %143 = vector.broadcast %142 : vector<1x8x8x1xf32> to vector<1x8x8x128xf32>
    %144 = arith.select %139, %141, %143 : vector<1x8x8x128xi1>, vector<1x8x8x128xf32>
    %145 = arith.divf %128, %144 : vector<1x8x8x128xf32>
    %146 = vector.shape_cast %145 : vector<1x8x8x128xf32> to vector<64x128xf32>
    %147 = arith.truncf %146 : vector<64x128xf32> to vector<64x128xbf16>
    %148 = arith.index_cast %c1_i32 : i32 to index
    %c0_39 = arith.constant 0 : index
    %c0_40 = arith.constant 0 : index
    %149 = vector.load %arg3[%148, %c0_39, %c0_40] : memref<6x128x32xbf16, #tpu.memory_space<vmem>>, vector<1x128x32xbf16>
    %150 = vector.shape_cast %149 : vector<1x128x32xbf16> to vector<128x32xbf16>
    %cst_41 = arith.constant dense<0.000000e+00> : vector<64x32xf32>
    %151 = tpu.matmul %147, %150, %cst_41 {dimension_numbers = #tpu.dot_dimension_numbers<[1], [0], [0], [1], [0, 0, 1, 1], [], []>} : vector<64x128xbf16>, vector<128x32xbf16>, vector<64x32xf32> -> vector<64x32xf32>
    %152 = arith.addf %96, %151 : vector<64x32xf32>
    %153 = arith.truncf %152 : vector<64x32xf32> to vector<64x32xbf16>
    %154 = arith.index_cast %c1_i32 : i32 to index
    %c0_42 = arith.constant 0 : index
    %c0_43 = arith.constant 0 : index
    %155 = vector.load %arg4[%154, %c0_42, %c0_43] : memref<6x32x32xbf16, #tpu.memory_space<vmem>>, vector<1x32x32xbf16>
    %156 = vector.shape_cast %155 : vector<1x32x32xbf16> to vector<32x32xbf16>
    %cst_44 = arith.constant dense<0.000000e+00> : vector<64x32xf32>
    %157 = tpu.matmul %153, %156, %cst_44 {dimension_numbers = #tpu.dot_dimension_numbers<[1], [0], [0], [1], [0, 0, 1, 1], [], []>} : vector<64x32xbf16>, vector<32x32xbf16>, vector<64x32xf32> -> vector<64x32xf32>
    %158 = arith.index_cast %c1_i32 : i32 to index
    %c0_45 = arith.constant 0 : index
    %c0_46 = arith.constant 0 : index
    %159 = vector.load %arg5[%158, %c0_45, %c0_46] : memref<6x1x32xf32, #tpu.memory_space<vmem>>, vector<1x1x32xf32>
    %160 = vector.shape_cast %159 : vector<1x1x32xf32> to vector<1x32xf32>
    %161 = vector.broadcast %160 : vector<1x32xf32> to vector<64x32xf32>
    %162 = arith.addf %157, %161 : vector<64x32xf32>
    %cst_47 = arith.constant dense<0.000000e+00> : vector<64xf32>
    %163 = vector.multi_reduction <add>, %162, %cst_47 [1] : vector<64x32xf32> to vector<64xf32>
    %164 = vector.shape_cast %163 : vector<64xf32> to vector<64x1xf32>
    %cst_48 = arith.constant 3.125000e-02 : f32
    %165 = vector.broadcast %cst_48 : f32 to vector<64x1xf32>
    %166 = arith.mulf %164, %165 : vector<64x1xf32>
    %167 = vector.broadcast %166 : vector<64x1xf32> to vector<64x32xf32>
    %168 = arith.subf %162, %167 : vector<64x32xf32>
    %169 = arith.mulf %168, %168 : vector<64x32xf32>
    %cst_49 = arith.constant dense<0.000000e+00> : vector<64xf32>
    %170 = vector.multi_reduction <add>, %169, %cst_49 [1] : vector<64x32xf32> to vector<64xf32>
    %171 = vector.shape_cast %170 : vector<64xf32> to vector<64x1xf32>
    %cst_50 = arith.constant 3.125000e-02 : f32
    %172 = vector.broadcast %cst_50 : f32 to vector<64x1xf32>
    %173 = arith.mulf %171, %172 : vector<64x1xf32>
    %cst_51 = arith.constant 9.99999974E-6 : f32
    %174 = vector.broadcast %cst_51 : f32 to vector<64x1xf32>
    %175 = arith.addf %173, %174 : vector<64x1xf32>
    %176 = math.rsqrt %175 : vector<64x1xf32>
    %177 = vector.broadcast %176 : vector<64x1xf32> to vector<64x32xf32>
    %178 = arith.mulf %168, %177 : vector<64x32xf32>
    %179 = arith.index_cast %c1_i32 : i32 to index
    %c0_52 = arith.constant 0 : index
    %c0_53 = arith.constant 0 : index
    %180 = vector.load %arg6[%179, %c0_52, %c0_53] : memref<6x1x32xf32, #tpu.memory_space<vmem>>, vector<1x1x32xf32>
    %181 = vector.shape_cast %180 : vector<1x1x32xf32> to vector<1x32xf32>
    %182 = vector.broadcast %181 : vector<1x32xf32> to vector<64x32xf32>
    %183 = arith.mulf %178, %182 : vector<64x32xf32>
    %184 = arith.index_cast %c1_i32 : i32 to index
    %c0_54 = arith.constant 0 : index
    %c0_55 = arith.constant 0 : index
    %185 = vector.load %arg7[%184, %c0_54, %c0_55] : memref<6x1x32xf32, #tpu.memory_space<vmem>>, vector<1x1x32xf32>
    %186 = vector.shape_cast %185 : vector<1x1x32xf32> to vector<1x32xf32>
    %187 = vector.broadcast %186 : vector<1x32xf32> to vector<64x32xf32>
    %188 = arith.addf %183, %187 : vector<64x32xf32>
    %c2_i32 = arith.constant 2 : i32
    %189 = arith.truncf %188 : vector<64x32xf32> to vector<64x32xbf16>
    %190 = arith.index_cast %c2_i32 : i32 to index
    %c0_56 = arith.constant 0 : index
    %c0_57 = arith.constant 0 : index
    %191 = vector.load %arg2[%190, %c0_56, %c0_57] : memref<6x32x128xbf16, #tpu.memory_space<vmem>>, vector<1x32x128xbf16>
    %192 = vector.shape_cast %191 : vector<1x32x128xbf16> to vector<32x128xbf16>
    %cst_58 = arith.constant dense<0.000000e+00> : vector<64x128xf32>
    %193 = tpu.matmul %189, %192, %cst_58 {dimension_numbers = #tpu.dot_dimension_numbers<[1], [0], [0], [1], [0, 0, 1, 1], [], []>} : vector<64x32xbf16>, vector<32x128xbf16>, vector<64x128xf32> -> vector<64x128xf32>
    %194 = vector.shape_cast %193 : vector<64x128xf32> to vector<1x8x8x128xf32>
    %cst_59 = arith.constant dense<0xFF800000> : vector<1x8x128xf32>
    %195 = vector.multi_reduction <maximumf>, %194, %cst_59 [1] : vector<1x8x8x128xf32> to vector<1x8x128xf32>
    %196 = vector.shape_cast %195 : vector<1x8x128xf32> to vector<1x1x8x128xf32>
    %cst_60 = arith.constant dense<0xFF800000> : vector<1x8x128xf32>
    %197 = vector.multi_reduction <maximumf>, %194, %cst_60 [2] : vector<1x8x8x128xf32> to vector<1x8x128xf32>
    %198 = vector.shape_cast %197 : vector<1x8x128xf32> to vector<1x8x1x128xf32>
    %199 = vector.shape_cast %4 : vector<1x1x1x128xi1> to vector<1x1x1x128xi1>
    %200 = vector.broadcast %199 : vector<1x1x1x128xi1> to vector<1x8x8x128xi1>
    %201 = vector.shape_cast %196 : vector<1x1x8x128xf32> to vector<1x1x8x128xf32>
    %202 = vector.broadcast %201 : vector<1x1x8x128xf32> to vector<1x8x8x128xf32>
    %203 = vector.shape_cast %198 : vector<1x8x1x128xf32> to vector<1x8x1x128xf32>
    %204 = vector.broadcast %203 : vector<1x8x1x128xf32> to vector<1x8x8x128xf32>
    %205 = arith.select %200, %202, %204 : vector<1x8x8x128xi1>, vector<1x8x8x128xf32>
    %206 = arith.subf %194, %205 : vector<1x8x8x128xf32>
    %207 = math.exp %206 : vector<1x8x8x128xf32>
    %cst_61 = arith.constant dense<0.000000e+00> : vector<1x8x128xf32>
    %208 = vector.multi_reduction <add>, %207, %cst_61 [1] : vector<1x8x8x128xf32> to vector<1x8x128xf32>
    %209 = vector.shape_cast %208 : vector<1x8x128xf32> to vector<1x1x8x128xf32>
    %cst_62 = arith.constant dense<0.000000e+00> : vector<1x8x128xf32>
    %210 = vector.multi_reduction <add>, %207, %cst_62 [2] : vector<1x8x8x128xf32> to vector<1x8x128xf32>
    %211 = vector.shape_cast %210 : vector<1x8x128xf32> to vector<1x8x1x128xf32>
    %212 = vector.shape_cast %4 : vector<1x1x1x128xi1> to vector<1x1x1x128xi1>
    %213 = vector.broadcast %212 : vector<1x1x1x128xi1> to vector<1x8x8x128xi1>
    %214 = vector.shape_cast %209 : vector<1x1x8x128xf32> to vector<1x1x8x128xf32>
    %215 = vector.broadcast %214 : vector<1x1x8x128xf32> to vector<1x8x8x128xf32>
    %216 = vector.shape_cast %211 : vector<1x8x1x128xf32> to vector<1x8x1x128xf32>
    %217 = vector.broadcast %216 : vector<1x8x1x128xf32> to vector<1x8x8x128xf32>
    %218 = arith.select %213, %215, %217 : vector<1x8x8x128xi1>, vector<1x8x8x128xf32>
    %219 = tpu.reciprocal %218 {approx = true} : vector<1x8x8x128xf32> -> vector<1x8x8x128xf32>
    %220 = arith.mulf %207, %219 : vector<1x8x8x128xf32>
    %cst_63 = arith.constant 0.000000e+00 : f32
    %221 = vector.shape_cast %4 : vector<1x1x1x128xi1> to vector<1x1x1x128xi1>
    %222 = vector.broadcast %221 : vector<1x1x1x128xi1> to vector<1x8x8x128xi1>
    %223 = vector.broadcast %cst_63 : f32 to vector<1x8x8x128xf32>
    %224 = arith.select %222, %220, %223 : vector<1x8x8x128xi1>, vector<1x8x8x128xf32>
    %cst_64 = arith.constant dense<0.000000e+00> : vector<1x8x8xf32>
    %225 = vector.multi_reduction <add>, %224, %cst_64 [3] : vector<1x8x8x128xf32> to vector<1x8x8xf32>
    %226 = vector.shape_cast %225 : vector<1x8x8xf32> to vector<1x8x8x1xf32>
    %cst_65 = arith.constant dense<0.000000e+00> : vector<1x8x8xf32>
    %227 = vector.multi_reduction <add>, %220, %cst_65 [3] : vector<1x8x8x128xf32> to vector<1x8x8xf32>
    %228 = vector.shape_cast %227 : vector<1x8x8xf32> to vector<1x8x8x1xf32>
    %229 = arith.subf %228, %226 : vector<1x8x8x1xf32>
    %230 = vector.shape_cast %4 : vector<1x1x1x128xi1> to vector<1x1x1x128xi1>
    %231 = vector.broadcast %230 : vector<1x1x1x128xi1> to vector<1x8x8x128xi1>
    %232 = vector.shape_cast %226 : vector<1x8x8x1xf32> to vector<1x8x8x1xf32>
    %233 = vector.broadcast %232 : vector<1x8x8x1xf32> to vector<1x8x8x128xf32>
    %234 = vector.shape_cast %229 : vector<1x8x8x1xf32> to vector<1x8x8x1xf32>
    %235 = vector.broadcast %234 : vector<1x8x8x1xf32> to vector<1x8x8x128xf32>
    %236 = arith.select %231, %233, %235 : vector<1x8x8x128xi1>, vector<1x8x8x128xf32>
    %237 = arith.divf %220, %236 : vector<1x8x8x128xf32>
    %238 = vector.shape_cast %237 : vector<1x8x8x128xf32> to vector<64x128xf32>
    %239 = arith.truncf %238 : vector<64x128xf32> to vector<64x128xbf16>
    %240 = arith.index_cast %c2_i32 : i32 to index
    %c0_66 = arith.constant 0 : index
    %c0_67 = arith.constant 0 : index
    %241 = vector.load %arg3[%240, %c0_66, %c0_67] : memref<6x128x32xbf16, #tpu.memory_space<vmem>>, vector<1x128x32xbf16>
    %242 = vector.shape_cast %241 : vector<1x128x32xbf16> to vector<128x32xbf16>
    %cst_68 = arith.constant dense<0.000000e+00> : vector<64x32xf32>
    %243 = tpu.matmul %239, %242, %cst_68 {dimension_numbers = #tpu.dot_dimension_numbers<[1], [0], [0], [1], [0, 0, 1, 1], [], []>} : vector<64x128xbf16>, vector<128x32xbf16>, vector<64x32xf32> -> vector<64x32xf32>
    %244 = arith.addf %188, %243 : vector<64x32xf32>
    %245 = arith.truncf %244 : vector<64x32xf32> to vector<64x32xbf16>
    %246 = arith.index_cast %c2_i32 : i32 to index
    %c0_69 = arith.constant 0 : index
    %c0_70 = arith.constant 0 : index
    %247 = vector.load %arg4[%246, %c0_69, %c0_70] : memref<6x32x32xbf16, #tpu.memory_space<vmem>>, vector<1x32x32xbf16>
    %248 = vector.shape_cast %247 : vector<1x32x32xbf16> to vector<32x32xbf16>
    %cst_71 = arith.constant dense<0.000000e+00> : vector<64x32xf32>
    %249 = tpu.matmul %245, %248, %cst_71 {dimension_numbers = #tpu.dot_dimension_numbers<[1], [0], [0], [1], [0, 0, 1, 1], [], []>} : vector<64x32xbf16>, vector<32x32xbf16>, vector<64x32xf32> -> vector<64x32xf32>
    %250 = arith.index_cast %c2_i32 : i32 to index
    %c0_72 = arith.constant 0 : index
    %c0_73 = arith.constant 0 : index
    %251 = vector.load %arg5[%250, %c0_72, %c0_73] : memref<6x1x32xf32, #tpu.memory_space<vmem>>, vector<1x1x32xf32>
    %252 = vector.shape_cast %251 : vector<1x1x32xf32> to vector<1x32xf32>
    %253 = vector.broadcast %252 : vector<1x32xf32> to vector<64x32xf32>
    %254 = arith.addf %249, %253 : vector<64x32xf32>
    %cst_74 = arith.constant dense<0.000000e+00> : vector<64xf32>
    %255 = vector.multi_reduction <add>, %254, %cst_74 [1] : vector<64x32xf32> to vector<64xf32>
    %256 = vector.shape_cast %255 : vector<64xf32> to vector<64x1xf32>
    %cst_75 = arith.constant 3.125000e-02 : f32
    %257 = vector.broadcast %cst_75 : f32 to vector<64x1xf32>
    %258 = arith.mulf %256, %257 : vector<64x1xf32>
    %259 = vector.broadcast %258 : vector<64x1xf32> to vector<64x32xf32>
    %260 = arith.subf %254, %259 : vector<64x32xf32>
    %261 = arith.mulf %260, %260 : vector<64x32xf32>
    %cst_76 = arith.constant dense<0.000000e+00> : vector<64xf32>
    %262 = vector.multi_reduction <add>, %261, %cst_76 [1] : vector<64x32xf32> to vector<64xf32>
    %263 = vector.shape_cast %262 : vector<64xf32> to vector<64x1xf32>
    %cst_77 = arith.constant 3.125000e-02 : f32
    %264 = vector.broadcast %cst_77 : f32 to vector<64x1xf32>
    %265 = arith.mulf %263, %264 : vector<64x1xf32>
    %cst_78 = arith.constant 9.99999974E-6 : f32
    %266 = vector.broadcast %cst_78 : f32 to vector<64x1xf32>
    %267 = arith.addf %265, %266 : vector<64x1xf32>
    %268 = math.rsqrt %267 : vector<64x1xf32>
    %269 = vector.broadcast %268 : vector<64x1xf32> to vector<64x32xf32>
    %270 = arith.mulf %260, %269 : vector<64x32xf32>
    %271 = arith.index_cast %c2_i32 : i32 to index
    %c0_79 = arith.constant 0 : index
    %c0_80 = arith.constant 0 : index
    %272 = vector.load %arg6[%271, %c0_79, %c0_80] : memref<6x1x32xf32, #tpu.memory_space<vmem>>, vector<1x1x32xf32>
    %273 = vector.shape_cast %272 : vector<1x1x32xf32> to vector<1x32xf32>
    %274 = vector.broadcast %273 : vector<1x32xf32> to vector<64x32xf32>
    %275 = arith.mulf %270, %274 : vector<64x32xf32>
    %276 = arith.index_cast %c2_i32 : i32 to index
    %c0_81 = arith.constant 0 : index
    %c0_82 = arith.constant 0 : index
    %277 = vector.load %arg7[%276, %c0_81, %c0_82] : memref<6x1x32xf32, #tpu.memory_space<vmem>>, vector<1x1x32xf32>
    %278 = vector.shape_cast %277 : vector<1x1x32xf32> to vector<1x32xf32>
    %279 = vector.broadcast %278 : vector<1x32xf32> to vector<64x32xf32>
    %280 = arith.addf %275, %279 : vector<64x32xf32>
    %c3_i32 = arith.constant 3 : i32
    %281 = arith.truncf %280 : vector<64x32xf32> to vector<64x32xbf16>
    %282 = arith.index_cast %c3_i32 : i32 to index
    %c0_83 = arith.constant 0 : index
    %c0_84 = arith.constant 0 : index
    %283 = vector.load %arg2[%282, %c0_83, %c0_84] : memref<6x32x128xbf16, #tpu.memory_space<vmem>>, vector<1x32x128xbf16>
    %284 = vector.shape_cast %283 : vector<1x32x128xbf16> to vector<32x128xbf16>
    %cst_85 = arith.constant dense<0.000000e+00> : vector<64x128xf32>
    %285 = tpu.matmul %281, %284, %cst_85 {dimension_numbers = #tpu.dot_dimension_numbers<[1], [0], [0], [1], [0, 0, 1, 1], [], []>} : vector<64x32xbf16>, vector<32x128xbf16>, vector<64x128xf32> -> vector<64x128xf32>
    %286 = vector.shape_cast %285 : vector<64x128xf32> to vector<1x8x8x128xf32>
    %cst_86 = arith.constant dense<0xFF800000> : vector<1x8x128xf32>
    %287 = vector.multi_reduction <maximumf>, %286, %cst_86 [1] : vector<1x8x8x128xf32> to vector<1x8x128xf32>
    %288 = vector.shape_cast %287 : vector<1x8x128xf32> to vector<1x1x8x128xf32>
    %cst_87 = arith.constant dense<0xFF800000> : vector<1x8x128xf32>
    %289 = vector.multi_reduction <maximumf>, %286, %cst_87 [2] : vector<1x8x8x128xf32> to vector<1x8x128xf32>
    %290 = vector.shape_cast %289 : vector<1x8x128xf32> to vector<1x8x1x128xf32>
    %291 = vector.shape_cast %4 : vector<1x1x1x128xi1> to vector<1x1x1x128xi1>
    %292 = vector.broadcast %291 : vector<1x1x1x128xi1> to vector<1x8x8x128xi1>
    %293 = vector.shape_cast %288 : vector<1x1x8x128xf32> to vector<1x1x8x128xf32>
    %294 = vector.broadcast %293 : vector<1x1x8x128xf32> to vector<1x8x8x128xf32>
    %295 = vector.shape_cast %290 : vector<1x8x1x128xf32> to vector<1x8x1x128xf32>
    %296 = vector.broadcast %295 : vector<1x8x1x128xf32> to vector<1x8x8x128xf32>
    %297 = arith.select %292, %294, %296 : vector<1x8x8x128xi1>, vector<1x8x8x128xf32>
    %298 = arith.subf %286, %297 : vector<1x8x8x128xf32>
    %299 = math.exp %298 : vector<1x8x8x128xf32>
    %cst_88 = arith.constant dense<0.000000e+00> : vector<1x8x128xf32>
    %300 = vector.multi_reduction <add>, %299, %cst_88 [1] : vector<1x8x8x128xf32> to vector<1x8x128xf32>
    %301 = vector.shape_cast %300 : vector<1x8x128xf32> to vector<1x1x8x128xf32>
    %cst_89 = arith.constant dense<0.000000e+00> : vector<1x8x128xf32>
    %302 = vector.multi_reduction <add>, %299, %cst_89 [2] : vector<1x8x8x128xf32> to vector<1x8x128xf32>
    %303 = vector.shape_cast %302 : vector<1x8x128xf32> to vector<1x8x1x128xf32>
    %304 = vector.shape_cast %4 : vector<1x1x1x128xi1> to vector<1x1x1x128xi1>
    %305 = vector.broadcast %304 : vector<1x1x1x128xi1> to vector<1x8x8x128xi1>
    %306 = vector.shape_cast %301 : vector<1x1x8x128xf32> to vector<1x1x8x128xf32>
    %307 = vector.broadcast %306 : vector<1x1x8x128xf32> to vector<1x8x8x128xf32>
    %308 = vector.shape_cast %303 : vector<1x8x1x128xf32> to vector<1x8x1x128xf32>
    %309 = vector.broadcast %308 : vector<1x8x1x128xf32> to vector<1x8x8x128xf32>
    %310 = arith.select %305, %307, %309 : vector<1x8x8x128xi1>, vector<1x8x8x128xf32>
    %311 = tpu.reciprocal %310 {approx = true} : vector<1x8x8x128xf32> -> vector<1x8x8x128xf32>
    %312 = arith.mulf %299, %311 : vector<1x8x8x128xf32>
    %cst_90 = arith.constant 0.000000e+00 : f32
    %313 = vector.shape_cast %4 : vector<1x1x1x128xi1> to vector<1x1x1x128xi1>
    %314 = vector.broadcast %313 : vector<1x1x1x128xi1> to vector<1x8x8x128xi1>
    %315 = vector.broadcast %cst_90 : f32 to vector<1x8x8x128xf32>
    %316 = arith.select %314, %312, %315 : vector<1x8x8x128xi1>, vector<1x8x8x128xf32>
    %cst_91 = arith.constant dense<0.000000e+00> : vector<1x8x8xf32>
    %317 = vector.multi_reduction <add>, %316, %cst_91 [3] : vector<1x8x8x128xf32> to vector<1x8x8xf32>
    %318 = vector.shape_cast %317 : vector<1x8x8xf32> to vector<1x8x8x1xf32>
    %cst_92 = arith.constant dense<0.000000e+00> : vector<1x8x8xf32>
    %319 = vector.multi_reduction <add>, %312, %cst_92 [3] : vector<1x8x8x128xf32> to vector<1x8x8xf32>
    %320 = vector.shape_cast %319 : vector<1x8x8xf32> to vector<1x8x8x1xf32>
    %321 = arith.subf %320, %318 : vector<1x8x8x1xf32>
    %322 = vector.shape_cast %4 : vector<1x1x1x128xi1> to vector<1x1x1x128xi1>
    %323 = vector.broadcast %322 : vector<1x1x1x128xi1> to vector<1x8x8x128xi1>
    %324 = vector.shape_cast %318 : vector<1x8x8x1xf32> to vector<1x8x8x1xf32>
    %325 = vector.broadcast %324 : vector<1x8x8x1xf32> to vector<1x8x8x128xf32>
    %326 = vector.shape_cast %321 : vector<1x8x8x1xf32> to vector<1x8x8x1xf32>
    %327 = vector.broadcast %326 : vector<1x8x8x1xf32> to vector<1x8x8x128xf32>
    %328 = arith.select %323, %325, %327 : vector<1x8x8x128xi1>, vector<1x8x8x128xf32>
    %329 = arith.divf %312, %328 : vector<1x8x8x128xf32>
    %330 = vector.shape_cast %329 : vector<1x8x8x128xf32> to vector<64x128xf32>
    %331 = arith.truncf %330 : vector<64x128xf32> to vector<64x128xbf16>
    %332 = arith.index_cast %c3_i32 : i32 to index
    %c0_93 = arith.constant 0 : index
    %c0_94 = arith.constant 0 : index
    %333 = vector.load %arg3[%332, %c0_93, %c0_94] : memref<6x128x32xbf16, #tpu.memory_space<vmem>>, vector<1x128x32xbf16>
    %334 = vector.shape_cast %333 : vector<1x128x32xbf16> to vector<128x32xbf16>
    %cst_95 = arith.constant dense<0.000000e+00> : vector<64x32xf32>
    %335 = tpu.matmul %331, %334, %cst_95 {dimension_numbers = #tpu.dot_dimension_numbers<[1], [0], [0], [1], [0, 0, 1, 1], [], []>} : vector<64x128xbf16>, vector<128x32xbf16>, vector<64x32xf32> -> vector<64x32xf32>
    %336 = arith.addf %280, %335 : vector<64x32xf32>
    %337 = arith.truncf %336 : vector<64x32xf32> to vector<64x32xbf16>
    %338 = arith.index_cast %c3_i32 : i32 to index
    %c0_96 = arith.constant 0 : index
    %c0_97 = arith.constant 0 : index
    %339 = vector.load %arg4[%338, %c0_96, %c0_97] : memref<6x32x32xbf16, #tpu.memory_space<vmem>>, vector<1x32x32xbf16>
    %340 = vector.shape_cast %339 : vector<1x32x32xbf16> to vector<32x32xbf16>
    %cst_98 = arith.constant dense<0.000000e+00> : vector<64x32xf32>
    %341 = tpu.matmul %337, %340, %cst_98 {dimension_numbers = #tpu.dot_dimension_numbers<[1], [0], [0], [1], [0, 0, 1, 1], [], []>} : vector<64x32xbf16>, vector<32x32xbf16>, vector<64x32xf32> -> vector<64x32xf32>
    %342 = arith.index_cast %c3_i32 : i32 to index
    %c0_99 = arith.constant 0 : index
    %c0_100 = arith.constant 0 : index
    %343 = vector.load %arg5[%342, %c0_99, %c0_100] : memref<6x1x32xf32, #tpu.memory_space<vmem>>, vector<1x1x32xf32>
    %344 = vector.shape_cast %343 : vector<1x1x32xf32> to vector<1x32xf32>
    %345 = vector.broadcast %344 : vector<1x32xf32> to vector<64x32xf32>
    %346 = arith.addf %341, %345 : vector<64x32xf32>
    %cst_101 = arith.constant dense<0.000000e+00> : vector<64xf32>
    %347 = vector.multi_reduction <add>, %346, %cst_101 [1] : vector<64x32xf32> to vector<64xf32>
    %348 = vector.shape_cast %347 : vector<64xf32> to vector<64x1xf32>
    %cst_102 = arith.constant 3.125000e-02 : f32
    %349 = vector.broadcast %cst_102 : f32 to vector<64x1xf32>
    %350 = arith.mulf %348, %349 : vector<64x1xf32>
    %351 = vector.broadcast %350 : vector<64x1xf32> to vector<64x32xf32>
    %352 = arith.subf %346, %351 : vector<64x32xf32>
    %353 = arith.mulf %352, %352 : vector<64x32xf32>
    %cst_103 = arith.constant dense<0.000000e+00> : vector<64xf32>
    %354 = vector.multi_reduction <add>, %353, %cst_103 [1] : vector<64x32xf32> to vector<64xf32>
    %355 = vector.shape_cast %354 : vector<64xf32> to vector<64x1xf32>
    %cst_104 = arith.constant 3.125000e-02 : f32
    %356 = vector.broadcast %cst_104 : f32 to vector<64x1xf32>
    %357 = arith.mulf %355, %356 : vector<64x1xf32>
    %cst_105 = arith.constant 9.99999974E-6 : f32
    %358 = vector.broadcast %cst_105 : f32 to vector<64x1xf32>
    %359 = arith.addf %357, %358 : vector<64x1xf32>
    %360 = math.rsqrt %359 : vector<64x1xf32>
    %361 = vector.broadcast %360 : vector<64x1xf32> to vector<64x32xf32>
    %362 = arith.mulf %352, %361 : vector<64x32xf32>
    %363 = arith.index_cast %c3_i32 : i32 to index
    %c0_106 = arith.constant 0 : index
    %c0_107 = arith.constant 0 : index
    %364 = vector.load %arg6[%363, %c0_106, %c0_107] : memref<6x1x32xf32, #tpu.memory_space<vmem>>, vector<1x1x32xf32>
    %365 = vector.shape_cast %364 : vector<1x1x32xf32> to vector<1x32xf32>
    %366 = vector.broadcast %365 : vector<1x32xf32> to vector<64x32xf32>
    %367 = arith.mulf %362, %366 : vector<64x32xf32>
    %368 = arith.index_cast %c3_i32 : i32 to index
    %c0_108 = arith.constant 0 : index
    %c0_109 = arith.constant 0 : index
    %369 = vector.load %arg7[%368, %c0_108, %c0_109] : memref<6x1x32xf32, #tpu.memory_space<vmem>>, vector<1x1x32xf32>
    %370 = vector.shape_cast %369 : vector<1x1x32xf32> to vector<1x32xf32>
    %371 = vector.broadcast %370 : vector<1x32xf32> to vector<64x32xf32>
    %372 = arith.addf %367, %371 : vector<64x32xf32>
    %c4_i32 = arith.constant 4 : i32
    %373 = arith.truncf %372 : vector<64x32xf32> to vector<64x32xbf16>
    %374 = arith.index_cast %c4_i32 : i32 to index
    %c0_110 = arith.constant 0 : index
    %c0_111 = arith.constant 0 : index
    %375 = vector.load %arg2[%374, %c0_110, %c0_111] : memref<6x32x128xbf16, #tpu.memory_space<vmem>>, vector<1x32x128xbf16>
    %376 = vector.shape_cast %375 : vector<1x32x128xbf16> to vector<32x128xbf16>
    %cst_112 = arith.constant dense<0.000000e+00> : vector<64x128xf32>
    %377 = tpu.matmul %373, %376, %cst_112 {dimension_numbers = #tpu.dot_dimension_numbers<[1], [0], [0], [1], [0, 0, 1, 1], [], []>} : vector<64x32xbf16>, vector<32x128xbf16>, vector<64x128xf32> -> vector<64x128xf32>
    %378 = vector.shape_cast %377 : vector<64x128xf32> to vector<1x8x8x128xf32>
    %cst_113 = arith.constant dense<0xFF800000> : vector<1x8x128xf32>
    %379 = vector.multi_reduction <maximumf>, %378, %cst_113 [1] : vector<1x8x8x128xf32> to vector<1x8x128xf32>
    %380 = vector.shape_cast %379 : vector<1x8x128xf32> to vector<1x1x8x128xf32>
    %cst_114 = arith.constant dense<0xFF800000> : vector<1x8x128xf32>
    %381 = vector.multi_reduction <maximumf>, %378, %cst_114 [2] : vector<1x8x8x128xf32> to vector<1x8x128xf32>
    %382 = vector.shape_cast %381 : vector<1x8x128xf32> to vector<1x8x1x128xf32>
    %383 = vector.shape_cast %4 : vector<1x1x1x128xi1> to vector<1x1x1x128xi1>
    %384 = vector.broadcast %383 : vector<1x1x1x128xi1> to vector<1x8x8x128xi1>
    %385 = vector.shape_cast %380 : vector<1x1x8x128xf32> to vector<1x1x8x128xf32>
    %386 = vector.broadcast %385 : vector<1x1x8x128xf32> to vector<1x8x8x128xf32>
    %387 = vector.shape_cast %382 : vector<1x8x1x128xf32> to vector<1x8x1x128xf32>
    %388 = vector.broadcast %387 : vector<1x8x1x128xf32> to vector<1x8x8x128xf32>
    %389 = arith.select %384, %386, %388 : vector<1x8x8x128xi1>, vector<1x8x8x128xf32>
    %390 = arith.subf %378, %389 : vector<1x8x8x128xf32>
    %391 = math.exp %390 : vector<1x8x8x128xf32>
    %cst_115 = arith.constant dense<0.000000e+00> : vector<1x8x128xf32>
    %392 = vector.multi_reduction <add>, %391, %cst_115 [1] : vector<1x8x8x128xf32> to vector<1x8x128xf32>
    %393 = vector.shape_cast %392 : vector<1x8x128xf32> to vector<1x1x8x128xf32>
    %cst_116 = arith.constant dense<0.000000e+00> : vector<1x8x128xf32>
    %394 = vector.multi_reduction <add>, %391, %cst_116 [2] : vector<1x8x8x128xf32> to vector<1x8x128xf32>
    %395 = vector.shape_cast %394 : vector<1x8x128xf32> to vector<1x8x1x128xf32>
    %396 = vector.shape_cast %4 : vector<1x1x1x128xi1> to vector<1x1x1x128xi1>
    %397 = vector.broadcast %396 : vector<1x1x1x128xi1> to vector<1x8x8x128xi1>
    %398 = vector.shape_cast %393 : vector<1x1x8x128xf32> to vector<1x1x8x128xf32>
    %399 = vector.broadcast %398 : vector<1x1x8x128xf32> to vector<1x8x8x128xf32>
    %400 = vector.shape_cast %395 : vector<1x8x1x128xf32> to vector<1x8x1x128xf32>
    %401 = vector.broadcast %400 : vector<1x8x1x128xf32> to vector<1x8x8x128xf32>
    %402 = arith.select %397, %399, %401 : vector<1x8x8x128xi1>, vector<1x8x8x128xf32>
    %403 = tpu.reciprocal %402 {approx = true} : vector<1x8x8x128xf32> -> vector<1x8x8x128xf32>
    %404 = arith.mulf %391, %403 : vector<1x8x8x128xf32>
    %cst_117 = arith.constant 0.000000e+00 : f32
    %405 = vector.shape_cast %4 : vector<1x1x1x128xi1> to vector<1x1x1x128xi1>
    %406 = vector.broadcast %405 : vector<1x1x1x128xi1> to vector<1x8x8x128xi1>
    %407 = vector.broadcast %cst_117 : f32 to vector<1x8x8x128xf32>
    %408 = arith.select %406, %404, %407 : vector<1x8x8x128xi1>, vector<1x8x8x128xf32>
    %cst_118 = arith.constant dense<0.000000e+00> : vector<1x8x8xf32>
    %409 = vector.multi_reduction <add>, %408, %cst_118 [3] : vector<1x8x8x128xf32> to vector<1x8x8xf32>
    %410 = vector.shape_cast %409 : vector<1x8x8xf32> to vector<1x8x8x1xf32>
    %cst_119 = arith.constant dense<0.000000e+00> : vector<1x8x8xf32>
    %411 = vector.multi_reduction <add>, %404, %cst_119 [3] : vector<1x8x8x128xf32> to vector<1x8x8xf32>
    %412 = vector.shape_cast %411 : vector<1x8x8xf32> to vector<1x8x8x1xf32>
    %413 = arith.subf %412, %410 : vector<1x8x8x1xf32>
    %414 = vector.shape_cast %4 : vector<1x1x1x128xi1> to vector<1x1x1x128xi1>
    %415 = vector.broadcast %414 : vector<1x1x1x128xi1> to vector<1x8x8x128xi1>
    %416 = vector.shape_cast %410 : vector<1x8x8x1xf32> to vector<1x8x8x1xf32>
    %417 = vector.broadcast %416 : vector<1x8x8x1xf32> to vector<1x8x8x128xf32>
    %418 = vector.shape_cast %413 : vector<1x8x8x1xf32> to vector<1x8x8x1xf32>
    %419 = vector.broadcast %418 : vector<1x8x8x1xf32> to vector<1x8x8x128xf32>
    %420 = arith.select %415, %417, %419 : vector<1x8x8x128xi1>, vector<1x8x8x128xf32>
    %421 = arith.divf %404, %420 : vector<1x8x8x128xf32>
    %422 = vector.shape_cast %421 : vector<1x8x8x128xf32> to vector<64x128xf32>
    %423 = arith.truncf %422 : vector<64x128xf32> to vector<64x128xbf16>
    %424 = arith.index_cast %c4_i32 : i32 to index
    %c0_120 = arith.constant 0 : index
    %c0_121 = arith.constant 0 : index
    %425 = vector.load %arg3[%424, %c0_120, %c0_121] : memref<6x128x32xbf16, #tpu.memory_space<vmem>>, vector<1x128x32xbf16>
    %426 = vector.shape_cast %425 : vector<1x128x32xbf16> to vector<128x32xbf16>
    %cst_122 = arith.constant dense<0.000000e+00> : vector<64x32xf32>
    %427 = tpu.matmul %423, %426, %cst_122 {dimension_numbers = #tpu.dot_dimension_numbers<[1], [0], [0], [1], [0, 0, 1, 1], [], []>} : vector<64x128xbf16>, vector<128x32xbf16>, vector<64x32xf32> -> vector<64x32xf32>
    %428 = arith.addf %372, %427 : vector<64x32xf32>
    %429 = arith.truncf %428 : vector<64x32xf32> to vector<64x32xbf16>
    %430 = arith.index_cast %c4_i32 : i32 to index
    %c0_123 = arith.constant 0 : index
    %c0_124 = arith.constant 0 : index
    %431 = vector.load %arg4[%430, %c0_123, %c0_124] : memref<6x32x32xbf16, #tpu.memory_space<vmem>>, vector<1x32x32xbf16>
    %432 = vector.shape_cast %431 : vector<1x32x32xbf16> to vector<32x32xbf16>
    %cst_125 = arith.constant dense<0.000000e+00> : vector<64x32xf32>
    %433 = tpu.matmul %429, %432, %cst_125 {dimension_numbers = #tpu.dot_dimension_numbers<[1], [0], [0], [1], [0, 0, 1, 1], [], []>} : vector<64x32xbf16>, vector<32x32xbf16>, vector<64x32xf32> -> vector<64x32xf32>
    %434 = arith.index_cast %c4_i32 : i32 to index
    %c0_126 = arith.constant 0 : index
    %c0_127 = arith.constant 0 : index
    %435 = vector.load %arg5[%434, %c0_126, %c0_127] : memref<6x1x32xf32, #tpu.memory_space<vmem>>, vector<1x1x32xf32>
    %436 = vector.shape_cast %435 : vector<1x1x32xf32> to vector<1x32xf32>
    %437 = vector.broadcast %436 : vector<1x32xf32> to vector<64x32xf32>
    %438 = arith.addf %433, %437 : vector<64x32xf32>
    %cst_128 = arith.constant dense<0.000000e+00> : vector<64xf32>
    %439 = vector.multi_reduction <add>, %438, %cst_128 [1] : vector<64x32xf32> to vector<64xf32>
    %440 = vector.shape_cast %439 : vector<64xf32> to vector<64x1xf32>
    %cst_129 = arith.constant 3.125000e-02 : f32
    %441 = vector.broadcast %cst_129 : f32 to vector<64x1xf32>
    %442 = arith.mulf %440, %441 : vector<64x1xf32>
    %443 = vector.broadcast %442 : vector<64x1xf32> to vector<64x32xf32>
    %444 = arith.subf %438, %443 : vector<64x32xf32>
    %445 = arith.mulf %444, %444 : vector<64x32xf32>
    %cst_130 = arith.constant dense<0.000000e+00> : vector<64xf32>
    %446 = vector.multi_reduction <add>, %445, %cst_130 [1] : vector<64x32xf32> to vector<64xf32>
    %447 = vector.shape_cast %446 : vector<64xf32> to vector<64x1xf32>
    %cst_131 = arith.constant 3.125000e-02 : f32
    %448 = vector.broadcast %cst_131 : f32 to vector<64x1xf32>
    %449 = arith.mulf %447, %448 : vector<64x1xf32>
    %cst_132 = arith.constant 9.99999974E-6 : f32
    %450 = vector.broadcast %cst_132 : f32 to vector<64x1xf32>
    %451 = arith.addf %449, %450 : vector<64x1xf32>
    %452 = math.rsqrt %451 : vector<64x1xf32>
    %453 = vector.broadcast %452 : vector<64x1xf32> to vector<64x32xf32>
    %454 = arith.mulf %444, %453 : vector<64x32xf32>
    %455 = arith.index_cast %c4_i32 : i32 to index
    %c0_133 = arith.constant 0 : index
    %c0_134 = arith.constant 0 : index
    %456 = vector.load %arg6[%455, %c0_133, %c0_134] : memref<6x1x32xf32, #tpu.memory_space<vmem>>, vector<1x1x32xf32>
    %457 = vector.shape_cast %456 : vector<1x1x32xf32> to vector<1x32xf32>
    %458 = vector.broadcast %457 : vector<1x32xf32> to vector<64x32xf32>
    %459 = arith.mulf %454, %458 : vector<64x32xf32>
    %460 = arith.index_cast %c4_i32 : i32 to index
    %c0_135 = arith.constant 0 : index
    %c0_136 = arith.constant 0 : index
    %461 = vector.load %arg7[%460, %c0_135, %c0_136] : memref<6x1x32xf32, #tpu.memory_space<vmem>>, vector<1x1x32xf32>
    %462 = vector.shape_cast %461 : vector<1x1x32xf32> to vector<1x32xf32>
    %463 = vector.broadcast %462 : vector<1x32xf32> to vector<64x32xf32>
    %464 = arith.addf %459, %463 : vector<64x32xf32>
    %c5_i32 = arith.constant 5 : i32
    %465 = arith.truncf %464 : vector<64x32xf32> to vector<64x32xbf16>
    %466 = arith.index_cast %c5_i32 : i32 to index
    %c0_137 = arith.constant 0 : index
    %c0_138 = arith.constant 0 : index
    %467 = vector.load %arg2[%466, %c0_137, %c0_138] : memref<6x32x128xbf16, #tpu.memory_space<vmem>>, vector<1x32x128xbf16>
    %468 = vector.shape_cast %467 : vector<1x32x128xbf16> to vector<32x128xbf16>
    %cst_139 = arith.constant dense<0.000000e+00> : vector<64x128xf32>
    %469 = tpu.matmul %465, %468, %cst_139 {dimension_numbers = #tpu.dot_dimension_numbers<[1], [0], [0], [1], [0, 0, 1, 1], [], []>} : vector<64x32xbf16>, vector<32x128xbf16>, vector<64x128xf32> -> vector<64x128xf32>
    %470 = vector.shape_cast %469 : vector<64x128xf32> to vector<1x8x8x128xf32>
    %cst_140 = arith.constant dense<0xFF800000> : vector<1x8x128xf32>
    %471 = vector.multi_reduction <maximumf>, %470, %cst_140 [1] : vector<1x8x8x128xf32> to vector<1x8x128xf32>
    %472 = vector.shape_cast %471 : vector<1x8x128xf32> to vector<1x1x8x128xf32>
    %cst_141 = arith.constant dense<0xFF800000> : vector<1x8x128xf32>
    %473 = vector.multi_reduction <maximumf>, %470, %cst_141 [2] : vector<1x8x8x128xf32> to vector<1x8x128xf32>
    %474 = vector.shape_cast %473 : vector<1x8x128xf32> to vector<1x8x1x128xf32>
    %475 = vector.shape_cast %4 : vector<1x1x1x128xi1> to vector<1x1x1x128xi1>
    %476 = vector.broadcast %475 : vector<1x1x1x128xi1> to vector<1x8x8x128xi1>
    %477 = vector.shape_cast %472 : vector<1x1x8x128xf32> to vector<1x1x8x128xf32>
    %478 = vector.broadcast %477 : vector<1x1x8x128xf32> to vector<1x8x8x128xf32>
    %479 = vector.shape_cast %474 : vector<1x8x1x128xf32> to vector<1x8x1x128xf32>
    %480 = vector.broadcast %479 : vector<1x8x1x128xf32> to vector<1x8x8x128xf32>
    %481 = arith.select %476, %478, %480 : vector<1x8x8x128xi1>, vector<1x8x8x128xf32>
    %482 = arith.subf %470, %481 : vector<1x8x8x128xf32>
    %483 = math.exp %482 : vector<1x8x8x128xf32>
    %cst_142 = arith.constant dense<0.000000e+00> : vector<1x8x128xf32>
    %484 = vector.multi_reduction <add>, %483, %cst_142 [1] : vector<1x8x8x128xf32> to vector<1x8x128xf32>
    %485 = vector.shape_cast %484 : vector<1x8x128xf32> to vector<1x1x8x128xf32>
    %cst_143 = arith.constant dense<0.000000e+00> : vector<1x8x128xf32>
    %486 = vector.multi_reduction <add>, %483, %cst_143 [2] : vector<1x8x8x128xf32> to vector<1x8x128xf32>
    %487 = vector.shape_cast %486 : vector<1x8x128xf32> to vector<1x8x1x128xf32>
    %488 = vector.shape_cast %4 : vector<1x1x1x128xi1> to vector<1x1x1x128xi1>
    %489 = vector.broadcast %488 : vector<1x1x1x128xi1> to vector<1x8x8x128xi1>
    %490 = vector.shape_cast %485 : vector<1x1x8x128xf32> to vector<1x1x8x128xf32>
    %491 = vector.broadcast %490 : vector<1x1x8x128xf32> to vector<1x8x8x128xf32>
    %492 = vector.shape_cast %487 : vector<1x8x1x128xf32> to vector<1x8x1x128xf32>
    %493 = vector.broadcast %492 : vector<1x8x1x128xf32> to vector<1x8x8x128xf32>
    %494 = arith.select %489, %491, %493 : vector<1x8x8x128xi1>, vector<1x8x8x128xf32>
    %495 = tpu.reciprocal %494 {approx = true} : vector<1x8x8x128xf32> -> vector<1x8x8x128xf32>
    %496 = arith.mulf %483, %495 : vector<1x8x8x128xf32>
    %cst_144 = arith.constant 0.000000e+00 : f32
    %497 = vector.shape_cast %4 : vector<1x1x1x128xi1> to vector<1x1x1x128xi1>
    %498 = vector.broadcast %497 : vector<1x1x1x128xi1> to vector<1x8x8x128xi1>
    %499 = vector.broadcast %cst_144 : f32 to vector<1x8x8x128xf32>
    %500 = arith.select %498, %496, %499 : vector<1x8x8x128xi1>, vector<1x8x8x128xf32>
    %cst_145 = arith.constant dense<0.000000e+00> : vector<1x8x8xf32>
    %501 = vector.multi_reduction <add>, %500, %cst_145 [3] : vector<1x8x8x128xf32> to vector<1x8x8xf32>
    %502 = vector.shape_cast %501 : vector<1x8x8xf32> to vector<1x8x8x1xf32>
    %cst_146 = arith.constant dense<0.000000e+00> : vector<1x8x8xf32>
    %503 = vector.multi_reduction <add>, %496, %cst_146 [3] : vector<1x8x8x128xf32> to vector<1x8x8xf32>
    %504 = vector.shape_cast %503 : vector<1x8x8xf32> to vector<1x8x8x1xf32>
    %505 = arith.subf %504, %502 : vector<1x8x8x1xf32>
    %506 = vector.shape_cast %4 : vector<1x1x1x128xi1> to vector<1x1x1x128xi1>
    %507 = vector.broadcast %506 : vector<1x1x1x128xi1> to vector<1x8x8x128xi1>
    %508 = vector.shape_cast %502 : vector<1x8x8x1xf32> to vector<1x8x8x1xf32>
    %509 = vector.broadcast %508 : vector<1x8x8x1xf32> to vector<1x8x8x128xf32>
    %510 = vector.shape_cast %505 : vector<1x8x8x1xf32> to vector<1x8x8x1xf32>
    %511 = vector.broadcast %510 : vector<1x8x8x1xf32> to vector<1x8x8x128xf32>
    %512 = arith.select %507, %509, %511 : vector<1x8x8x128xi1>, vector<1x8x8x128xf32>
    %513 = arith.divf %496, %512 : vector<1x8x8x128xf32>
    %514 = vector.shape_cast %513 : vector<1x8x8x128xf32> to vector<64x128xf32>
    %515 = arith.truncf %514 : vector<64x128xf32> to vector<64x128xbf16>
    %516 = arith.index_cast %c5_i32 : i32 to index
    %c0_147 = arith.constant 0 : index
    %c0_148 = arith.constant 0 : index
    %517 = vector.load %arg3[%516, %c0_147, %c0_148] : memref<6x128x32xbf16, #tpu.memory_space<vmem>>, vector<1x128x32xbf16>
    %518 = vector.shape_cast %517 : vector<1x128x32xbf16> to vector<128x32xbf16>
    %cst_149 = arith.constant dense<0.000000e+00> : vector<64x32xf32>
    %519 = tpu.matmul %515, %518, %cst_149 {dimension_numbers = #tpu.dot_dimension_numbers<[1], [0], [0], [1], [0, 0, 1, 1], [], []>} : vector<64x128xbf16>, vector<128x32xbf16>, vector<64x32xf32> -> vector<64x32xf32>
    %520 = arith.addf %464, %519 : vector<64x32xf32>
    %521 = arith.truncf %520 : vector<64x32xf32> to vector<64x32xbf16>
    %522 = arith.index_cast %c5_i32 : i32 to index
    %c0_150 = arith.constant 0 : index
    %c0_151 = arith.constant 0 : index
    %523 = vector.load %arg4[%522, %c0_150, %c0_151] : memref<6x32x32xbf16, #tpu.memory_space<vmem>>, vector<1x32x32xbf16>
    %524 = vector.shape_cast %523 : vector<1x32x32xbf16> to vector<32x32xbf16>
    %cst_152 = arith.constant dense<0.000000e+00> : vector<64x32xf32>
    %525 = tpu.matmul %521, %524, %cst_152 {dimension_numbers = #tpu.dot_dimension_numbers<[1], [0], [0], [1], [0, 0, 1, 1], [], []>} : vector<64x32xbf16>, vector<32x32xbf16>, vector<64x32xf32> -> vector<64x32xf32>
    %526 = arith.index_cast %c5_i32 : i32 to index
    %c0_153 = arith.constant 0 : index
    %c0_154 = arith.constant 0 : index
    %527 = vector.load %arg5[%526, %c0_153, %c0_154] : memref<6x1x32xf32, #tpu.memory_space<vmem>>, vector<1x1x32xf32>
    %528 = vector.shape_cast %527 : vector<1x1x32xf32> to vector<1x32xf32>
    %529 = vector.broadcast %528 : vector<1x32xf32> to vector<64x32xf32>
    %530 = arith.addf %525, %529 : vector<64x32xf32>
    %cst_155 = arith.constant dense<0.000000e+00> : vector<64xf32>
    %531 = vector.multi_reduction <add>, %530, %cst_155 [1] : vector<64x32xf32> to vector<64xf32>
    %532 = vector.shape_cast %531 : vector<64xf32> to vector<64x1xf32>
    %cst_156 = arith.constant 3.125000e-02 : f32
    %533 = vector.broadcast %cst_156 : f32 to vector<64x1xf32>
    %534 = arith.mulf %532, %533 : vector<64x1xf32>
    %535 = vector.broadcast %534 : vector<64x1xf32> to vector<64x32xf32>
    %536 = arith.subf %530, %535 : vector<64x32xf32>
    %537 = arith.mulf %536, %536 : vector<64x32xf32>
    %cst_157 = arith.constant dense<0.000000e+00> : vector<64xf32>
    %538 = vector.multi_reduction <add>, %537, %cst_157 [1] : vector<64x32xf32> to vector<64xf32>
    %539 = vector.shape_cast %538 : vector<64xf32> to vector<64x1xf32>
    %cst_158 = arith.constant 3.125000e-02 : f32
    %540 = vector.broadcast %cst_158 : f32 to vector<64x1xf32>
    %541 = arith.mulf %539, %540 : vector<64x1xf32>
    %cst_159 = arith.constant 9.99999974E-6 : f32
    %542 = vector.broadcast %cst_159 : f32 to vector<64x1xf32>
    %543 = arith.addf %541, %542 : vector<64x1xf32>
    %544 = math.rsqrt %543 : vector<64x1xf32>
    %545 = vector.broadcast %544 : vector<64x1xf32> to vector<64x32xf32>
    %546 = arith.mulf %536, %545 : vector<64x32xf32>
    %547 = arith.index_cast %c5_i32 : i32 to index
    %c0_160 = arith.constant 0 : index
    %c0_161 = arith.constant 0 : index
    %548 = vector.load %arg6[%547, %c0_160, %c0_161] : memref<6x1x32xf32, #tpu.memory_space<vmem>>, vector<1x1x32xf32>
    %549 = vector.shape_cast %548 : vector<1x1x32xf32> to vector<1x32xf32>
    %550 = vector.broadcast %549 : vector<1x32xf32> to vector<64x32xf32>
    %551 = arith.mulf %546, %550 : vector<64x32xf32>
    %552 = arith.index_cast %c5_i32 : i32 to index
    %c0_162 = arith.constant 0 : index
    %c0_163 = arith.constant 0 : index
    %553 = vector.load %arg7[%552, %c0_162, %c0_163] : memref<6x1x32xf32, #tpu.memory_space<vmem>>, vector<1x1x32xf32>
    %554 = vector.shape_cast %553 : vector<1x1x32xf32> to vector<1x32xf32>
    %555 = vector.broadcast %554 : vector<1x32xf32> to vector<64x32xf32>
    %556 = arith.addf %551, %555 : vector<64x32xf32>
    %c6_i32 = arith.constant 6 : i32
    %557 = arith.addf %556, %1 : vector<64x32xf32>
    %558 = vector.shape_cast %557 : vector<64x32xf32> to vector<1x8x8x32xf32>
    %c0_164 = arith.constant 0 : index
    %c0_165 = arith.constant 0 : index
    %c0_166 = arith.constant 0 : index
    %c0_167 = arith.constant 0 : index
    %559 = vector.load %arg10[%c0_164, %c0_165, %c0_166, %c0_167] : memref<1x8x8x32xf32, #tpu.memory_space<vmem>>, vector<1x8x8x32xf32>
    tpu.vector_store %arg10[%c0_164, %c0_165, %c0_166, %c0_167], %558 {strides = array<i32>} : memref<1x8x8x32xf32, #tpu.memory_space<vmem>>, vector<1x8x8x32xf32>,
    %560 = arith.truncf %557 : vector<64x32xf32> to vector<64x32xbf16>
    %c0_168 = arith.constant 0 : index
    %c0_169 = arith.constant 0 : index
    %561 = vector.load %arg8[%c0_168, %c0_169] : memref<32x4xbf16, #tpu.memory_space<vmem>>, vector<32x4xbf16>
    %cst_170 = arith.constant dense<0.000000e+00> : vector<64x4xf32>
    %562 = tpu.matmul %560, %561, %cst_170 {dimension_numbers = #tpu.dot_dimension_numbers<[1], [0], [0], [1], [0, 0, 1, 1], [], []>} : vector<64x32xbf16>, vector<32x4xbf16>, vector<64x4xf32> -> vector<64x4xf32>
    %c0_171 = arith.constant 0 : index
    %c0_172 = arith.constant 0 : index
    %563 = vector.load %arg9[%c0_171, %c0_172] : memref<1x4xf32, #tpu.memory_space<vmem>>, vector<1x4xf32>
    %564 = vector.broadcast %563 : vector<1x4xf32> to vector<64x4xf32>
    %565 = arith.addf %562, %564 : vector<64x4xf32>
    %566 = vector.shape_cast %565 : vector<64x4xf32> to vector<1x8x8x4xf32>
    %567 = tpu.iota {dimensions = array<i32: 1>} : vector<1x8x8x4xi32>
    %568 = tpu.iota {dimensions = array<i32: 2>} : vector<1x8x8x4xi32>
    %569 = arith.cmpi eq, %567, %568 : vector<1x8x8x4xi32>
    %cst_173 = arith.constant 0.000000e+00 : f32
    %570 = vector.broadcast %cst_173 : f32 to vector<1x8x8x4xf32>
    %571 = arith.select %569, %570, %566 : vector<1x8x8x4xi1>, vector<1x8x8x4xf32>
    %c0_174 = arith.constant 0 : index
    %c0_175 = arith.constant 0 : index
    %c0_176 = arith.constant 0 : index
    %c0_177 = arith.constant 0 : index
    %572 = vector.load %arg11[%c0_174, %c0_175, %c0_176, %c0_177] : memref<1x8x8x4xf32, #tpu.memory_space<vmem>>, vector<1x8x8x4xf32>
    tpu.vector_store %arg11[%c0_174, %c0_175, %c0_176, %c0_177], %571 {strides = array<i32>} : memref<1x8x8x4xf32, #tpu.memory_space<vmem>>, vector<1x8x8x4xf32>,
    return
  }
  func.func @transform_0(%arg0: i32) -> (i32, i32, i32, i32) {
    %c0_i32 = arith.constant 0 : i32
    %c0_i32_0 = arith.constant 0 : i32
    %c0_i32_1 = arith.constant 0 : i32
    %c0_i32_2 = arith.constant 0 : i32
    return %arg0, %c0_i32, %c0_i32_0, %c0_i32_1 : i32, i32, i32, i32
  }
  func.func @transform_1(%arg0: i32) -> (i32, i32, i32) {
    %c0_i32 = arith.constant 0 : i32
    %c0_i32_0 = arith.constant 0 : i32
    %c0_i32_1 = arith.constant 0 : i32
    %c0_i32_2 = arith.constant 0 : i32
    return %c0_i32, %c0_i32_0, %c0_i32_1 : i32, i32, i32
  }
  func.func @transform_2(%arg0: i32) -> (i32, i32, i32) {
    %c0_i32 = arith.constant 0 : i32
    %c0_i32_0 = arith.constant 0 : i32
    %c0_i32_1 = arith.constant 0 : i32
    %c0_i32_2 = arith.constant 0 : i32
    return %c0_i32, %c0_i32_0, %c0_i32_1 : i32, i32, i32
  }
  func.func @transform_3(%arg0: i32) -> (i32, i32, i32) {
    %c0_i32 = arith.constant 0 : i32
    %c0_i32_0 = arith.constant 0 : i32
    %c0_i32_1 = arith.constant 0 : i32
    %c0_i32_2 = arith.constant 0 : i32
    return %c0_i32, %c0_i32_0, %c0_i32_1 : i32, i32, i32
  }
  func.func @transform_4(%arg0: i32) -> (i32, i32, i32) {
    %c0_i32 = arith.constant 0 : i32
    %c0_i32_0 = arith.constant 0 : i32
    %c0_i32_1 = arith.constant 0 : i32
    %c0_i32_2 = arith.constant 0 : i32
    return %c0_i32, %c0_i32_0, %c0_i32_1 : i32, i32, i32
  }
  func.func @transform_5(%arg0: i32) -> (i32, i32, i32) {
    %c0_i32 = arith.constant 0 : i32
    %c0_i32_0 = arith.constant 0 : i32
    %c0_i32_1 = arith.constant 0 : i32
    %c0_i32_2 = arith.constant 0 : i32
    return %c0_i32, %c0_i32_0, %c0_i32_1 : i32, i32, i32
  }
  func.func @transform_6(%arg0: i32) -> (i32, i32, i32) {
    %c0_i32 = arith.constant 0 : i32
    %c0_i32_0 = arith.constant 0 : i32
    %c0_i32_1 = arith.constant 0 : i32
    %c0_i32_2 = arith.constant 0 : i32
    return %c0_i32, %c0_i32_0, %c0_i32_1 : i32, i32, i32
  }
  func.func @transform_7(%arg0: i32) -> (i32, i32) {
    %c0_i32 = arith.constant 0 : i32
    %c0_i32_0 = arith.constant 0 : i32
    %c0_i32_1 = arith.constant 0 : i32
    return %c0_i32, %c0_i32_0 : i32, i32
  }
  func.func @transform_8(%arg0: i32) -> (i32, i32) {
    %c0_i32 = arith.constant 0 : i32
    %c0_i32_0 = arith.constant 0 : i32
    %c0_i32_1 = arith.constant 0 : i32
    return %c0_i32, %c0_i32_0 : i32, i32
  }
  func.func @transform_9(%arg0: i32) -> (i32, i32, i32, i32) {
    %c0_i32 = arith.constant 0 : i32
    %c0_i32_0 = arith.constant 0 : i32
    %c0_i32_1 = arith.constant 0 : i32
    %c0_i32_2 = arith.constant 0 : i32
    return %arg0, %c0_i32, %c0_i32_0, %c0_i32_1 : i32, i32, i32, i32
  }
  func.func @transform_10(%arg0: i32) -> (i32, i32, i32, i32) {
    %c0_i32 = arith.constant 0 : i32
    %c0_i32_0 = arith.constant 0 : i32
    %c0_i32_1 = arith.constant 0 : i32
    %c0_i32_2 = arith.constant 0 : i32
    return %arg0, %c0_i32, %c0_i32_0, %c0_i32_1 : i32, i32, i32, i32
  }
}

</mosaic_0001>

<llo_original>
// kernel: tpu_custom_call.1
$region0: #{tpu_custom_call.1}
  #allocation0 [shape = 'u32[]', space=smem, size = 0x4, offset = 0x4, fixed_abs, tag = 'smem constant byte address 0x4 - core index']
  #allocation1 [shape = 'u32[144,128]{1,0:T(1,128)}', space=vmem, size = 0x12000, scoped, tag = 'internal scratch']
  %s0 = inlined_call_operand.vmem [shape: f32[2,8,8,32], index: 0, kind: input, shape index: {}]
  %s1 = inlined_call_operand.vmem [shape: bf16[6,32,128], index: 1, kind: input, shape index: {}]
  %s2 = inlined_call_operand.vmem [shape: bf16[6,128,32], index: 2, kind: input, shape index: {}]
  %s3 = inlined_call_operand.vmem [shape: bf16[6,32,32], index: 3, kind: input, shape index: {}]
  %s4 = inlined_call_operand.vmem [shape: f32[6,1,32], index: 4, kind: input, shape index: {}]
  %s5 = inlined_call_operand.vmem [shape: f32[6,1,32], index: 5, kind: input, shape index: {}]
  %s6 = inlined_call_operand.vmem [shape: f32[6,1,32], index: 6, kind: input, shape index: {}]
  %s7 = inlined_call_operand.vmem [shape: bf16[32,4], index: 7, kind: input, shape index: {}]
  %s8 = inlined_call_operand.vmem [shape: f32[1,4], index: 8, kind: input, shape index: {}]
  %s9 = inlined_call_operand.hbm [shape: f32[2,8,8,32], index: 9, kind: output, shape index: {0}]
  %s10 = inlined_call_operand.vmem [shape: f32[2,8,8,4], index: 10, kind: output, shape index: {1}]
  %11 = xla_tuple %s9, %s10
  %s12 = sld [smem:[#allocation0]]
  $region77: #{tpu_custom_call.1} parent=0
    _
  %s14 = ssub.s32 1, %s12
  %s15 = scalar_select 0, %s14, %s12
  $region1: #{tpu_custom_call.1} parent=0
    #allocation2 [shape = 'u8[65536]{0}', space=vmem, size = 0x10000, scoped, tag = 'output window, operand 0']
    #allocation3 [shape = 's32[2]{0}', space=sflag, size = 0x8, scoped, tag = 'scoped memory for tpu_custom_call.1']
    %16 = vsyncpa [#allocation3], 0
    %s17 = scalar_lea.sflag [#allocation3], 1
    %18 = vsyncpa %s17, 0
    loop: start=0, step=1, limit=4
    $region2: #{tpu_custom_call.1} parent=1 // loop_pre_header
      _
    $region3: #{tpu_custom_call.1} parent=1 // loop_header
      %s20 = sphi 0, %s24
      %p21 = scmp.ge.s32.totalorder %s20, 4
      %s30 = sphi 0, %s32
      %s33 = sphi 0, %s30
      %s34 = sphi 0, %s33
      %s50 = sphi 0, %s34
      %s54 = sphi 0, %s54
      %s56 = sphi 0, %s54
      %s57 = sphi 0, %s56
      %s71 = sphi 0, %s57
      %s75 = sphi 0, %s75
      %s77 = sphi 0, %s75
      %s78 = sphi 0, %s77
      %s92 = sphi 0, %s78
      %s96 = sphi 0, %s96
      %s98 = sphi 0, %s96
      %s99 = sphi 0, %s98
      %s113 = sphi 0, %s99
      %s117 = sphi 0, %s117
      %s119 = sphi 0, %s117
      %s120 = sphi 0, %s119
      %s134 = sphi 0, %s120
      %s138 = sphi 0, %s138
      %s140 = sphi 0, %s138
      %s141 = sphi 0, %s140
      %s155 = sphi 0, %s141
      %s159 = sphi 0, %s159
      %s161 = sphi 0, %s159
      %s162 = sphi 0, %s161
      %s176 = sphi 0, %s162
      %s180 = sphi 0, %s180
      %s182 = sphi 0, %s180
      %s183 = sphi 0, %s182
      %s197 = sphi 0, %s183
      %s201 = sphi 0, %s201
      %s203 = sphi 0, %s201
      %s204 = sphi 0, %s203
      %s218 = sphi 0, %s204
      %s224 = sphi 0, %s226
      %s227 = sphi 0, %s224
      %s228 = sphi 0, %s227
      %s244 = sphi 0, %s228
      %s250 = sphi 0, %s252
      %s253 = sphi 0, %s250
      %s254 = sphi 0, %s253
      %s270 = sphi 0, %s254
    $region4: #{tpu_custom_call.1} parent=1 // loop_header_branch
      %23 = sbr.rel (%p21) target = $region8
    $region5: #{tpu_custom_call.1} parent=1 // loop_body
      %s25 = ssub.s32 %s20, 1
      %s26 = ssub.s32 %s20, 2
      %s27 = sadd.s32 %s20, 1
      %s28 = ssub.s32 %s20, %s27
      %p29 = scmp.eq.s32.totalorder %s28, 0
      %s31 = sadd.s32 %s30, 1
      %s32 = scalar_select %p29, %s30, %s31
      %p35 = pneg %p29
      %p36 = scmp.eq.s32.totalorder %s20, 1
      %p37 = por %p35, %p36
      %p38 = scmp.ne.s32.totalorder %s30, %s33
      %p39 = scmp.eq.s32.totalorder %s20, 0
      %p40 = por %p38, %p39
      %p41 = scmp.ne.s32.totalorder %s30, %s33
      %p42 = scmp.eq.s32.totalorder %s25, 1
      %p43 = por %p41, %p42
      %p44 = scmp.ne.s32.totalorder %s33, %s34
      %p45 = scmp.eq.s32.totalorder %s25, 0
      %p46 = por %p44, %p45
      %p47 = scmp.ne.s32.totalorder %s33, %s34
      %p48 = scmp.eq.s32.totalorder %s26, 1
      %p49 = por %p47, %p48
      %p51 = scmp.ne.s32.totalorder %s34, %s50
      %p52 = scmp.eq.s32.totalorder %s26, 0
      %p53 = por %p51, %p52
      %s55 = sadd.s32 %s54, 1
      %p58 = scmp.eq.s32.totalorder %s20, 1
      %p59 = scmp.ne.s32.totalorder %s54, %s56
      %p60 = scmp.eq.s32.totalorder %s20, 0
      %p61 = por %p59, %p60
      %p62 = scmp.ne.s32.totalorder %s54, %s56
      %p63 = scmp.eq.s32.totalorder %s25, 1
      %p64 = por %p62, %p63
      %p65 = scmp.ne.s32.totalorder %s56, %s57
      %p66 = scmp.eq.s32.totalorder %s25, 0
      %p67 = por %p65, %p66
      %p68 = scmp.ne.s32.totalorder %s56, %s57
      %p69 = scmp.eq.s32.totalorder %s26, 1
      %p70 = por %p68, %p69
      %p72 = scmp.ne.s32.totalorder %s57, %s71
      %p73 = scmp.eq.s32.totalorder %s26, 0
      %p74 = por %p72, %p73
      %s76 = sadd.s32 %s75, 1
      %p79 = scmp.eq.s32.totalorder %s20, 1
      %p80 = scmp.ne.s32.totalorder %s75, %s77
      %p81 = scmp.eq.s32.totalorder %s20, 0
      %p82 = por %p80, %p81
      %p83 = scmp.ne.s32.totalorder %s75, %s77
      %p84 = scmp.eq.s32.totalorder %s25, 1
      %p85 = por %p83, %p84
      %p86 = scmp.ne.s32.totalorder %s77, %s78
      %p87 = scmp.eq.s32.totalorder %s25, 0
      %p88 = por %p86, %p87
      %p89 = scmp.ne.s32.totalorder %s77, %s78
      %p90 = scmp.eq.s32.totalorder %s26, 1
      %p91 = por %p89, %p90
      %p93 = scmp.ne.s32.totalorder %s78, %s92
      %p94 = scmp.eq.s32.totalorder %s26, 0
      %p95 = por %p93, %p94
      %s97 = sadd.s32 %s96, 1
      %p100 = scmp.eq.s32.totalorder %s20, 1
      %p101 = scmp.ne.s32.totalorder %s96, %s98
      %p102 = scmp.eq.s32.totalorder %s20, 0
      %p103 = por %p101, %p102
      %p104 = scmp.ne.s32.totalorder %s96, %s98
      %p105 = scmp.eq.s32.totalorder %s25, 1
      %p106 = por %p104, %p105
      %p107 = scmp.ne.s32.totalorder %s98, %s99
      %p108 = scmp.eq.s32.totalorder %s25, 0
      %p109 = por %p107, %p108
      %p110 = scmp.ne.s32.totalorder %s98, %s99
      %p111 = scmp.eq.s32.totalorder %s26, 1
      %p112 = por %p110, %p111
      %p114 = scmp.ne.s32.totalorder %s99, %s113
      %p115 = scmp.eq.s32.totalorder %s26, 0
      %p116 = por %p114, %p115
      %s118 = sadd.s32 %s117, 1
      %p121 = scmp.eq.s32.totalorder %s20, 1
      %p122 = scmp.ne.s32.totalorder %s117, %s119
      %p123 = scmp.eq.s32.totalorder %s20, 0
      %p124 = por %p122, %p123
      %p125 = scmp.ne.s32.totalorder %s117, %s119
      %p126 = scmp.eq.s32.totalorder %s25, 1
      %p127 = por %p125, %p126
      %p128 = scmp.ne.s32.totalorder %s119, %s120
      %p129 = scmp.eq.s32.totalorder %s25, 0
      %p130 = por %p128, %p129
      %p131 = scmp.ne.s32.totalorder %s119, %s120
      %p132 = scmp.eq.s32.totalorder %s26, 1
      %p133 = por %p131, %p132
      %p135 = scmp.ne.s32.totalorder %s120, %s134
      %p136 = scmp.eq.s32.totalorder %s26, 0
      %p137 = por %p135, %p136
      %s139 = sadd.s32 %s138, 1
      %p142 = scmp.eq.s32.totalorder %s20, 1
      %p143 = scmp.ne.s32.totalorder %s138, %s140
      %p144 = scmp.eq.s32.totalorder %s20, 0
      %p145 = por %p143, %p144
      %p146 = scmp.ne.s32.totalorder %s138, %s140
      %p147 = scmp.eq.s32.totalorder %s25, 1
      %p148 = por %p146, %p147
      %p149 = scmp.ne.s32.totalorder %s140, %s141
      %p150 = scmp.eq.s32.totalorder %s25, 0
      %p151 = por %p149, %p150
      %p152 = scmp.ne.s32.totalorder %s140, %s141
      %p153 = scmp.eq.s32.totalorder %s26, 1
      %p154 = por %p152, %p153
      %p156 = scmp.ne.s32.totalorder %s141, %s155
      %p157 = scmp.eq.s32.totalorder %s26, 0
      %p158 = por %p156, %p157
      %s160 = sadd.s32 %s159, 1
      %p163 = scmp.eq.s32.totalorder %s20, 1
      %p164 = scmp.ne.s32.totalorder %s159, %s161
      %p165 = scmp.eq.s32.totalorder %s20, 0
      %p166 = por %p164, %p165
      %p167 = scmp.ne.s32.totalorder %s159, %s161
      %p168 = scmp.eq.s32.totalorder %s25, 1
      %p169 = por %p167, %p168
      %p170 = scmp.ne.s32.totalorder %s161, %s162
      %p171 = scmp.eq.s32.totalorder %s25, 0
      %p172 = por %p170, %p171
      %p173 = scmp.ne.s32.totalorder %s161, %s162
      %p174 = scmp.eq.s32.totalorder %s26, 1
      %p175 = por %p173, %p174
      %p177 = scmp.ne.s32.totalorder %s162, %s176
      %p178 = scmp.eq.s32.totalorder %s26, 0
      %p179 = por %p177, %p178
      %s181 = sadd.s32 %s180, 1
      %p184 = scmp.eq.s32.totalorder %s20, 1
      %p185 = scmp.ne.s32.totalorder %s180, %s182
      %p186 = scmp.eq.s32.totalorder %s20, 0
      %p187 = por %p185, %p186
      %p188 = scmp.ne.s32.totalorder %s180, %s182
      %p189 = scmp.eq.s32.totalorder %s25, 1
      %p190 = por %p188, %p189
      %p191 = scmp.ne.s32.totalorder %s182, %s183
      %p192 = scmp.eq.s32.totalorder %s25, 0
      %p193 = por %p191, %p192
      %p194 = scmp.ne.s32.totalorder %s182, %s183
      %p195 = scmp.eq.s32.totalorder %s26, 1
      %p196 = por %p194, %p195
      %p198 = scmp.ne.s32.totalorder %s183, %s197
      %p199 = scmp.eq.s32.totalorder %s26, 0
      %p200 = por %p198, %p199
      %s202 = sadd.s32 %s201, 1
      %p205 = scmp.eq.s32.totalorder %s20, 1
      %p206 = scmp.ne.s32.totalorder %s201, %s203
      %p207 = scmp.eq.s32.totalorder %s20, 0
      %p208 = por %p206, %p207
      %p209 = scmp.ne.s32.totalorder %s201, %s203
      %p210 = scmp.eq.s32.totalorder %s25, 1
      %p211 = por %p209, %p210
      %p212 = scmp.ne.s32.totalorder %s203, %s204
      %p213 = scmp.eq.s32.totalorder %s25, 0
      %p214 = por %p212, %p213
      %p215 = scmp.ne.s32.totalorder %s203, %s204
      %p216 = scmp.eq.s32.totalorder %s26, 1
      %p217 = por %p215, %p216
      %p219 = scmp.ne.s32.totalorder %s204, %s218
      %p220 = scmp.eq.s32.totalorder %s26, 0
      %p221 = por %p219, %p220
      %s222 = ssub.s32 %s20, %s27
      %p223 = scmp.eq.s32.totalorder %s222, 0
      %s225 = sadd.s32 %s224, 1
      %s226 = scalar_select %p223, %s224, %s225
      %p229 = pneg %p223
      %p230 = scmp.eq.s32.totalorder %s20, 1
      %p231 = por %p229, %p230
      %p232 = scmp.ne.s32.totalorder %s224, %s227
      %p233 = scmp.eq.s32.totalorder %s20, 0
      %p234 = por %p232, %p233
      %p235 = scmp.ne.s32.totalorder %s224, %s227
      %p236 = scmp.eq.s32.totalorder %s25, 1
      %p237 = por %p235, %p236
      %p238 = scmp.ne.s32.totalorder %s227, %s228
      %p239 = scmp.eq.s32.totalorder %s25, 0
      %p240 = por %p238, %p239
      %p241 = scmp.ne.s32.totalorder %s227, %s228
      %p242 = scmp.eq.s32.totalorder %s26, 1
      %p243 = por %p241, %p242
      %p245 = scmp.ne.s32.totalorder %s228, %s244
      %p246 = scmp.eq.s32.totalorder %s26, 0
      %p247 = por %p245, %p246
      %s248 = ssub.s32 %s20, %s27
      %p249 = scmp.eq.s32.totalorder %s248, 0
      %s251 = sadd.s32 %s250, 1
      %s252 = scalar_select %p249, %s250, %s251
      %p255 = pneg %p249
      %p256 = scmp.eq.s32.totalorder %s20, 1
      %p257 = por %p255, %p256
      %p258 = scmp.ne.s32.totalorder %s250, %s253
      %p259 = scmp.eq.s32.totalorder %s20, 0
      %p260 = por %p258, %p259
      %p261 = scmp.ne.s32.totalorder %s250, %s253
      %p262 = scmp.eq.s32.totalorder %s25, 1
      %p263 = por %p261, %p262
      %p264 = scmp.ne.s32.totalorder %s253, %s254
      %p265 = scmp.eq.s32.totalorder %s25, 0
      %p266 = por %p264, %p265
      %p267 = scmp.ne.s32.totalorder %s253, %s254
      %p268 = scmp.eq.s32.totalorder %s26, 1
      %p269 = por %p267, %p268
      %p271 = scmp.ne.s32.totalorder %s254, %s270
      %p272 = scmp.eq.s32.totalorder %s26, 0
      %p273 = por %p271, %p272
      %p274 = scmp.le.s32.totalorder 1, %s20
      %p275 = scmp.lt.s32.totalorder %s20, 3
      %p276 = pnand %p274, %p275
      %p277 = pneg %p276
      // Predicated region
      $region9: #{tpu_custom_call.1} parent=5 // pred_check
        _
      $region10: #{tpu_custom_call.1} parent=5 // pred_check_branch
        %279 = sbr.rel (%p276) target = $region12
      $region11: #{tpu_custom_call.1} parent=5 // pred_region
        %s280 = ssub.s32 %s20, 1
        // Predicated region
        $region13: #{tpu_custom_call.1} parent=11 // pred_check
          %p281 = pneg %p67
        $region14: #{tpu_custom_call.1} parent=11 // pred_check_branch
          %283 = sbr.rel (%p281) target = $region16
        $region15: #{tpu_custom_call.1} parent=11 // pred_region
          _
        $region16: #{tpu_custom_call.1} parent=11 // pred_fallthru
          _
        // Predicated region
        $region17: #{tpu_custom_call.1} parent=11 // pred_check
          %p284 = pneg %p88
        $region18: #{tpu_custom_call.1} parent=11 // pred_check_branch
          %286 = sbr.rel (%p284) target = $region20
        $region19: #{tpu_custom_call.1} parent=11 // pred_region
          _
        $region20: #{tpu_custom_call.1} parent=11 // pred_fallthru
          _
        // Predicated region
        $region21: #{tpu_custom_call.1} parent=11 // pred_check
          %p287 = pneg %p109
        $region22: #{tpu_custom_call.1} parent=11 // pred_check_branch
          %289 = sbr.rel (%p287) target = $region24
        $region23: #{tpu_custom_call.1} parent=11 // pred_region
          _
        $region24: #{tpu_custom_call.1} parent=11 // pred_fallthru
          _
        // Predicated region
        $region25: #{tpu_custom_call.1} parent=11 // pred_check
          %p290 = pneg %p130
        $region26: #{tpu_custom_call.1} parent=11 // pred_check_branch
          %292 = sbr.rel (%p290) target = $region28
        $region27: #{tpu_custom_call.1} parent=11 // pred_region
          _
        $region28: #{tpu_custom_call.1} parent=11 // pred_fallthru
          _
        // Predicated region
        $region29: #{tpu_custom_call.1} parent=11 // pred_check
          %p293 = pneg %p151
        $region30: #{tpu_custom_call.1} parent=11 // pred_check_branch
          %295 = sbr.rel (%p293) target = $region32
        $region31: #{tpu_custom_call.1} parent=11 // pred_region
          _
        $region32: #{tpu_custom_call.1} parent=11 // pred_fallthru
          _
        // Predicated region
        $region33: #{tpu_custom_call.1} parent=11 // pred_check
          %p296 = pneg %p172
        $region34: #{tpu_custom_call.1} parent=11 // pred_check_branch
          %298 = sbr.rel (%p296) target = $region36
        $region35: #{tpu_custom_call.1} parent=11 // pred_region
          _
        $region36: #{tpu_custom_call.1} parent=11 // pred_fallthru
          _
        // Predicated region
        $region37: #{tpu_custom_call.1} parent=11 // pred_check
          %p299 = pneg %p193
        $region38: #{tpu_custom_call.1} parent=11 // pred_check_branch
          %301 = sbr.rel (%p299) target = $region40
        $region39: #{tpu_custom_call.1} parent=11 // pred_region
          _
        $region40: #{tpu_custom_call.1} parent=11 // pred_fallthru
          _
        // Predicated region
        $region41: #{tpu_custom_call.1} parent=11 // pred_check
          %p302 = pneg %p214
        $region42: #{tpu_custom_call.1} parent=11 // pred_check_branch
          %304 = sbr.rel (%p302) target = $region44
        $region43: #{tpu_custom_call.1} parent=11 // pred_region
          _
        $region44: #{tpu_custom_call.1} parent=11 // pred_fallthru
          _
      $region12: #{tpu_custom_call.1} parent=5 // pred_fallthru
        _
      %p305 = scmp.lt.s32.totalorder %s20, 2
      // Predicated region
      $region45: #{tpu_custom_call.1} parent=5 // pred_check
        %p306 = pneg %p305
      $region46: #{tpu_custom_call.1} parent=5 // pred_check_branch
        %308 = sbr.rel (%p306) target = $region48
      $region47: #{tpu_custom_call.1} parent=5 // pred_region
        // Predicated region
        $region49: #{tpu_custom_call.1} parent=47 // pred_check
          %p309 = pneg %p40
        $region50: #{tpu_custom_call.1} parent=47 // pred_check_branch
          %311 = sbr.rel (%p309) target = $region52
        $region51: #{tpu_custom_call.1} parent=47 // pred_region
          %p312 = scmp.lt.s32.totalorder %s20, 1
          %s313 = scalar_select %p312, %s20, 1
          %s314 = smul.addr %s313, 8
          %s315 = smul.addr %s314, 8
          %s316 = scalar_lea.vmem %s0, %s315
        $region52: #{tpu_custom_call.1} parent=47 // pred_fallthru
          _
      $region48: #{tpu_custom_call.1} parent=5 // pred_fallthru
        _
      %p317 = scmp.le.s32.totalorder 1, %s20
      %p318 = scmp.lt.s32.totalorder %s20, 3
      %p319 = pnand %p317, %p318
      %p320 = pneg %p319
      // Predicated region
      $region53: #{tpu_custom_call.1} parent=5 // pred_check
        _
      $region54: #{tpu_custom_call.1} parent=5 // pred_check_branch
        %322 = sbr.rel (%p319) target = $region56
      $region55: #{tpu_custom_call.1} parent=5 // pred_region
        %s323 = ssub.s32 %s20, 1
        %p324 = scmp.lt.s32.totalorder %s25, 1
        %s325 = scalar_select %p324, %s25, 1
        %s326 = smul.addr %s325, 8
        %s327 = smul.addr %s326, 8
        %s328 = scalar_lea.vmem %s0, %s327
        %p329 = pneg %p46
        %p330 = pneg %p43
        %p331 = pneg %p67
        %p332 = pneg %p64
        %p333 = pneg %p88
        %p334 = pneg %p85
        %p335 = pneg %p109
        %p336 = pneg %p106
        %p337 = pneg %p130
        %p338 = pneg %p127
        %p339 = pneg %p151
        %p340 = pneg %p148
        %p341 = pneg %p172
        %p342 = pneg %p169
        %p343 = pneg %p193
        %p344 = pneg %p190
        %p345 = pneg %p214
        %p346 = pneg %p211
        %p347 = pneg %p240
        %p348 = pneg %p237
        %s349 = sand.u32 %s227, 1
        %s350 = scalar_lea.sflag [#allocation3], %s349
        %s351 = sand.u32 %s227, 1
        %s352 = smul.addr %s351, 64
        %s353 = scalar_lea.vmem [#allocation2], %s352
        %p354 = pneg %p266
        %p355 = pneg %p263
        %p356 = scmp.lt.s32.totalorder %s25, 1
        %s357 = scalar_select %p356, %s25, 1
        %s358 = smul.addr %s357, 8
        %s359 = smul.addr %s358, 8
        %s360 = scalar_lea.vmem %s10, %s359
        %p361 = scmp.lt.s32.totalorder %s25, 1
        %s362 = scalar_select %p361, %s25, 1
        %s363 = smul.addr %s362, 8
        %s364 = smul.addr %s363, 8
        %s365 = scalar_lea.vmem %s0, %s364
        %p366 = scmp.lt.s32.totalorder %s25, 1
        %s367 = scalar_select %p366, %s25, 1
        %s368 = smul.addr %s367, 8
        %s369 = smul.addr %s368, 8
        %s370 = scalar_lea.vmem %s10, %s369
        %v372 = vld [vmem:[%s365] sm:$0xff]
        %v373 = vld [vmem:[%s365 + $0x8] sm:$0xff]
        %v374 = vld [vmem:[%s365 + $0x10] sm:$0xff]
        %v375 = vld [vmem:[%s365 + $0x18] sm:$0xff]
        %v376 = vld [vmem:[%s365 + $0x20] sm:$0xff]
        %v377 = vld [vmem:[%s365 + $0x28] sm:$0xff]
        %v378 = vld [vmem:[%s365 + $0x30] sm:$0xff]
        %v379 = vld [vmem:[%s365 + $0x38] sm:$0xff]
        %v380 = vlaneseq
        %v381 = vand.u32 %v380, 127
        %vm382 = vcmp.lt.s32.totalorder %v381, 64
        %v383 = vpack.c.bf16 %v373, %v372
        %v384 = vpack.c.bf16 %v375, %v374
        %v385 = vpack.c.bf16 %v377, %v376
        %v386 = vpack.c.bf16 %v379, %v378
        %v387 = vld [vmem:[%s1] sm:$0xf]
        %v388 = vld [vmem:[%s1 + $0x4] sm:$0xf]
        %v389 = vld [vmem:[%s1 + $0x8] sm:$0xf]
        %v390 = vld [vmem:[%s1 + $0xc] sm:$0xf]
        %v395 = vunpack.c.l.b16 %v387
        %v396 = vunpack.c.l.b16 %v388
        %v397 = vunpack.c.l.b16 %v389
        %v398 = vunpack.c.l.b16 %v390
        %v399 = vpack.c.b16 %v396, %v395
        %v400 = vpack.c.b16 %v398, %v397
        %vm403 = vcmask 261120
        %v405 = vsel %vm403, %v383, 0
        %v408 = vsel %vm403, %v384, 0
        %v411 = vsel %vm403, %v385, 0
        %v414 = vsel %vm403, %v386, 0
        %416 = vmatprep.subr.bf16.mxu0 0
        %417 = vmatpush1.bf16.msra.mxu0 %v399
        %418 = vmatprep.subr.bf16.mxu0 0
        %419 = vmatpush1.bf16.msra.mxu0 %v400
        %420 = vmatprep.subr.bf16.mxu0 0
        %421 = vmatpush1.bf16.msra.mxu0 0
        %422 = vmatprep.subr.bf16.mxu0 0
        %423 = vmatpush1.bf16.msra.mxu0 0
        %424 = vmatprep.subr.bf16.mxu0 0
        %425 = vmatpush1.bf16.msra.mxu0 0
        %426 = vmatprep.subr.bf16.mxu0 0
        %427 = vmatpush1.bf16.msra.mxu0 0
        %428 = vmatprep.subr.bf16.mxu0 0
        %429 = vmatpush1.bf16.msra.mxu0 0
        %430 = vmatprep.subr.bf16.mxu0 0
        %431 = vmatpush1.bf16.msra.mxu0 0
        %432 = vmatprep.subr.bf16.mxu0 0
        %433 = vmatpush1.bf16.msra.mxu0 0
        %434 = vmatprep.subr.bf16.mxu0 0
        %435 = vmatpush1.bf16.msra.mxu0 0
        %436 = vmatprep.subr.bf16.mxu0 0
        %437 = vmatpush1.bf16.msra.mxu0 0
        %438 = vmatprep.subr.bf16.mxu0 0
        %439 = vmatpush1.bf16.msra.mxu0 0
        %440 = vmatprep.subr.bf16.mxu0 0
        %441 = vmatpush1.bf16.msra.mxu0 0
        %442 = vmatprep.subr.bf16.mxu0 0
        %443 = vmatpush1.bf16.msra.mxu0 0
        %444 = vmatprep.subr.bf16.mxu0 0
        %445 = vmatpush1.bf16.msra.mxu0 0
        %446 = vmatprep.subr.bf16.mxu0 0
        %447 = vmatpush1.bf16.msra.mxu0 0
        %448 = vmatprep.mubr.bf16.mxu0 0
        %449 = vmatmul.mubr.bf16.gmra.mrb[0].mxu0 %v405
        %v450 = vpop.f32.mrb[0].mxu0
        %v451 = vadd.f32 0.0, %v450
        %v452 = vpop.f32.mrb[0].mxu0
        %v453 = vpop.f32.mrb[0].mxu0
        %v454 = vadd.f32 0.0, %v453
        %v455 = vpop.f32.mrb[0].mxu0
        %456 = vmatprep.mubr.bf16.mxu0 0
        %457 = vmatmul.mubr.bf16.gmra.mrb[0].mxu0 %v408
        %v458 = vpop.f32.mrb[0].mxu0
        %v459 = vadd.f32 0.0, %v458
        %v460 = vpop.f32.mrb[0].mxu0
        %v461 = vpop.f32.mrb[0].mxu0
        %v462 = vadd.f32 0.0, %v461
        %v463 = vpop.f32.mrb[0].mxu0
        %464 = vmatprep.mubr.bf16.mxu0 0
        %465 = vmatmul.mubr.bf16.gmra.mrb[0].mxu0 %v411
        %v466 = vpop.f32.mrb[0].mxu0
        %v467 = vadd.f32 0.0, %v466
        %v468 = vpop.f32.mrb[0].mxu0
        %v469 = vpop.f32.mrb[0].mxu0
        %v470 = vadd.f32 0.0, %v469
        %v471 = vpop.f32.mrb[0].mxu0
        %472 = vmatprep.mubr.bf16.mxu0 0
        %473 = vmatmul.mubr.bf16.gmra.mrb[0].mxu0 %v414
        %v474 = vpop.f32.mrb[0].mxu0
        %v475 = vadd.f32 0.0, %v474
        %v476 = vpop.f32.mrb[0].mxu0
        %v477 = vpop.f32.mrb[0].mxu0
        %v478 = vadd.f32 0.0, %v477
        %v479 = vpop.f32.mrb[0].mxu0
        %480 = vdwg.mxu0
        %v481 = vmax.f32 %v451, %v467
        %v482 = vmax.f32 %v454, %v470
        %v483 = vmax.f32 %v459, %v475
        %v484 = vmax.f32 %v462, %v478
        %v485 = vmax.f32 %v481, %v482
        %v486 = vmax.f32 %v483, %v484
        %v487 = vmax.f32 %v485, %v486
        %v488 = vrot.slane %v451, 4
        %v489 = vmax.f32 %v451, %v488
        %v490 = vrot.slane %v489, 2
        %v491 = vmax.f32 %v489, %v490
        %v492 = vrot.slane %v491, 1
        %v493 = vmax.f32 %v491, %v492
        %v494 = vrot.slane %v454, 4
        %v495 = vmax.f32 %v454, %v494
        %v496 = vrot.slane %v495, 2
        %v497 = vmax.f32 %v495, %v496
        %v498 = vrot.slane %v497, 1
        %v499 = vmax.f32 %v497, %v498
        %v500 = vrot.slane %v459, 4
        %v501 = vmax.f32 %v459, %v500
        %v502 = vrot.slane %v501, 2
        %v503 = vmax.f32 %v501, %v502
        %v504 = vrot.slane %v503, 1
        %v505 = vmax.f32 %v503, %v504
        %v506 = vrot.slane %v462, 4
        %v507 = vmax.f32 %v462, %v506
        %v508 = vrot.slane %v507, 2
        %v509 = vmax.f32 %v507, %v508
        %v510 = vrot.slane %v509, 1
        %v511 = vmax.f32 %v509, %v510
        %v512 = vrot.slane %v467, 4
        %v513 = vmax.f32 %v467, %v512
        %v514 = vrot.slane %v513, 2
        %v515 = vmax.f32 %v513, %v514
        %v516 = vrot.slane %v515, 1
        %v517 = vmax.f32 %v515, %v516
        %v518 = vrot.slane %v470, 4
        %v519 = vmax.f32 %v470, %v518
        %v520 = vrot.slane %v519, 2
        %v521 = vmax.f32 %v519, %v520
        %v522 = vrot.slane %v521, 1
        %v523 = vmax.f32 %v521, %v522
        %v524 = vrot.slane %v475, 4
        %v525 = vmax.f32 %v475, %v524
        %v526 = vrot.slane %v525, 2
        %v527 = vmax.f32 %v525, %v526
        %v528 = vrot.slane %v527, 1
        %v529 = vmax.f32 %v527, %v528
        %v530 = vrot.slane %v478, 4
        %v531 = vmax.f32 %v478, %v530
        %v532 = vrot.slane %v531, 2
        %v533 = vmax.f32 %v531, %v532
        %v534 = vrot.slane %v533, 1
        %v535 = vmax.f32 %v533, %v534
        %v536 = vsel %vm382, 1, 0
        %vm537 = vcmp.eq.s32.totalorder %v536, 1
        %v538 = vsel %vm537, %v487, %v493
        %v539 = vsel %vm537, %v487, %v499
        %v540 = vsel %vm537, %v487, %v505
        %v541 = vsel %vm537, %v487, %v511
        %v542 = vsel %vm537, %v487, %v517
        %v543 = vsel %vm537, %v487, %v523
        %v544 = vsel %vm537, %v487, %v529
        %v545 = vsel %vm537, %v487, %v535
        %v546 = vsub.f32 %v451, %v538
        %v547 = vsub.f32 %v454, %v539
        %v548 = vsub.f32 %v459, %v540
        %v549 = vsub.f32 %v462, %v541
        %v550 = vsub.f32 %v467, %v542
        %v551 = vsub.f32 %v470, %v543
        %v552 = vsub.f32 %v475, %v544
        %v553 = vsub.f32 %v478, %v545
        %v554 = vmul.f32 %v546, 1.442695
        %v555 = vpow.pop %v554
        %v556 = vmul.f32 %v547, 1.442695
        %v557 = vpow.pop %v556
        %v558 = vmul.f32 %v548, 1.442695
        %v559 = vpow.pop %v558
        %v560 = vmul.f32 %v549, 1.442695
        %v561 = vpow.pop %v560
        %v562 = vmul.f32 %v550, 1.442695
        %v563 = vpow.pop %v562
        %v564 = vmul.f32 %v551, 1.442695
        %v565 = vpow.pop %v564
        %v566 = vmul.f32 %v552, 1.442695
        %v567 = vpow.pop %v566
        %v568 = vmul.f32 %v553, 1.442695
        %v569 = vpow.pop %v568
        %v570 = vadd.f32 %v555, %v557
        %v571 = vadd.f32 %v570, %v559
        %v572 = vadd.f32 %v571, %v561
        %v573 = vadd.f32 %v572, %v563
        %v574 = vadd.f32 %v573, %v565
        %v575 = vadd.f32 %v574, %v567
        %v576 = vadd.f32 %v575, %v569
        %v577 = vrot.slane %v555, 4
        %v578 = vadd.f32 %v555, %v577
        %v579 = vrot.slane %v578, 2
        %v580 = vadd.f32 %v578, %v579
        %v581 = vrot.slane %v580, 1
        %v582 = vadd.f32 %v580, %v581
        %v583 = vrot.slane %v557, 4
        %v584 = vadd.f32 %v557, %v583
        %v585 = vrot.slane %v584, 2
        %v586 = vadd.f32 %v584, %v585
        %v587 = vrot.slane %v586, 1
        %v588 = vadd.f32 %v586, %v587
        %v589 = vrot.slane %v559, 4
        %v590 = vadd.f32 %v559, %v589
        %v591 = vrot.slane %v590, 2
        %v592 = vadd.f32 %v590, %v591
        %v593 = vrot.slane %v592, 1
        %v594 = vadd.f32 %v592, %v593
        %v595 = vrot.slane %v561, 4
        %v596 = vadd.f32 %v561, %v595
        %v597 = vrot.slane %v596, 2
        %v598 = vadd.f32 %v596, %v597
        %v599 = vrot.slane %v598, 1
        %v600 = vadd.f32 %v598, %v599
        %v601 = vrot.slane %v563, 4
        %v602 = vadd.f32 %v563, %v601
        %v603 = vrot.slane %v602, 2
        %v604 = vadd.f32 %v602, %v603
        %v605 = vrot.slane %v604, 1
        %v606 = vadd.f32 %v604, %v605
        %v607 = vrot.slane %v565, 4
        %v608 = vadd.f32 %v565, %v607
        %v609 = vrot.slane %v608, 2
        %v610 = vadd.f32 %v608, %v609
        %v611 = vrot.slane %v610, 1
        %v612 = vadd.f32 %v610, %v611
        %v613 = vrot.slane %v567, 4
        %v614 = vadd.f32 %v567, %v613
        %v615 = vrot.slane %v614, 2
        %v616 = vadd.f32 %v614, %v615
        %v617 = vrot.slane %v616, 1
        %v618 = vadd.f32 %v616, %v617
        %v619 = vrot.slane %v569, 4
        %v620 = vadd.f32 %v569, %v619
        %v621 = vrot.slane %v620, 2
        %v622 = vadd.f32 %v620, %v621
        %v623 = vrot.slane %v622, 1
        %v624 = vadd.f32 %v622, %v623
        %v625 = vsel %vm537, %v576, %v582
        %v626 = vsel %vm537, %v576, %v588
        %v627 = vsel %vm537, %v576, %v594
        %v628 = vsel %vm537, %v576, %v600
        %v629 = vsel %vm537, %v576, %v606
        %v630 = vsel %vm537, %v576, %v612
        %v631 = vsel %vm537, %v576, %v618
        %v632 = vsel %vm537, %v576, %v624
        %v633 = vrcp.pop %v625
        %v634 = vrcp.pop %v626
        %v635 = vrcp.pop %v627
        %v636 = vrcp.pop %v628
        %v637 = vrcp.pop %v629
        %v638 = vrcp.pop %v630
        %v639 = vrcp.pop %v631
        %v640 = vrcp.pop %v632
        %v641 = vmul.f32 %v555, %v633
        %v642 = vmul.f32 %v557, %v634
        %v643 = vmul.f32 %v559, %v635
        %v644 = vmul.f32 %v561, %v636
        %v645 = vmul.f32 %v563, %v637
        %v646 = vmul.f32 %v565, %v638
        %v647 = vmul.f32 %v567, %v639
        %v648 = vmul.f32 %v569, %v640
        %v649 = vsel %vm537, %v641, 0.0
        %v650 = vsel %vm537, %v642, 0.0
        %v651 = vsel %vm537, %v643, 0.0
        %v652 = vsel %vm537, %v644, 0.0
        %v653 = vsel %vm537, %v645, 0.0
        %v654 = vsel %vm537, %v646, 0.0
        %v655 = vsel %vm537, %v647, 0.0
        %v656 = vsel %vm537, %v648, 0.0
        %657 = vadd.xlane.f32.xlu0 %v649
        %v658 = vpop.xlane.xlu0 %657
        %659 = vadd.xlane.f32.xlu0 %v650
        %v660 = vpop.xlane.xlu0 %659
        %661 = vadd.xlane.f32.xlu0 %v651
        %v662 = vpop.xlane.xlu0 %661
        %663 = vadd.xlane.f32.xlu0 %v652
        %v664 = vpop.xlane.xlu0 %663
        %665 = vadd.xlane.f32.xlu0 %v653
        %v666 = vpop.xlane.xlu0 %665
        %667 = vadd.xlane.f32.xlu0 %v654
        %v668 = vpop.xlane.xlu0 %667
        %669 = vadd.xlane.f32.xlu0 %v655
        %v670 = vpop.xlane.xlu0 %669
        %671 = vadd.xlane.f32.xlu0 %v656
        %v672 = vpop.xlane.xlu0 %671
        %673 = vadd.xlane.f32.xlu0 %v641
        %v674 = vpop.xlane.xlu0 %673
        %675 = vadd.xlane.f32.xlu0 %v642
        %v676 = vpop.xlane.xlu0 %675
        %677 = vadd.xlane.f32.xlu0 %v643
        %v678 = vpop.xlane.xlu0 %677
        %679 = vadd.xlane.f32.xlu0 %v644
        %v680 = vpop.xlane.xlu0 %679
        %681 = vadd.xlane.f32.xlu0 %v645
        %v682 = vpop.xlane.xlu0 %681
        %683 = vadd.xlane.f32.xlu0 %v646
        %v684 = vpop.xlane.xlu0 %683
        %685 = vadd.xlane.f32.xlu0 %v647
        %v686 = vpop.xlane.xlu0 %685
        %687 = vadd.xlane.f32.xlu0 %v648
        %v688 = vpop.xlane.xlu0 %687
        %v689 = vsub.f32 %v674, %v658
        %v690 = vsub.f32 %v676, %v660
        %v691 = vsub.f32 %v678, %v662
        %v692 = vsub.f32 %v680, %v664
        %v693 = vsub.f32 %v682, %v666
        %v694 = vsub.f32 %v684, %v668
        %v695 = vsub.f32 %v686, %v670
        %v696 = vsub.f32 %v688, %v672
        %v697 = vsel %vm537, %v658, %v689
        %v698 = vsel %vm537, %v660, %v690
        %v699 = vsel %vm537, %v662, %v691
        %v700 = vsel %vm537, %v664, %v692
        %v701 = vsel %vm537, %v666, %v693
        %v702 = vsel %vm537, %v668, %v694
        %v703 = vsel %vm537, %v670, %v695
        %v704 = vsel %vm537, %v672, %v696
        %v705 = vrcp.pop %v697
        %v706 = vmul.f32 %v641, %v705
        %v707 = vrcp.pop %v698
        %v708 = vmul.f32 %v642, %v707
        %v709 = vrcp.pop %v699
        %v710 = vmul.f32 %v643, %v709
        %v711 = vrcp.pop %v700
        %v712 = vmul.f32 %v644, %v711
        %v713 = vrcp.pop %v701
        %v714 = vmul.f32 %v645, %v713
        %v715 = vrcp.pop %v702
        %v716 = vmul.f32 %v646, %v715
        %v717 = vrcp.pop %v703
        %v718 = vmul.f32 %v647, %v717
        %v719 = vrcp.pop %v704
        %v720 = vmul.f32 %v648, %v719
        %v721 = vpack.c.bf16 %v708, %v706
        %v722 = vpack.c.bf16 %v712, %v710
        %v723 = vpack.c.bf16 %v716, %v714
        %v724 = vpack.c.bf16 %v720, %v718
        %v725 = vld [vmem:[%s2] sm:$0xf]
        %v726 = vld [vmem:[%s2 + $0x4] sm:$0xf]
        %v727 = vld [vmem:[%s2 + $0x8] sm:$0xf]
        %v728 = vld [vmem:[%s2 + $0xc] sm:$0xf]
        %v729 = vld [vmem:[%s2 + $0x10] sm:$0xf]
        %v730 = vld [vmem:[%s2 + $0x14] sm:$0xf]
        %v731 = vld [vmem:[%s2 + $0x18] sm:$0xf]
        %v732 = vld [vmem:[%s2 + $0x1c] sm:$0xf]
        %v733 = vld [vmem:[%s2 + $0x20] sm:$0xf]
        %v734 = vld [vmem:[%s2 + $0x24] sm:$0xf]
        %v735 = vld [vmem:[%s2 + $0x28] sm:$0xf]
        %v736 = vld [vmem:[%s2 + $0x2c] sm:$0xf]
        %v737 = vld [vmem:[%s2 + $0x30] sm:$0xf]
        %v738 = vld [vmem:[%s2 + $0x34] sm:$0xf]
        %v739 = vld [vmem:[%s2 + $0x38] sm:$0xf]
        %v740 = vld [vmem:[%s2 + $0x3c] sm:$0xf]
        %v757 = vunpack.c.l.b16 %v725
        %v758 = vunpack.c.l.b16 %v726
        %v759 = vunpack.c.l.b16 %v727
        %v760 = vunpack.c.l.b16 %v728
        %v761 = vunpack.c.l.b16 %v729
        %v762 = vunpack.c.l.b16 %v730
        %v763 = vunpack.c.l.b16 %v731
        %v764 = vunpack.c.l.b16 %v732
        %v765 = vunpack.c.l.b16 %v733
        %v766 = vunpack.c.l.b16 %v734
        %v767 = vunpack.c.l.b16 %v735
        %v768 = vunpack.c.l.b16 %v736
        %v769 = vunpack.c.l.b16 %v737
        %v770 = vunpack.c.l.b16 %v738
        %v771 = vunpack.c.l.b16 %v739
        %v772 = vunpack.c.l.b16 %v740
        %v773 = vpack.c.b16 %v758, %v757
        %v774 = vpack.c.b16 %v760, %v759
        %v775 = vpack.c.b16 %v762, %v761
        %v776 = vpack.c.b16 %v764, %v763
        %v777 = vpack.c.b16 %v766, %v765
        %v778 = vpack.c.b16 %v768, %v767
        %v779 = vpack.c.b16 %v770, %v769
        %v780 = vpack.c.b16 %v772, %v771
        %789 = vmatprep.subr.bf16.mxu0 0
        %790 = vmatpush1.bf16.msra.mxu0 %v773
        %791 = vmatprep.subr.bf16.mxu0 0
        %792 = vmatpush1.bf16.msra.mxu0 %v774
        %793 = vmatprep.subr.bf16.mxu0 0
        %794 = vmatpush1.bf16.msra.mxu0 %v775
        %795 = vmatprep.subr.bf16.mxu0 0
        %796 = vmatpush1.bf16.msra.mxu0 %v776
        %797 = vmatprep.subr.bf16.mxu0 0
        %798 = vmatpush1.bf16.msra.mxu0 %v777
        %799 = vmatprep.subr.bf16.mxu0 0
        %800 = vmatpush1.bf16.msra.mxu0 %v778
        %801 = vmatprep.subr.bf16.mxu0 0
        %802 = vmatpush1.bf16.msra.mxu0 %v779
        %803 = vmatprep.subr.bf16.mxu0 0
        %804 = vmatpush1.bf16.msra.mxu0 %v780
        %805 = vmatprep.subr.bf16.mxu0 0
        %806 = vmatpush1.bf16.msra.mxu0 0
        %807 = vmatprep.subr.bf16.mxu0 0
        %808 = vmatpush1.bf16.msra.mxu0 0
        %809 = vmatprep.subr.bf16.mxu0 0
        %810 = vmatpush1.bf16.msra.mxu0 0
        %811 = vmatprep.subr.bf16.mxu0 0
        %812 = vmatpush1.bf16.msra.mxu0 0
        %813 = vmatprep.subr.bf16.mxu0 0
        %814 = vmatpush1.bf16.msra.mxu0 0
        %815 = vmatprep.subr.bf16.mxu0 0
        %816 = vmatpush1.bf16.msra.mxu0 0
        %817 = vmatprep.subr.bf16.mxu0 0
        %818 = vmatpush1.bf16.msra.mxu0 0
        %819 = vmatprep.subr.bf16.mxu0 0
        %820 = vmatpush1.bf16.msra.mxu0 0
        %821 = vmatprep.mubr.bf16.mxu0 0
        %822 = vmatmul.mubr.bf16.gmra.mrb[0].mxu0 %v721
        %v823 = vpop.f32.mrb[0].mxu0
        %v824 = vadd.f32 0.0, %v823
        %v825 = vpop.f32.mrb[0].mxu0
        %v826 = vpop.f32.mrb[0].mxu0
        %v827 = vadd.f32 0.0, %v826
        %v828 = vpop.f32.mrb[0].mxu0
        %829 = vmatprep.mubr.bf16.mxu0 0
        %830 = vmatmul.mubr.bf16.gmra.mrb[0].mxu0 %v722
        %v831 = vpop.f32.mrb[0].mxu0
        %v832 = vadd.f32 0.0, %v831
        %v833 = vpop.f32.mrb[0].mxu0
        %v834 = vpop.f32.mrb[0].mxu0
        %v835 = vadd.f32 0.0, %v834
        %v836 = vpop.f32.mrb[0].mxu0
        %837 = vmatprep.mubr.bf16.mxu0 0
        %838 = vmatmul.mubr.bf16.gmra.mrb[0].mxu0 %v723
        %v839 = vpop.f32.mrb[0].mxu0
        %v840 = vadd.f32 0.0, %v839
        %v841 = vpop.f32.mrb[0].mxu0
        %v842 = vpop.f32.mrb[0].mxu0
        %v843 = vadd.f32 0.0, %v842
        %v844 = vpop.f32.mrb[0].mxu0
        %845 = vmatprep.mubr.bf16.mxu0 0
        %846 = vmatmul.mubr.bf16.gmra.mrb[0].mxu0 %v724
        %v847 = vpop.f32.mrb[0].mxu0
        %v848 = vadd.f32 0.0, %v847
        %v849 = vpop.f32.mrb[0].mxu0
        %v850 = vpop.f32.mrb[0].mxu0
        %v851 = vadd.f32 0.0, %v850
        %v852 = vpop.f32.mrb[0].mxu0
        %853 = vdwg.mxu0
        %v854 = vadd.f32 %v372, %v824
        %v855 = vadd.f32 %v373, %v827
        %v856 = vadd.f32 %v374, %v832
        %v857 = vadd.f32 %v375, %v835
        %v858 = vadd.f32 %v376, %v840
        %v859 = vadd.f32 %v377, %v843
        %v860 = vadd.f32 %v378, %v848
        %v861 = vadd.f32 %v379, %v851
        %v862 = vpack.c.bf16 %v855, %v854
        %v863 = vpack.c.bf16 %v857, %v856
        %v864 = vpack.c.bf16 %v859, %v858
        %v865 = vpack.c.bf16 %v861, %v860
        %v866 = vld [vmem:[%s3] sm:$0xf]
        %v867 = vld [vmem:[%s3 + $0x4] sm:$0xf]
        %v868 = vld [vmem:[%s3 + $0x8] sm:$0xf]
        %v869 = vld [vmem:[%s3 + $0xc] sm:$0xf]
        %v870 = vld [vmem:[%s4] sm:$0x1]
        %v872 = vlaneseq
        %v873 = vshrl.u32 %v872, 7
        %v874 = vsub.s32 0, %v873
        %v875 = vrot.slane %v870, %v874
        %v881 = vunpack.c.l.b16 %v866
        %v882 = vunpack.c.l.b16 %v867
        %v883 = vunpack.c.l.b16 %v868
        %v884 = vunpack.c.l.b16 %v869
        %v885 = vpack.c.b16 %v882, %v881
        %v886 = vpack.c.b16 %v884, %v883
        %v890 = vsel %vm403, %v862, 0
        %v893 = vsel %vm403, %v863, 0
        %v896 = vsel %vm403, %v864, 0
        %v899 = vsel %vm403, %v865, 0
        %901 = vmatprep.subr.bf16.mxu0 0
        %902 = vmatpush1.bf16.msra.mxu0 %v885
        %903 = vmatprep.subr.bf16.mxu0 0
        %904 = vmatpush1.bf16.msra.mxu0 %v886
        %905 = vmatprep.subr.bf16.mxu0 0
        %906 = vmatpush1.bf16.msra.mxu0 0
        %907 = vmatprep.subr.bf16.mxu0 0
        %908 = vmatpush1.bf16.msra.mxu0 0
        %909 = vmatprep.subr.bf16.mxu0 0
        %910 = vmatpush1.bf16.msra.mxu0 0
        %911 = vmatprep.subr.bf16.mxu0 0
        %912 = vmatpush1.bf16.msra.mxu0 0
        %913 = vmatprep.subr.bf16.mxu0 0
        %914 = vmatpush1.bf16.msra.mxu0 0
        %915 = vmatprep.subr.bf16.mxu0 0
        %916 = vmatpush1.bf16.msra.mxu0 0
        %917 = vmatprep.subr.bf16.mxu0 0
        %918 = vmatpush1.bf16.msra.mxu0 0
        %919 = vmatprep.subr.bf16.mxu0 0
        %920 = vmatpush1.bf16.msra.mxu0 0
        %921 = vmatprep.subr.bf16.mxu0 0
        %922 = vmatpush1.bf16.msra.mxu0 0
        %923 = vmatprep.subr.bf16.mxu0 0
        %924 = vmatpush1.bf16.msra.mxu0 0
        %925 = vmatprep.subr.bf16.mxu0 0
        %926 = vmatpush1.bf16.msra.mxu0 0
        %927 = vmatprep.subr.bf16.mxu0 0
        %928 = vmatpush1.bf16.msra.mxu0 0
        %929 = vmatprep.subr.bf16.mxu0 0
        %930 = vmatpush1.bf16.msra.mxu0 0
        %931 = vmatprep.subr.bf16.mxu0 0
        %932 = vmatpush1.bf16.msra.mxu0 0
        %933 = vmatprep.mubr.bf16.mxu0 0
        %934 = vmatmul.mubr.bf16.gmra.mrb[0].mxu0 %v890
        %v935 = vpop.f32.mrb[0].mxu0
        %v936 = vadd.f32 %v875, %v935
        %v937 = vpop.f32.mrb[0].mxu0
        %v938 = vpop.f32.mrb[0].mxu0
        %v939 = vadd.f32 %v875, %v938
        %v940 = vpop.f32.mrb[0].mxu0
        %941 = vmatprep.mubr.bf16.mxu0 0
        %942 = vmatmul.mubr.bf16.gmra.mrb[0].mxu0 %v893
        %v943 = vpop.f32.mrb[0].mxu0
        %v944 = vadd.f32 %v875, %v943
        %v945 = vpop.f32.mrb[0].mxu0
        %v946 = vpop.f32.mrb[0].mxu0
        %v947 = vadd.f32 %v875, %v946
        %v948 = vpop.f32.mrb[0].mxu0
        %949 = vmatprep.mubr.bf16.mxu0 0
        %950 = vmatmul.mubr.bf16.gmra.mrb[0].mxu0 %v896
        %v951 = vpop.f32.mrb[0].mxu0
        %v952 = vadd.f32 %v875, %v951
        %v953 = vpop.f32.mrb[0].mxu0
        %v954 = vpop.f32.mrb[0].mxu0
        %v955 = vadd.f32 %v875, %v954
        %v956 = vpop.f32.mrb[0].mxu0
        %957 = vmatprep.mubr.bf16.mxu0 0
        %958 = vmatmul.mubr.bf16.gmra.mrb[0].mxu0 %v899
        %v959 = vpop.f32.mrb[0].mxu0
        %v960 = vadd.f32 %v875, %v959
        %v961 = vpop.f32.mrb[0].mxu0
        %v962 = vpop.f32.mrb[0].mxu0
        %v963 = vadd.f32 %v875, %v962
        %v964 = vpop.f32.mrb[0].mxu0
        %965 = vdwg.mxu0
        %v966 = vsel %vm403, %v936, 0.0
        %967 = vadd.xlane.f32.xlu0 %v966
        %v968 = vpop.xlane.xlu0 %967
        %v969 = vsel %vm403, %v939, 0.0
        %970 = vadd.xlane.f32.xlu0 %v969
        %v971 = vpop.xlane.xlu0 %970
        %v972 = vsel %vm403, %v944, 0.0
        %973 = vadd.xlane.f32.xlu0 %v972
        %v974 = vpop.xlane.xlu0 %973
        %v975 = vsel %vm403, %v947, 0.0
        %976 = vadd.xlane.f32.xlu0 %v975
        %v977 = vpop.xlane.xlu0 %976
        %v978 = vsel %vm403, %v952, 0.0
        %979 = vadd.xlane.f32.xlu0 %v978
        %v980 = vpop.xlane.xlu0 %979
        %v981 = vsel %vm403, %v955, 0.0
        %982 = vadd.xlane.f32.xlu0 %v981
        %v983 = vpop.xlane.xlu0 %982
        %v984 = vsel %vm403, %v960, 0.0
        %985 = vadd.xlane.f32.xlu0 %v984
        %v986 = vpop.xlane.xlu0 %985
        %v987 = vsel %vm403, %v963, 0.0
        %988 = vadd.xlane.f32.xlu0 %v987
        %v989 = vpop.xlane.xlu0 %988
        %v990 = vmul.f32 %v968, 0.03125
        %v991 = vmul.f32 %v971, 0.03125
        %v992 = vmul.f32 %v974, 0.03125
        %v993 = vmul.f32 %v977, 0.03125
        %v994 = vmul.f32 %v980, 0.03125
        %v995 = vmul.f32 %v983, 0.03125
        %v996 = vmul.f32 %v986, 0.03125
        %v997 = vmul.f32 %v989, 0.03125
        %v998 = vsub.f32 %v936, %v990
        %v999 = vsub.f32 %v939, %v991
        %v1000 = vsub.f32 %v944, %v992
        %v1001 = vsub.f32 %v947, %v993
        %v1002 = vsub.f32 %v952, %v994
        %v1003 = vsub.f32 %v955, %v995
        %v1004 = vsub.f32 %v960, %v996
        %v1005 = vsub.f32 %v963, %v997
        %v1006 = vmul.f32 %v998, %v998
        %v1007 = vmul.f32 %v999, %v999
        %v1008 = vmul.f32 %v1000, %v1000
        %v1009 = vmul.f32 %v1001, %v1001
        %v1010 = vmul.f32 %v1002, %v1002
        %v1011 = vmul.f32 %v1003, %v1003
        %v1012 = vmul.f32 %v1004, %v1004
        %v1013 = vmul.f32 %v1005, %v1005
        %v1014 = vsel %vm403, %v1006, 0.0
        %1015 = vadd.xlane.f32.xlu0 %v1014
        %v1016 = vpop.xlane.xlu0 %1015
        %v1017 = vsel %vm403, %v1007, 0.0
        %1018 = vadd.xlane.f32.xlu0 %v1017
        %v1019 = vpop.xlane.xlu0 %1018
        %v1020 = vsel %vm403, %v1008, 0.0
        %1021 = vadd.xlane.f32.xlu0 %v1020
        %v1022 = vpop.xlane.xlu0 %1021
        %v1023 = vsel %vm403, %v1009, 0.0
        %1024 = vadd.xlane.f32.xlu0 %v1023
        %v1025 = vpop.xlane.xlu0 %1024
        %v1026 = vsel %vm403, %v1010, 0.0
        %1027 = vadd.xlane.f32.xlu0 %v1026
        %v1028 = vpop.xlane.xlu0 %1027
        %v1029 = vsel %vm403, %v1011, 0.0
        %1030 = vadd.xlane.f32.xlu0 %v1029
        %v1031 = vpop.xlane.xlu0 %1030
        %v1032 = vsel %vm403, %v1012, 0.0
        %1033 = vadd.xlane.f32.xlu0 %v1032
        %v1034 = vpop.xlane.xlu0 %1033
        %v1035 = vsel %vm403, %v1013, 0.0
        %1036 = vadd.xlane.f32.xlu0 %v1035
        %v1037 = vpop.xlane.xlu0 %1036
        %v1038 = vmul.f32 %v1016, 0.03125
        %v1039 = vmul.f32 %v1019, 0.03125
        %v1040 = vmul.f32 %v1022, 0.03125
        %v1041 = vmul.f32 %v1025, 0.03125
        %v1042 = vmul.f32 %v1028, 0.03125
        %v1043 = vmul.f32 %v1031, 0.03125
        %v1044 = vmul.f32 %v1034, 0.03125
        %v1045 = vmul.f32 %v1037, 0.03125
        %v1046 = vadd.f32 %v1038, 1e-05
        %v1047 = vadd.f32 %v1039, 1e-05
        %v1048 = vadd.f32 %v1040, 1e-05
        %v1049 = vadd.f32 %v1041, 1e-05
        %v1050 = vadd.f32 %v1042, 1e-05
        %v1051 = vadd.f32 %v1043, 1e-05
        %v1052 = vadd.f32 %v1044, 1e-05
        %v1053 = vadd.f32 %v1045, 1e-05
        %v1054 = vrsqrt.pop %v1046
        %v1055 = vrsqrt.pop %v1047
        %v1056 = vrsqrt.pop %v1048
        %v1057 = vrsqrt.pop %v1049
        %v1058 = vrsqrt.pop %v1050
        %v1059 = vrsqrt.pop %v1051
        %v1060 = vrsqrt.pop %v1052
        %v1061 = vrsqrt.pop %v1053
        %v1062 = vmul.f32 %v998, %v1054
        %v1063 = vmul.f32 %v999, %v1055
        %v1064 = vmul.f32 %v1000, %v1056
        %v1065 = vmul.f32 %v1001, %v1057
        %v1066 = vmul.f32 %v1002, %v1058
        %v1067 = vmul.f32 %v1003, %v1059
        %v1068 = vmul.f32 %v1004, %v1060
        %v1069 = vmul.f32 %v1005, %v1061
        %v1070 = vld [vmem:[%s5] sm:$0x1]
        %v1072 = vlaneseq
        %v1073 = vshrl.u32 %v1072, 7
        %v1074 = vsub.s32 0, %v1073
        %v1075 = vrot.slane %v1070, %v1074
        %v1077 = vmul.f32 %v1062, %v1075
        %v1078 = vmul.f32 %v1063, %v1075
        %v1079 = vmul.f32 %v1064, %v1075
        %v1080 = vmul.f32 %v1065, %v1075
        %v1081 = vmul.f32 %v1066, %v1075
        %v1082 = vmul.f32 %v1067, %v1075
        %v1083 = vmul.f32 %v1068, %v1075
        %v1084 = vmul.f32 %v1069, %v1075
        %v1085 = vld [vmem:[%s6] sm:$0x1]
        %v1087 = vlaneseq
        %v1088 = vshrl.u32 %v1087, 7
        %v1089 = vsub.s32 0, %v1088
        %v1090 = vrot.slane %v1085, %v1089
        %v1092 = vadd.f32 %v1077, %v1090
        %v1093 = vadd.f32 %v1078, %v1090
        %v1094 = vadd.f32 %v1079, %v1090
        %v1095 = vadd.f32 %v1080, %v1090
        %v1096 = vadd.f32 %v1081, %v1090
        %v1097 = vadd.f32 %v1082, %v1090
        %v1098 = vadd.f32 %v1083, %v1090
        %v1099 = vadd.f32 %v1084, %v1090
        %v1100 = vpack.c.bf16 %v1093, %v1092
        %v1101 = vpack.c.bf16 %v1095, %v1094
        %v1102 = vpack.c.bf16 %v1097, %v1096
        %v1103 = vpack.c.bf16 %v1099, %v1098
        %s1104 = scalar_lea.vmem %s1, 16
        %v1105 = vld [vmem:[%s1104] sm:$0xf]
        %v1106 = vld [vmem:[%s1104 + $0x4] sm:$0xf]
        %v1107 = vld [vmem:[%s1104 + $0x8] sm:$0xf]
        %v1108 = vld [vmem:[%s1104 + $0xc] sm:$0xf]
        %v1113 = vunpack.c.l.b16 %v1105
        %v1114 = vunpack.c.l.b16 %v1106
        %v1115 = vunpack.c.l.b16 %v1107
        %v1116 = vunpack.c.l.b16 %v1108
        %v1117 = vpack.c.b16 %v1114, %v1113
        %v1118 = vpack.c.b16 %v1116, %v1115
        %v1122 = vsel %vm403, %v1100, 0
        %v1125 = vsel %vm403, %v1101, 0
        %v1128 = vsel %vm403, %v1102, 0
        %v1131 = vsel %vm403, %v1103, 0
        %1133 = vmatprep.subr.bf16.mxu0 0
        %1134 = vmatpush1.bf16.msra.mxu0 %v1117
        %1135 = vmatprep.subr.bf16.mxu0 0
        %1136 = vmatpush1.bf16.msra.mxu0 %v1118
        %1137 = vmatprep.subr.bf16.mxu0 0
        %1138 = vmatpush1.bf16.msra.mxu0 0
        %1139 = vmatprep.subr.bf16.mxu0 0
        %1140 = vmatpush1.bf16.msra.mxu0 0
        %1141 = vmatprep.subr.bf16.mxu0 0
        %1142 = vmatpush1.bf16.msra.mxu0 0
        %1143 = vmatprep.subr.bf16.mxu0 0
        %1144 = vmatpush1.bf16.msra.mxu0 0
        %1145 = vmatprep.subr.bf16.mxu0 0
        %1146 = vmatpush1.bf16.msra.mxu0 0
        %1147 = vmatprep.subr.bf16.mxu0 0
        %1148 = vmatpush1.bf16.msra.mxu0 0
        %1149 = vmatprep.subr.bf16.mxu0 0
        %1150 = vmatpush1.bf16.msra.mxu0 0
        %1151 = vmatprep.subr.bf16.mxu0 0
        %1152 = vmatpush1.bf16.msra.mxu0 0
        %1153 = vmatprep.subr.bf16.mxu0 0
        %1154 = vmatpush1.bf16.msra.mxu0 0
        %1155 = vmatprep.subr.bf16.mxu0 0
        %1156 = vmatpush1.bf16.msra.mxu0 0
        %1157 = vmatprep.subr.bf16.mxu0 0
        %1158 = vmatpush1.bf16.msra.mxu0 0
        %1159 = vmatprep.subr.bf16.mxu0 0
        %1160 = vmatpush1.bf16.msra.mxu0 0
        %1161 = vmatprep.subr.bf16.mxu0 0
        %1162 = vmatpush1.bf16.msra.mxu0 0
        %1163 = vmatprep.subr.bf16.mxu0 0
        %1164 = vmatpush1.bf16.msra.mxu0 0
        %1165 = vmatprep.mubr.bf16.mxu0 0
        %1166 = vmatmul.mubr.bf16.gmra.mrb[0].mxu0 %v1122
        %v1167 = vpop.f32.mrb[0].mxu0
        %v1168 = vadd.f32 0.0, %v1167
        %v1169 = vpop.f32.mrb[0].mxu0
        %v1170 = vpop.f32.mrb[0].mxu0
        %v1171 = vadd.f32 0.0, %v1170
        %v1172 = vpop.f32.mrb[0].mxu0
        %1173 = vmatprep.mubr.bf16.mxu0 0
        %1174 = vmatmul.mubr.bf16.gmra.mrb[0].mxu0 %v1125
        %v1175 = vpop.f32.mrb[0].mxu0
        %v1176 = vadd.f32 0.0, %v1175
        %v1177 = vpop.f32.mrb[0].mxu0
        %v1178 = vpop.f32.mrb[0].mxu0
        %v1179 = vadd.f32 0.0, %v1178
        %v1180 = vpop.f32.mrb[0].mxu0
        %1181 = vmatprep.mubr.bf16.mxu0 0
        %1182 = vmatmul.mubr.bf16.gmra.mrb[0].mxu0 %v1128
        %v1183 = vpop.f32.mrb[0].mxu0
        %v1184 = vadd.f32 0.0, %v1183
        %v1185 = vpop.f32.mrb[0].mxu0
        %v1186 = vpop.f32.mrb[0].mxu0
        %v1187 = vadd.f32 0.0, %v1186
        %v1188 = vpop.f32.mrb[0].mxu0
        %1189 = vmatprep.mubr.bf16.mxu0 0
        %1190 = vmatmul.mubr.bf16.gmra.mrb[0].mxu0 %v1131
        %v1191 = vpop.f32.mrb[0].mxu0
        %v1192 = vadd.f32 0.0, %v1191
        %v1193 = vpop.f32.mrb[0].mxu0
        %v1194 = vpop.f32.mrb[0].mxu0
        %v1195 = vadd.f32 0.0, %v1194
        %v1196 = vpop.f32.mrb[0].mxu0
        %1197 = vdwg.mxu0
        %v1198 = vmax.f32 %v1168, %v1184
        %v1199 = vmax.f32 %v1171, %v1187
        %v1200 = vmax.f32 %v1176, %v1192
        %v1201 = vmax.f32 %v1179, %v1195
        %v1202 = vmax.f32 %v1198, %v1199
        %v1203 = vmax.f32 %v1200, %v1201
        %v1204 = vmax.f32 %v1202, %v1203
        %v1205 = vrot.slane %v1168, 4
        %v1206 = vmax.f32 %v1168, %v1205
        %v1207 = vrot.slane %v1206, 2
        %v1208 = vmax.f32 %v1206, %v1207
        %v1209 = vrot.slane %v1208, 1
        %v1210 = vmax.f32 %v1208, %v1209
        %v1211 = vrot.slane %v1171, 4
        %v1212 = vmax.f32 %v1171, %v1211
        %v1213 = vrot.slane %v1212, 2
        %v1214 = vmax.f32 %v1212, %v1213
        %v1215 = vrot.slane %v1214, 1
        %v1216 = vmax.f32 %v1214, %v1215
        %v1217 = vrot.slane %v1176, 4
        %v1218 = vmax.f32 %v1176, %v1217
        %v1219 = vrot.slane %v1218, 2
        %v1220 = vmax.f32 %v1218, %v1219
        %v1221 = vrot.slane %v1220, 1
        %v1222 = vmax.f32 %v1220, %v1221
        %v1223 = vrot.slane %v1179, 4
        %v1224 = vmax.f32 %v1179, %v1223
        %v1225 = vrot.slane %v1224, 2
        %v1226 = vmax.f32 %v1224, %v1225
        %v1227 = vrot.slane %v1226, 1
        %v1228 = vmax.f32 %v1226, %v1227
        %v1229 = vrot.slane %v1184, 4
        %v1230 = vmax.f32 %v1184, %v1229
        %v1231 = vrot.slane %v1230, 2
        %v1232 = vmax.f32 %v1230, %v1231
        %v1233 = vrot.slane %v1232, 1
        %v1234 = vmax.f32 %v1232, %v1233
        %v1235 = vrot.slane %v1187, 4
        %v1236 = vmax.f32 %v1187, %v1235
        %v1237 = vrot.slane %v1236, 2
        %v1238 = vmax.f32 %v1236, %v1237
        %v1239 = vrot.slane %v1238, 1
        %v1240 = vmax.f32 %v1238, %v1239
        %v1241 = vrot.slane %v1192, 4
        %v1242 = vmax.f32 %v1192, %v1241
        %v1243 = vrot.slane %v1242, 2
        %v1244 = vmax.f32 %v1242, %v1243
        %v1245 = vrot.slane %v1244, 1
        %v1246 = vmax.f32 %v1244, %v1245
        %v1247 = vrot.slane %v1195, 4
        %v1248 = vmax.f32 %v1195, %v1247
        %v1249 = vrot.slane %v1248, 2
        %v1250 = vmax.f32 %v1248, %v1249
        %v1251 = vrot.slane %v1250, 1
        %v1252 = vmax.f32 %v1250, %v1251
        %v1253 = vsel %vm537, %v1204, %v1210
        %v1254 = vsel %vm537, %v1204, %v1216
        %v1255 = vsel %vm537, %v1204, %v1222
        %v1256 = vsel %vm537, %v1204, %v1228
        %v1257 = vsel %vm537, %v1204, %v1234
        %v1258 = vsel %vm537, %v1204, %v1240
        %v1259 = vsel %vm537, %v1204, %v1246
        %v1260 = vsel %vm537, %v1204, %v1252
        %v1261 = vsub.f32 %v1168, %v1253
        %v1262 = vsub.f32 %v1171, %v1254
        %v1263 = vsub.f32 %v1176, %v1255
        %v1264 = vsub.f32 %v1179, %v1256
        %v1265 = vsub.f32 %v1184, %v1257
        %v1266 = vsub.f32 %v1187, %v1258
        %v1267 = vsub.f32 %v1192, %v1259
        %v1268 = vsub.f32 %v1195, %v1260
        %v1269 = vmul.f32 %v1261, 1.442695
        %v1270 = vpow.pop %v1269
        %v1271 = vmul.f32 %v1262, 1.442695
        %v1272 = vpow.pop %v1271
        %v1273 = vmul.f32 %v1263, 1.442695
        %v1274 = vpow.pop %v1273
        %v1275 = vmul.f32 %v1264, 1.442695
        %v1276 = vpow.pop %v1275
        %v1277 = vmul.f32 %v1265, 1.442695
        %v1278 = vpow.pop %v1277
        %v1279 = vmul.f32 %v1266, 1.442695
        %v1280 = vpow.pop %v1279
        %v1281 = vmul.f32 %v1267, 1.442695
        %v1282 = vpow.pop %v1281
        %v1283 = vmul.f32 %v1268, 1.442695
        %v1284 = vpow.pop %v1283
        %v1285 = vadd.f32 %v1270, %v1272
        %v1286 = vadd.f32 %v1285, %v1274
        %v1287 = vadd.f32 %v1286, %v1276
        %v1288 = vadd.f32 %v1287, %v1278
        %v1289 = vadd.f32 %v1288, %v1280
        %v1290 = vadd.f32 %v1289, %v1282
        %v1291 = vadd.f32 %v1290, %v1284
        %v1292 = vrot.slane %v1270, 4
        %v1293 = vadd.f32 %v1270, %v1292
        %v1294 = vrot.slane %v1293, 2
        %v1295 = vadd.f32 %v1293, %v1294
        %v1296 = vrot.slane %v1295, 1
        %v1297 = vadd.f32 %v1295, %v1296
        %v1298 = vrot.slane %v1272, 4
        %v1299 = vadd.f32 %v1272, %v1298
        %v1300 = vrot.slane %v1299, 2
        %v1301 = vadd.f32 %v1299, %v1300
        %v1302 = vrot.slane %v1301, 1
        %v1303 = vadd.f32 %v1301, %v1302
        %v1304 = vrot.slane %v1274, 4
        %v1305 = vadd.f32 %v1274, %v1304
        %v1306 = vrot.slane %v1305, 2
        %v1307 = vadd.f32 %v1305, %v1306
        %v1308 = vrot.slane %v1307, 1
        %v1309 = vadd.f32 %v1307, %v1308
        %v1310 = vrot.slane %v1276, 4
        %v1311 = vadd.f32 %v1276, %v1310
        %v1312 = vrot.slane %v1311, 2
        %v1313 = vadd.f32 %v1311, %v1312
        %v1314 = vrot.slane %v1313, 1
        %v1315 = vadd.f32 %v1313, %v1314
        %v1316 = vrot.slane %v1278, 4
        %v1317 = vadd.f32 %v1278, %v1316
        %v1318 = vrot.slane %v1317, 2
        %v1319 = vadd.f32 %v1317, %v1318
        %v1320 = vrot.slane %v1319, 1
        %v1321 = vadd.f32 %v1319, %v1320
        %v1322 = vrot.slane %v1280, 4
        %v1323 = vadd.f32 %v1280, %v1322
        %v1324 = vrot.slane %v1323, 2
        %v1325 = vadd.f32 %v1323, %v1324
        %v1326 = vrot.slane %v1325, 1
        %v1327 = vadd.f32 %v1325, %v1326
        %v1328 = vrot.slane %v1282, 4
        %v1329 = vadd.f32 %v1282, %v1328
        %v1330 = vrot.slane %v1329, 2
        %v1331 = vadd.f32 %v1329, %v1330
        %v1332 = vrot.slane %v1331, 1
        %v1333 = vadd.f32 %v1331, %v1332
        %v1334 = vrot.slane %v1284, 4
        %v1335 = vadd.f32 %v1284, %v1334
        %v1336 = vrot.slane %v1335, 2
        %v1337 = vadd.f32 %v1335, %v1336
        %v1338 = vrot.slane %v1337, 1
        %v1339 = vadd.f32 %v1337, %v1338
        %v1340 = vsel %vm537, %v1291, %v1297
        %v1341 = vsel %vm537, %v1291, %v1303
        %v1342 = vsel %vm537, %v1291, %v1309
        %v1343 = vsel %vm537, %v1291, %v1315
        %v1344 = vsel %vm537, %v1291, %v1321
        %v1345 = vsel %vm537, %v1291, %v1327
        %v1346 = vsel %vm537, %v1291, %v1333
        %v1347 = vsel %vm537, %v1291, %v1339
        %v1348 = vrcp.pop %v1340
        %v1349 = vrcp.pop %v1341
        %v1350 = vrcp.pop %v1342
        %v1351 = vrcp.pop %v1343
        %v1352 = vrcp.pop %v1344
        %v1353 = vrcp.pop %v1345
        %v1354 = vrcp.pop %v1346
        %v1355 = vrcp.pop %v1347
        %v1356 = vmul.f32 %v1270, %v1348
        %v1357 = vmul.f32 %v1272, %v1349
        %v1358 = vmul.f32 %v1274, %v1350
        %v1359 = vmul.f32 %v1276, %v1351
        %v1360 = vmul.f32 %v1278, %v1352
        %v1361 = vmul.f32 %v1280, %v1353
        %v1362 = vmul.f32 %v1282, %v1354
        %v1363 = vmul.f32 %v1284, %v1355
        %v1364 = vsel %vm537, %v1356, 0.0
        %v1365 = vsel %vm537, %v1357, 0.0
        %v1366 = vsel %vm537, %v1358, 0.0
        %v1367 = vsel %vm537, %v1359, 0.0
        %v1368 = vsel %vm537, %v1360, 0.0
        %v1369 = vsel %vm537, %v1361, 0.0
        %v1370 = vsel %vm537, %v1362, 0.0
        %v1371 = vsel %vm537, %v1363, 0.0
        %1372 = vadd.xlane.f32.xlu0 %v1364
        %v1373 = vpop.xlane.xlu0 %1372
        %1374 = vadd.xlane.f32.xlu0 %v1365
        %v1375 = vpop.xlane.xlu0 %1374
        %1376 = vadd.xlane.f32.xlu0 %v1366
        %v1377 = vpop.xlane.xlu0 %1376
        %1378 = vadd.xlane.f32.xlu0 %v1367
        %v1379 = vpop.xlane.xlu0 %1378
        %1380 = vadd.xlane.f32.xlu0 %v1368
        %v1381 = vpop.xlane.xlu0 %1380
        %1382 = vadd.xlane.f32.xlu0 %v1369
        %v1383 = vpop.xlane.xlu0 %1382
        %1384 = vadd.xlane.f32.xlu0 %v1370
        %v1385 = vpop.xlane.xlu0 %1384
        %1386 = vadd.xlane.f32.xlu0 %v1371
        %v1387 = vpop.xlane.xlu0 %1386
        %1388 = vadd.xlane.f32.xlu0 %v1356
        %v1389 = vpop.xlane.xlu0 %1388
        %1390 = vadd.xlane.f32.xlu0 %v1357
        %v1391 = vpop.xlane.xlu0 %1390
        %1392 = vadd.xlane.f32.xlu0 %v1358
        %v1393 = vpop.xlane.xlu0 %1392
        %1394 = vadd.xlane.f32.xlu0 %v1359
        %v1395 = vpop.xlane.xlu0 %1394
        %1396 = vadd.xlane.f32.xlu0 %v1360
        %v1397 = vpop.xlane.xlu0 %1396
        %1398 = vadd.xlane.f32.xlu0 %v1361
        %v1399 = vpop.xlane.xlu0 %1398
        %1400 = vadd.xlane.f32.xlu0 %v1362
        %v1401 = vpop.xlane.xlu0 %1400
        %1402 = vadd.xlane.f32.xlu0 %v1363
        %v1403 = vpop.xlane.xlu0 %1402
        %v1404 = vsub.f32 %v1389, %v1373
        %v1405 = vsub.f32 %v1391, %v1375
        %v1406 = vsub.f32 %v1393, %v1377
        %v1407 = vsub.f32 %v1395, %v1379
        %v1408 = vsub.f32 %v1397, %v1381
        %v1409 = vsub.f32 %v1399, %v1383
        %v1410 = vsub.f32 %v1401, %v1385
        %v1411 = vsub.f32 %v1403, %v1387
        %v1412 = vsel %vm537, %v1373, %v1404
        %v1413 = vsel %vm537, %v1375, %v1405
        %v1414 = vsel %vm537, %v1377, %v1406
        %v1415 = vsel %vm537, %v1379, %v1407
        %v1416 = vsel %vm537, %v1381, %v1408
        %v1417 = vsel %vm537, %v1383, %v1409
        %v1418 = vsel %vm537, %v1385, %v1410
        %v1419 = vsel %vm537, %v1387, %v1411
        %v1420 = vrcp.pop %v1412
        %v1421 = vmul.f32 %v1356, %v1420
        %v1422 = vrcp.pop %v1413
        %v1423 = vmul.f32 %v1357, %v1422
        %v1424 = vrcp.pop %v1414
        %v1425 = vmul.f32 %v1358, %v1424
        %v1426 = vrcp.pop %v1415
        %v1427 = vmul.f32 %v1359, %v1426
        %v1428 = vrcp.pop %v1416
        %v1429 = vmul.f32 %v1360, %v1428
        %v1430 = vrcp.pop %v1417
        %v1431 = vmul.f32 %v1361, %v1430
        %v1432 = vrcp.pop %v1418
        %v1433 = vmul.f32 %v1362, %v1432
        %v1434 = vrcp.pop %v1419
        %v1435 = vmul.f32 %v1363, %v1434
        %v1436 = vpack.c.bf16 %v1423, %v1421
        %v1437 = vpack.c.bf16 %v1427, %v1425
        %v1438 = vpack.c.bf16 %v1431, %v1429
        %v1439 = vpack.c.bf16 %v1435, %v1433
        %s1440 = scalar_lea.vmem %s2, 64
        %v1441 = vld [vmem:[%s1440] sm:$0xf]
        %v1442 = vld [vmem:[%s1440 + $0x4] sm:$0xf]
        %v1443 = vld [vmem:[%s1440 + $0x8] sm:$0xf]
        %v1444 = vld [vmem:[%s1440 + $0xc] sm:$0xf]
        %v1445 = vld [vmem:[%s1440 + $0x10] sm:$0xf]
        %v1446 = vld [vmem:[%s1440 + $0x14] sm:$0xf]
        %v1447 = vld [vmem:[%s1440 + $0x18] sm:$0xf]
        %v1448 = vld [vmem:[%s1440 + $0x1c] sm:$0xf]
        %v1449 = vld [vmem:[%s1440 + $0x20] sm:$0xf]
        %v1450 = vld [vmem:[%s1440 + $0x24] sm:$0xf]
        %v1451 = vld [vmem:[%s1440 + $0x28] sm:$0xf]
        %v1452 = vld [vmem:[%s1440 + $0x2c] sm:$0xf]
        %v1453 = vld [vmem:[%s1440 + $0x30] sm:$0xf]
        %v1454 = vld [vmem:[%s1440 + $0x34] sm:$0xf]
        %v1455 = vld [vmem:[%s1440 + $0x38] sm:$0xf]
        %v1456 = vld [vmem:[%s1440 + $0x3c] sm:$0xf]
        %v1473 = vunpack.c.l.b16 %v1441
        %v1474 = vunpack.c.l.b16 %v1442
        %v1475 = vunpack.c.l.b16 %v1443
        %v1476 = vunpack.c.l.b16 %v1444
        %v1477 = vunpack.c.l.b16 %v1445
        %v1478 = vunpack.c.l.b16 %v1446
        %v1479 = vunpack.c.l.b16 %v1447
        %v1480 = vunpack.c.l.b16 %v1448
        %v1481 = vunpack.c.l.b16 %v1449
        %v1482 = vunpack.c.l.b16 %v1450
        %v1483 = vunpack.c.l.b16 %v1451
        %v1484 = vunpack.c.l.b16 %v1452
        %v1485 = vunpack.c.l.b16 %v1453
        %v1486 = vunpack.c.l.b16 %v1454
        %v1487 = vunpack.c.l.b16 %v1455
        %v1488 = vunpack.c.l.b16 %v1456
        %v1489 = vpack.c.b16 %v1474, %v1473
        %v1490 = vpack.c.b16 %v1476, %v1475
        %v1491 = vpack.c.b16 %v1478, %v1477
        %v1492 = vpack.c.b16 %v1480, %v1479
        %v1493 = vpack.c.b16 %v1482, %v1481
        %v1494 = vpack.c.b16 %v1484, %v1483
        %v1495 = vpack.c.b16 %v1486, %v1485
        %v1496 = vpack.c.b16 %v1488, %v1487
        %1505 = vmatprep.subr.bf16.mxu0 0
        %1506 = vmatpush1.bf16.msra.mxu0 %v1489
        %1507 = vmatprep.subr.bf16.mxu0 0
        %1508 = vmatpush1.bf16.msra.mxu0 %v1490
        %1509 = vmatprep.subr.bf16.mxu0 0
        %1510 = vmatpush1.bf16.msra.mxu0 %v1491
        %1511 = vmatprep.subr.bf16.mxu0 0
        %1512 = vmatpush1.bf16.msra.mxu0 %v1492
        %1513 = vmatprep.subr.bf16.mxu0 0
        %1514 = vmatpush1.bf16.msra.mxu0 %v1493
        %1515 = vmatprep.subr.bf16.mxu0 0
        %1516 = vmatpush1.bf16.msra.mxu0 %v1494
        %1517 = vmatprep.subr.bf16.mxu0 0
        %1518 = vmatpush1.bf16.msra.mxu0 %v1495
        %1519 = vmatprep.subr.bf16.mxu0 0
        %1520 = vmatpush1.bf16.msra.mxu0 %v1496
        %1521 = vmatprep.subr.bf16.mxu0 0
        %1522 = vmatpush1.bf16.msra.mxu0 0
        %1523 = vmatprep.subr.bf16.mxu0 0
        %1524 = vmatpush1.bf16.msra.mxu0 0
        %1525 = vmatprep.subr.bf16.mxu0 0
        %1526 = vmatpush1.bf16.msra.mxu0 0
        %1527 = vmatprep.subr.bf16.mxu0 0
        %1528 = vmatpush1.bf16.msra.mxu0 0
        %1529 = vmatprep.subr.bf16.mxu0 0
        %1530 = vmatpush1.bf16.msra.mxu0 0
        %1531 = vmatprep.subr.bf16.mxu0 0
        %1532 = vmatpush1.bf16.msra.mxu0 0
        %1533 = vmatprep.subr.bf16.mxu0 0
        %1534 = vmatpush1.bf16.msra.mxu0 0
        %1535 = vmatprep.subr.bf16.mxu0 0
        %1536 = vmatpush1.bf16.msra.mxu0 0
        %1537 = vmatprep.mubr.bf16.mxu0 0
        %1538 = vmatmul.mubr.bf16.gmra.mrb[0].mxu0 %v1436
        %v1539 = vpop.f32.mrb[0].mxu0
        %v1540 = vadd.f32 0.0, %v1539
        %v1541 = vpop.f32.mrb[0].mxu0
        %v1542 = vpop.f32.mrb[0].mxu0
        %v1543 = vadd.f32 0.0, %v1542
        %v1544 = vpop.f32.mrb[0].mxu0
        %1545 = vmatprep.mubr.bf16.mxu0 0
        %1546 = vmatmul.mubr.bf16.gmra.mrb[0].mxu0 %v1437
        %v1547 = vpop.f32.mrb[0].mxu0
        %v1548 = vadd.f32 0.0, %v1547
        %v1549 = vpop.f32.mrb[0].mxu0
        %v1550 = vpop.f32.mrb[0].mxu0
        %v1551 = vadd.f32 0.0, %v1550
        %v1552 = vpop.f32.mrb[0].mxu0
        %1553 = vmatprep.mubr.bf16.mxu0 0
        %1554 = vmatmul.mubr.bf16.gmra.mrb[0].mxu0 %v1438
        %v1555 = vpop.f32.mrb[0].mxu0
        %v1556 = vadd.f32 0.0, %v1555
        %v1557 = vpop.f32.mrb[0].mxu0
        %v1558 = vpop.f32.mrb[0].mxu0
        %v1559 = vadd.f32 0.0, %v1558
        %v1560 = vpop.f32.mrb[0].mxu0
        %1561 = vmatprep.mubr.bf16.mxu0 0
        %1562 = vmatmul.mubr.bf16.gmra.mrb[0].mxu0 %v1439
        %v1563 = vpop.f32.mrb[0].mxu0
        %v1564 = vadd.f32 0.0, %v1563
        %v1565 = vpop.f32.mrb[0].mxu0
        %v1566 = vpop.f32.mrb[0].mxu0
        %v1567 = vadd.f32 0.0, %v1566
        %v1568 = vpop.f32.mrb[0].mxu0
        %1569 = vdwg.mxu0
        %v1570 = vadd.f32 %v1092, %v1540
        %v1571 = vadd.f32 %v1093, %v1543
        %v1572 = vadd.f32 %v1094, %v1548
        %v1573 = vadd.f32 %v1095, %v1551
        %v1574 = vadd.f32 %v1096, %v1556
        %v1575 = vadd.f32 %v1097, %v1559
        %v1576 = vadd.f32 %v1098, %v1564
        %v1577 = vadd.f32 %v1099, %v1567
        %v1578 = vpack.c.bf16 %v1571, %v1570
        %v1579 = vpack.c.bf16 %v1573, %v1572
        %v1580 = vpack.c.bf16 %v1575, %v1574
        %v1581 = vpack.c.bf16 %v1577, %v1576
        %s1582 = scalar_lea.vmem %s3, 16
        %v1583 = vld [vmem:[%s1582] sm:$0xf]
        %v1584 = vld [vmem:[%s1582 + $0x4] sm:$0xf]
        %v1585 = vld [vmem:[%s1582 + $0x8] sm:$0xf]
        %v1586 = vld [vmem:[%s1582 + $0xc] sm:$0xf]
        %s1587 = scalar_lea.vmem %s4, 1
        %v1588 = vld [vmem:[%s1587] sm:$0x1]
        %v1590 = vlaneseq
        %v1591 = vshrl.u32 %v1590, 7
        %v1592 = vsub.s32 0, %v1591
        %v1593 = vrot.slane %v1588, %v1592
        %v1599 = vunpack.c.l.b16 %v1583
        %v1600 = vunpack.c.l.b16 %v1584
        %v1601 = vunpack.c.l.b16 %v1585
        %v1602 = vunpack.c.l.b16 %v1586
        %v1603 = vpack.c.b16 %v1600, %v1599
        %v1604 = vpack.c.b16 %v1602, %v1601
        %v1608 = vsel %vm403, %v1578, 0
        %v1611 = vsel %vm403, %v1579, 0
        %v1614 = vsel %vm403, %v1580, 0
        %v1617 = vsel %vm403, %v1581, 0
        %1619 = vmatprep.subr.bf16.mxu0 0
        %1620 = vmatpush1.bf16.msra.mxu0 %v1603
        %1621 = vmatprep.subr.bf16.mxu0 0
        %1622 = vmatpush1.bf16.msra.mxu0 %v1604
        %1623 = vmatprep.subr.bf16.mxu0 0
        %1624 = vmatpush1.bf16.msra.mxu0 0
        %1625 = vmatprep.subr.bf16.mxu0 0
        %1626 = vmatpush1.bf16.msra.mxu0 0
        %1627 = vmatprep.subr.bf16.mxu0 0
        %1628 = vmatpush1.bf16.msra.mxu0 0
        %1629 = vmatprep.subr.bf16.mxu0 0
        %1630 = vmatpush1.bf16.msra.mxu0 0
        %1631 = vmatprep.subr.bf16.mxu0 0
        %1632 = vmatpush1.bf16.msra.mxu0 0
        %1633 = vmatprep.subr.bf16.mxu0 0
        %1634 = vmatpush1.bf16.msra.mxu0 0
        %1635 = vmatprep.subr.bf16.mxu0 0
        %1636 = vmatpush1.bf16.msra.mxu0 0
        %1637 = vmatprep.subr.bf16.mxu0 0
        %1638 = vmatpush1.bf16.msra.mxu0 0
        %1639 = vmatprep.subr.bf16.mxu0 0
        %1640 = vmatpush1.bf16.msra.mxu0 0
        %1641 = vmatprep.subr.bf16.mxu0 0
        %1642 = vmatpush1.bf16.msra.mxu0 0
        %1643 = vmatprep.subr.bf16.mxu0 0
        %1644 = vmatpush1.bf16.msra.mxu0 0
        %1645 = vmatprep.subr.bf16.mxu0 0
        %1646 = vmatpush1.bf16.msra.mxu0 0
        %1647 = vmatprep.subr.bf16.mxu0 0
        %1648 = vmatpush1.bf16.msra.mxu0 0
        %1649 = vmatprep.subr.bf16.mxu0 0
        %1650 = vmatpush1.bf16.msra.mxu0 0
        %1651 = vmatprep.mubr.bf16.mxu0 0
        %1652 = vmatmul.mubr.bf16.gmra.mrb[0].mxu0 %v1608
        %v1653 = vpop.f32.mrb[0].mxu0
        %v1654 = vadd.f32 %v1593, %v1653
        %v1655 = vpop.f32.mrb[0].mxu0
        %v1656 = vpop.f32.mrb[0].mxu0
        %v1657 = vadd.f32 %v1593, %v1656
        %v1658 = vpop.f32.mrb[0].mxu0
        %1659 = vmatprep.mubr.bf16.mxu0 0
        %1660 = vmatmul.mubr.bf16.gmra.mrb[0].mxu0 %v1611
        %v1661 = vpop.f32.mrb[0].mxu0
        %v1662 = vadd.f32 %v1593, %v1661
        %v1663 = vpop.f32.mrb[0].mxu0
        %v1664 = vpop.f32.mrb[0].mxu0
        %v1665 = vadd.f32 %v1593, %v1664
        %v1666 = vpop.f32.mrb[0].mxu0
        %1667 = vmatprep.mubr.bf16.mxu0 0
        %1668 = vmatmul.mubr.bf16.gmra.mrb[0].mxu0 %v1614
        %v1669 = vpop.f32.mrb[0].mxu0
        %v1670 = vadd.f32 %v1593, %v1669
        %v1671 = vpop.f32.mrb[0].mxu0
        %v1672 = vpop.f32.mrb[0].mxu0
        %v1673 = vadd.f32 %v1593, %v1672
        %v1674 = vpop.f32.mrb[0].mxu0
        %1675 = vmatprep.mubr.bf16.mxu0 0
        %1676 = vmatmul.mubr.bf16.gmra.mrb[0].mxu0 %v1617
        %v1677 = vpop.f32.mrb[0].mxu0
        %v1678 = vadd.f32 %v1593, %v1677
        %v1679 = vpop.f32.mrb[0].mxu0
        %v1680 = vpop.f32.mrb[0].mxu0
        %v1681 = vadd.f32 %v1593, %v1680
        %v1682 = vpop.f32.mrb[0].mxu0
        %1683 = vdwg.mxu0
        %v1684 = vsel %vm403, %v1654, 0.0
        %1685 = vadd.xlane.f32.xlu0 %v1684
        %v1686 = vpop.xlane.xlu0 %1685
        %v1687 = vsel %vm403, %v1657, 0.0
        %1688 = vadd.xlane.f32.xlu0 %v1687
        %v1689 = vpop.xlane.xlu0 %1688
        %v1690 = vsel %vm403, %v1662, 0.0
        %1691 = vadd.xlane.f32.xlu0 %v1690
        %v1692 = vpop.xlane.xlu0 %1691
        %v1693 = vsel %vm403, %v1665, 0.0
        %1694 = vadd.xlane.f32.xlu0 %v1693
        %v1695 = vpop.xlane.xlu0 %1694
        %v1696 = vsel %vm403, %v1670, 0.0
        %1697 = vadd.xlane.f32.xlu0 %v1696
        %v1698 = vpop.xlane.xlu0 %1697
        %v1699 = vsel %vm403, %v1673, 0.0
        %1700 = vadd.xlane.f32.xlu0 %v1699
        %v1701 = vpop.xlane.xlu0 %1700
        %v1702 = vsel %vm403, %v1678, 0.0
        %1703 = vadd.xlane.f32.xlu0 %v1702
        %v1704 = vpop.xlane.xlu0 %1703
        %v1705 = vsel %vm403, %v1681, 0.0
        %1706 = vadd.xlane.f32.xlu0 %v1705
        %v1707 = vpop.xlane.xlu0 %1706
        %v1708 = vmul.f32 %v1686, 0.03125
        %v1709 = vmul.f32 %v1689, 0.03125
        %v1710 = vmul.f32 %v1692, 0.03125
        %v1711 = vmul.f32 %v1695, 0.03125
        %v1712 = vmul.f32 %v1698, 0.03125
        %v1713 = vmul.f32 %v1701, 0.03125
        %v1714 = vmul.f32 %v1704, 0.03125
        %v1715 = vmul.f32 %v1707, 0.03125
        %v1716 = vsub.f32 %v1654, %v1708
        %v1717 = vsub.f32 %v1657, %v1709
        %v1718 = vsub.f32 %v1662, %v1710
        %v1719 = vsub.f32 %v1665, %v1711
        %v1720 = vsub.f32 %v1670, %v1712
        %v1721 = vsub.f32 %v1673, %v1713
        %v1722 = vsub.f32 %v1678, %v1714
        %v1723 = vsub.f32 %v1681, %v1715
        %v1724 = vmul.f32 %v1716, %v1716
        %v1725 = vmul.f32 %v1717, %v1717
        %v1726 = vmul.f32 %v1718, %v1718
        %v1727 = vmul.f32 %v1719, %v1719
        %v1728 = vmul.f32 %v1720, %v1720
        %v1729 = vmul.f32 %v1721, %v1721
        %v1730 = vmul.f32 %v1722, %v1722
        %v1731 = vmul.f32 %v1723, %v1723
        %v1732 = vsel %vm403, %v1724, 0.0
        %1733 = vadd.xlane.f32.xlu0 %v1732
        %v1734 = vpop.xlane.xlu0 %1733
        %v1735 = vsel %vm403, %v1725, 0.0
        %1736 = vadd.xlane.f32.xlu0 %v1735
        %v1737 = vpop.xlane.xlu0 %1736
        %v1738 = vsel %vm403, %v1726, 0.0
        %1739 = vadd.xlane.f32.xlu0 %v1738
        %v1740 = vpop.xlane.xlu0 %1739
        %v1741 = vsel %vm403, %v1727, 0.0
        %1742 = vadd.xlane.f32.xlu0 %v1741
        %v1743 = vpop.xlane.xlu0 %1742
        %v1744 = vsel %vm403, %v1728, 0.0
        %1745 = vadd.xlane.f32.xlu0 %v1744
        %v1746 = vpop.xlane.xlu0 %1745
        %v1747 = vsel %vm403, %v1729, 0.0
        %1748 = vadd.xlane.f32.xlu0 %v1747
        %v1749 = vpop.xlane.xlu0 %1748
        %v1750 = vsel %vm403, %v1730, 0.0
        %1751 = vadd.xlane.f32.xlu0 %v1750
        %v1752 = vpop.xlane.xlu0 %1751
        %v1753 = vsel %vm403, %v1731, 0.0
        %1754 = vadd.xlane.f32.xlu0 %v1753
        %v1755 = vpop.xlane.xlu0 %1754
        %v1756 = vmul.f32 %v1734, 0.03125
        %v1757 = vmul.f32 %v1737, 0.03125
        %v1758 = vmul.f32 %v1740, 0.03125
        %v1759 = vmul.f32 %v1743, 0.03125
        %v1760 = vmul.f32 %v1746, 0.03125
        %v1761 = vmul.f32 %v1749, 0.03125
        %v1762 = vmul.f32 %v1752, 0.03125
        %v1763 = vmul.f32 %v1755, 0.03125
        %v1764 = vadd.f32 %v1756, 1e-05
        %v1765 = vadd.f32 %v1757, 1e-05
        %v1766 = vadd.f32 %v1758, 1e-05
        %v1767 = vadd.f32 %v1759, 1e-05
        %v1768 = vadd.f32 %v1760, 1e-05
        %v1769 = vadd.f32 %v1761, 1e-05
        %v1770 = vadd.f32 %v1762, 1e-05
        %v1771 = vadd.f32 %v1763, 1e-05
        %v1772 = vrsqrt.pop %v1764
        %v1773 = vrsqrt.pop %v1765
        %v1774 = vrsqrt.pop %v1766
        %v1775 = vrsqrt.pop %v1767
        %v1776 = vrsqrt.pop %v1768
        %v1777 = vrsqrt.pop %v1769
        %v1778 = vrsqrt.pop %v1770
        %v1779 = vrsqrt.pop %v1771
        %v1780 = vmul.f32 %v1716, %v1772
        %v1781 = vmul.f32 %v1717, %v1773
        %v1782 = vmul.f32 %v1718, %v1774
        %v1783 = vmul.f32 %v1719, %v1775
        %v1784 = vmul.f32 %v1720, %v1776
        %v1785 = vmul.f32 %v1721, %v1777
        %v1786 = vmul.f32 %v1722, %v1778
        %v1787 = vmul.f32 %v1723, %v1779
        %s1788 = scalar_lea.vmem %s5, 1
        %v1789 = vld [vmem:[%s1788] sm:$0x1]
        %v1791 = vlaneseq
        %v1792 = vshrl.u32 %v1791, 7
        %v1793 = vsub.s32 0, %v1792
        %v1794 = vrot.slane %v1789, %v1793
        %v1796 = vmul.f32 %v1780, %v1794
        %v1797 = vmul.f32 %v1781, %v1794
        %v1798 = vmul.f32 %v1782, %v1794
        %v1799 = vmul.f32 %v1783, %v1794
        %v1800 = vmul.f32 %v1784, %v1794
        %v1801 = vmul.f32 %v1785, %v1794
        %v1802 = vmul.f32 %v1786, %v1794
        %v1803 = vmul.f32 %v1787, %v1794
        %s1804 = scalar_lea.vmem %s6, 1
        %v1805 = vld [vmem:[%s1804] sm:$0x1]
        %v1807 = vlaneseq
        %v1808 = vshrl.u32 %v1807, 7
        %v1809 = vsub.s32 0, %v1808
        %v1810 = vrot.slane %v1805, %v1809
        %v1812 = vadd.f32 %v1796, %v1810
        %v1813 = vadd.f32 %v1797, %v1810
        %v1814 = vadd.f32 %v1798, %v1810
        %v1815 = vadd.f32 %v1799, %v1810
        %v1816 = vadd.f32 %v1800, %v1810
        %v1817 = vadd.f32 %v1801, %v1810
        %v1818 = vadd.f32 %v1802, %v1810
        %v1819 = vadd.f32 %v1803, %v1810
        %v1820 = vpack.c.bf16 %v1813, %v1812
        %v1821 = vpack.c.bf16 %v1815, %v1814
        %v1822 = vpack.c.bf16 %v1817, %v1816
        %v1823 = vpack.c.bf16 %v1819, %v1818
        %s1824 = scalar_lea.vmem %s1, 32
        %v1825 = vld [vmem:[%s1824] sm:$0xf]
        %v1826 = vld [vmem:[%s1824 + $0x4] sm:$0xf]
        %v1827 = vld [vmem:[%s1824 + $0x8] sm:$0xf]
        %v1828 = vld [vmem:[%s1824 + $0xc] sm:$0xf]
        %v1833 = vunpack.c.l.b16 %v1825
        %v1834 = vunpack.c.l.b16 %v1826
        %v1835 = vunpack.c.l.b16 %v1827
        %v1836 = vunpack.c.l.b16 %v1828
        %v1837 = vpack.c.b16 %v1834, %v1833
        %v1838 = vpack.c.b16 %v1836, %v1835
        %v1842 = vsel %vm403, %v1820, 0
        %v1845 = vsel %vm403, %v1821, 0
        %v1848 = vsel %vm403, %v1822, 0
        %v1851 = vsel %vm403, %v1823, 0
        %1853 = vmatprep.subr.bf16.mxu0 0
        %1854 = vmatpush1.bf16.msra.mxu0 %v1837
        %1855 = vmatprep.subr.bf16.mxu0 0
        %1856 = vmatpush1.bf16.msra.mxu0 %v1838
        %1857 = vmatprep.subr.bf16.mxu0 0
        %1858 = vmatpush1.bf16.msra.mxu0 0
        %1859 = vmatprep.subr.bf16.mxu0 0
        %1860 = vmatpush1.bf16.msra.mxu0 0
        %1861 = vmatprep.subr.bf16.mxu0 0
        %1862 = vmatpush1.bf16.msra.mxu0 0
        %1863 = vmatprep.subr.bf16.mxu0 0
        %1864 = vmatpush1.bf16.msra.mxu0 0
        %1865 = vmatprep.subr.bf16.mxu0 0
        %1866 = vmatpush1.bf16.msra.mxu0 0
        %1867 = vmatprep.subr.bf16.mxu0 0
        %1868 = vmatpush1.bf16.msra.mxu0 0
        %1869 = vmatprep.subr.bf16.mxu0 0
        %1870 = vmatpush1.bf16.msra.mxu0 0
        %1871 = vmatprep.subr.bf16.mxu0 0
        %1872 = vmatpush1.bf16.msra.mxu0 0
        %1873 = vmatprep.subr.bf16.mxu0 0
        %1874 = vmatpush1.bf16.msra.mxu0 0
        %1875 = vmatprep.subr.bf16.mxu0 0
        %1876 = vmatpush1.bf16.msra.mxu0 0
        %1877 = vmatprep.subr.bf16.mxu0 0
        %1878 = vmatpush1.bf16.msra.mxu0 0
        %1879 = vmatprep.subr.bf16.mxu0 0
        %1880 = vmatpush1.bf16.msra.mxu0 0
        %1881 = vmatprep.subr.bf16.mxu0 0
        %1882 = vmatpush1.bf16.msra.mxu0 0
        %1883 = vmatprep.subr.bf16.mxu0 0
        %1884 = vmatpush1.bf16.msra.mxu0 0
        %1885 = vmatprep.mubr.bf16.mxu0 0
        %1886 = vmatmul.mubr.bf16.gmra.mrb[0].mxu0 %v1842
        %v1887 = vpop.f32.mrb[0].mxu0
        %v1888 = vadd.f32 0.0, %v1887
        %v1889 = vpop.f32.mrb[0].mxu0
        %v1890 = vpop.f32.mrb[0].mxu0
        %v1891 = vadd.f32 0.0, %v1890
        %v1892 = vpop.f32.mrb[0].mxu0
        %1893 = vmatprep.mubr.bf16.mxu0 0
        %1894 = vmatmul.mubr.bf16.gmra.mrb[0].mxu0 %v1845
        %v1895 = vpop.f32.mrb[0].mxu0
        %v1896 = vadd.f32 0.0, %v1895
        %v1897 = vpop.f32.mrb[0].mxu0
        %v1898 = vpop.f32.mrb[0].mxu0
        %v1899 = vadd.f32 0.0, %v1898
        %v1900 = vpop.f32.mrb[0].mxu0
        %1901 = vmatprep.mubr.bf16.mxu0 0
        %1902 = vmatmul.mubr.bf16.gmra.mrb[0].mxu0 %v1848
        %v1903 = vpop.f32.mrb[0].mxu0
        %v1904 = vadd.f32 0.0, %v1903
        %v1905 = vpop.f32.mrb[0].mxu0
        %v1906 = vpop.f32.mrb[0].mxu0
        %v1907 = vadd.f32 0.0, %v1906
        %v1908 = vpop.f32.mrb[0].mxu0
        %1909 = vmatprep.mubr.bf16.mxu0 0
        %1910 = vmatmul.mubr.bf16.gmra.mrb[0].mxu0 %v1851
        %v1911 = vpop.f32.mrb[0].mxu0
        %v1912 = vadd.f32 0.0, %v1911
        %v1913 = vpop.f32.mrb[0].mxu0
        %v1914 = vpop.f32.mrb[0].mxu0
        %v1915 = vadd.f32 0.0, %v1914
        %v1916 = vpop.f32.mrb[0].mxu0
        %1917 = vdwg.mxu0
        %v1918 = vmax.f32 %v1888, %v1904
        %v1919 = vmax.f32 %v1891, %v1907
        %v1920 = vmax.f32 %v1896, %v1912
        %v1921 = vmax.f32 %v1899, %v1915
        %v1922 = vmax.f32 %v1918, %v1919
        %v1923 = vmax.f32 %v1920, %v1921
        %v1924 = vmax.f32 %v1922, %v1923
        %v1925 = vrot.slane %v1888, 4
        %v1926 = vmax.f32 %v1888, %v1925
        %v1927 = vrot.slane %v1926, 2
        %v1928 = vmax.f32 %v1926, %v1927
        %v1929 = vrot.slane %v1928, 1
        %v1930 = vmax.f32 %v1928, %v1929
        %v1931 = vrot.slane %v1891, 4
        %v1932 = vmax.f32 %v1891, %v1931
        %v1933 = vrot.slane %v1932, 2
        %v1934 = vmax.f32 %v1932, %v1933
        %v1935 = vrot.slane %v1934, 1
        %v1936 = vmax.f32 %v1934, %v1935
        %v1937 = vrot.slane %v1896, 4
        %v1938 = vmax.f32 %v1896, %v1937
        %v1939 = vrot.slane %v1938, 2
        %v1940 = vmax.f32 %v1938, %v1939
        %v1941 = vrot.slane %v1940, 1
        %v1942 = vmax.f32 %v1940, %v1941
        %v1943 = vrot.slane %v1899, 4
        %v1944 = vmax.f32 %v1899, %v1943
        %v1945 = vrot.slane %v1944, 2
        %v1946 = vmax.f32 %v1944, %v1945
        %v1947 = vrot.slane %v1946, 1
        %v1948 = vmax.f32 %v1946, %v1947
        %v1949 = vrot.slane %v1904, 4
        %v1950 = vmax.f32 %v1904, %v1949
        %v1951 = vrot.slane %v1950, 2
        %v1952 = vmax.f32 %v1950, %v1951
        %v1953 = vrot.slane %v1952, 1
        %v1954 = vmax.f32 %v1952, %v1953
        %v1955 = vrot.slane %v1907, 4
        %v1956 = vmax.f32 %v1907, %v1955
        %v1957 = vrot.slane %v1956, 2
        %v1958 = vmax.f32 %v1956, %v1957
        %v1959 = vrot.slane %v1958, 1
        %v1960 = vmax.f32 %v1958, %v1959
        %v1961 = vrot.slane %v1912, 4
        %v1962 = vmax.f32 %v1912, %v1961
        %v1963 = vrot.slane %v1962, 2
        %v1964 = vmax.f32 %v1962, %v1963
        %v1965 = vrot.slane %v1964, 1
        %v1966 = vmax.f32 %v1964, %v1965
        %v1967 = vrot.slane %v1915, 4
        %v1968 = vmax.f32 %v1915, %v1967
        %v1969 = vrot.slane %v1968, 2
        %v1970 = vmax.f32 %v1968, %v1969
        %v1971 = vrot.slane %v1970, 1
        %v1972 = vmax.f32 %v1970, %v1971
        %v1973 = vsel %vm537, %v1924, %v1930
        %v1974 = vsel %vm537, %v1924, %v1936
        %v1975 = vsel %vm537, %v1924, %v1942
        %v1976 = vsel %vm537, %v1924, %v1948
        %v1977 = vsel %vm537, %v1924, %v1954
        %v1978 = vsel %vm537, %v1924, %v1960
        %v1979 = vsel %vm537, %v1924, %v1966
        %v1980 = vsel %vm537, %v1924, %v1972
        %v1981 = vsub.f32 %v1888, %v1973
        %v1982 = vsub.f32 %v1891, %v1974
        %v1983 = vsub.f32 %v1896, %v1975
        %v1984 = vsub.f32 %v1899, %v1976
        %v1985 = vsub.f32 %v1904, %v1977
        %v1986 = vsub.f32 %v1907, %v1978
        %v1987 = vsub.f32 %v1912, %v1979
        %v1988 = vsub.f32 %v1915, %v1980
        %v1989 = vmul.f32 %v1981, 1.442695
        %v1990 = vpow.pop %v1989
        %v1991 = vmul.f32 %v1982, 1.442695
        %v1992 = vpow.pop %v1991
        %v1993 = vmul.f32 %v1983, 1.442695
        %v1994 = vpow.pop %v1993
        %v1995 = vmul.f32 %v1984, 1.442695
        %v1996 = vpow.pop %v1995
        %v1997 = vmul.f32 %v1985, 1.442695
        %v1998 = vpow.pop %v1997
        %v1999 = vmul.f32 %v1986, 1.442695
        %v2000 = vpow.pop %v1999
        %v2001 = vmul.f32 %v1987, 1.442695
        %v2002 = vpow.pop %v2001
        %v2003 = vmul.f32 %v1988, 1.442695
        %v2004 = vpow.pop %v2003
        %v2005 = vadd.f32 %v1990, %v1992
        %v2006 = vadd.f32 %v2005, %v1994
        %v2007 = vadd.f32 %v2006, %v1996
        %v2008 = vadd.f32 %v2007, %v1998
        %v2009 = vadd.f32 %v2008, %v2000
        %v2010 = vadd.f32 %v2009, %v2002
        %v2011 = vadd.f32 %v2010, %v2004
        %v2012 = vrot.slane %v1990, 4
        %v2013 = vadd.f32 %v1990, %v2012
        %v2014 = vrot.slane %v2013, 2
        %v2015 = vadd.f32 %v2013, %v2014
        %v2016 = vrot.slane %v2015, 1
        %v2017 = vadd.f32 %v2015, %v2016
        %v2018 = vrot.slane %v1992, 4
        %v2019 = vadd.f32 %v1992, %v2018
        %v2020 = vrot.slane %v2019, 2
        %v2021 = vadd.f32 %v2019, %v2020
        %v2022 = vrot.slane %v2021, 1
        %v2023 = vadd.f32 %v2021, %v2022
        %v2024 = vrot.slane %v1994, 4
        %v2025 = vadd.f32 %v1994, %v2024
        %v2026 = vrot.slane %v2025, 2
        %v2027 = vadd.f32 %v2025, %v2026
        %v2028 = vrot.slane %v2027, 1
        %v2029 = vadd.f32 %v2027, %v2028
        %v2030 = vrot.slane %v1996, 4
        %v2031 = vadd.f32 %v1996, %v2030
        %v2032 = vrot.slane %v2031, 2
        %v2033 = vadd.f32 %v2031, %v2032
        %v2034 = vrot.slane %v2033, 1
        %v2035 = vadd.f32 %v2033, %v2034
        %v2036 = vrot.slane %v1998, 4
        %v2037 = vadd.f32 %v1998, %v2036
        %v2038 = vrot.slane %v2037, 2
        %v2039 = vadd.f32 %v2037, %v2038
        %v2040 = vrot.slane %v2039, 1
        %v2041 = vadd.f32 %v2039, %v2040
        %v2042 = vrot.slane %v2000, 4
        %v2043 = vadd.f32 %v2000, %v2042
        %v2044 = vrot.slane %v2043, 2
        %v2045 = vadd.f32 %v2043, %v2044
        %v2046 = vrot.slane %v2045, 1
        %v2047 = vadd.f32 %v2045, %v2046
        %v2048 = vrot.slane %v2002, 4
        %v2049 = vadd.f32 %v2002, %v2048
        %v2050 = vrot.slane %v2049, 2
        %v2051 = vadd.f32 %v2049, %v2050
        %v2052 = vrot.slane %v2051, 1
        %v2053 = vadd.f32 %v2051, %v2052
        %v2054 = vrot.slane %v2004, 4
        %v2055 = vadd.f32 %v2004, %v2054
        %v2056 = vrot.slane %v2055, 2
        %v2057 = vadd.f32 %v2055, %v2056
        %v2058 = vrot.slane %v2057, 1
        %v2059 = vadd.f32 %v2057, %v2058
        %v2060 = vsel %vm537, %v2011, %v2017
        %v2061 = vsel %vm537, %v2011, %v2023
        %v2062 = vsel %vm537, %v2011, %v2029
        %v2063 = vsel %vm537, %v2011, %v2035
        %v2064 = vsel %vm537, %v2011, %v2041
        %v2065 = vsel %vm537, %v2011, %v2047
        %v2066 = vsel %vm537, %v2011, %v2053
        %v2067 = vsel %vm537, %v2011, %v2059
        %v2068 = vrcp.pop %v2060
        %v2069 = vrcp.pop %v2061
        %v2070 = vrcp.pop %v2062
        %v2071 = vrcp.pop %v2063
        %v2072 = vrcp.pop %v2064
        %v2073 = vrcp.pop %v2065
        %v2074 = vrcp.pop %v2066
        %v2075 = vrcp.pop %v2067
        %v2076 = vmul.f32 %v1990, %v2068
        %v2077 = vmul.f32 %v1992, %v2069
        %v2078 = vmul.f32 %v1994, %v2070
        %v2079 = vmul.f32 %v1996, %v2071
        %v2080 = vmul.f32 %v1998, %v2072
        %v2081 = vmul.f32 %v2000, %v2073
        %v2082 = vmul.f32 %v2002, %v2074
        %v2083 = vmul.f32 %v2004, %v2075
        %v2084 = vsel %vm537, %v2076, 0.0
        %v2085 = vsel %vm537, %v2077, 0.0
        %v2086 = vsel %vm537, %v2078, 0.0
        %v2087 = vsel %vm537, %v2079, 0.0
        %v2088 = vsel %vm537, %v2080, 0.0
        %v2089 = vsel %vm537, %v2081, 0.0
        %v2090 = vsel %vm537, %v2082, 0.0
        %v2091 = vsel %vm537, %v2083, 0.0
        %2092 = vadd.xlane.f32.xlu0 %v2084
        %v2093 = vpop.xlane.xlu0 %2092
        %2094 = vadd.xlane.f32.xlu0 %v2085
        %v2095 = vpop.xlane.xlu0 %2094
        %2096 = vadd.xlane.f32.xlu0 %v2086
        %v2097 = vpop.xlane.xlu0 %2096
        %2098 = vadd.xlane.f32.xlu0 %v2087
        %v2099 = vpop.xlane.xlu0 %2098
        %2100 = vadd.xlane.f32.xlu0 %v2088
        %v2101 = vpop.xlane.xlu0 %2100
        %2102 = vadd.xlane.f32.xlu0 %v2089
        %v2103 = vpop.xlane.xlu0 %2102
        %2104 = vadd.xlane.f32.xlu0 %v2090
        %v2105 = vpop.xlane.xlu0 %2104
        %2106 = vadd.xlane.f32.xlu0 %v2091
        %v2107 = vpop.xlane.xlu0 %2106
        %2108 = vadd.xlane.f32.xlu0 %v2076
        %v2109 = vpop.xlane.xlu0 %2108
        %2110 = vadd.xlane.f32.xlu0 %v2077
        %v2111 = vpop.xlane.xlu0 %2110
        %2112 = vadd.xlane.f32.xlu0 %v2078
        %v2113 = vpop.xlane.xlu0 %2112
        %2114 = vadd.xlane.f32.xlu0 %v2079
        %v2115 = vpop.xlane.xlu0 %2114
        %2116 = vadd.xlane.f32.xlu0 %v2080
        %v2117 = vpop.xlane.xlu0 %2116
        %2118 = vadd.xlane.f32.xlu0 %v2081
        %v2119 = vpop.xlane.xlu0 %2118
        %2120 = vadd.xlane.f32.xlu0 %v2082
        %v2121 = vpop.xlane.xlu0 %2120
        %2122 = vadd.xlane.f32.xlu0 %v2083
        %v2123 = vpop.xlane.xlu0 %2122
        %v2124 = vsub.f32 %v2109, %v2093
        %v2125 = vsub.f32 %v2111, %v2095
        %v2126 = vsub.f32 %v2113, %v2097
        %v2127 = vsub.f32 %v2115, %v2099
        %v2128 = vsub.f32 %v2117, %v2101
        %v2129 = vsub.f32 %v2119, %v2103
        %v2130 = vsub.f32 %v2121, %v2105
        %v2131 = vsub.f32 %v2123, %v2107
        %v2132 = vsel %vm537, %v2093, %v2124
        %v2133 = vsel %vm537, %v2095, %v2125
        %v2134 = vsel %vm537, %v2097, %v2126
        %v2135 = vsel %vm537, %v2099, %v2127
        %v2136 = vsel %vm537, %v2101, %v2128
        %v2137 = vsel %vm537, %v2103, %v2129
        %v2138 = vsel %vm537, %v2105, %v2130
        %v2139 = vsel %vm537, %v2107, %v2131
        %v2140 = vrcp.pop %v2132
        %v2141 = vmul.f32 %v2076, %v2140
        %v2142 = vrcp.pop %v2133
        %v2143 = vmul.f32 %v2077, %v2142
        %v2144 = vrcp.pop %v2134
        %v2145 = vmul.f32 %v2078, %v2144
        %v2146 = vrcp.pop %v2135
        %v2147 = vmul.f32 %v2079, %v2146
        %v2148 = vrcp.pop %v2136
        %v2149 = vmul.f32 %v2080, %v2148
        %v2150 = vrcp.pop %v2137
        %v2151 = vmul.f32 %v2081, %v2150
        %v2152 = vrcp.pop %v2138
        %v2153 = vmul.f32 %v2082, %v2152
        %v2154 = vrcp.pop %v2139
        %v2155 = vmul.f32 %v2083, %v2154
        %v2156 = vpack.c.bf16 %v2143, %v2141
        %v2157 = vpack.c.bf16 %v2147, %v2145
        %v2158 = vpack.c.bf16 %v2151, %v2149
        %v2159 = vpack.c.bf16 %v2155, %v2153
        %s2160 = scalar_lea.vmem %s2, 128
        %v2161 = vld [vmem:[%s2160] sm:$0xf]
        %v2162 = vld [vmem:[%s2160 + $0x4] sm:$0xf]
        %v2163 = vld [vmem:[%s2160 + $0x8] sm:$0xf]
        %v2164 = vld [vmem:[%s2160 + $0xc] sm:$0xf]
        %v2165 = vld [vmem:[%s2160 + $0x10] sm:$0xf]
        %v2166 = vld [vmem:[%s2160 + $0x14] sm:$0xf]
        %v2167 = vld [vmem:[%s2160 + $0x18] sm:$0xf]
        %v2168 = vld [vmem:[%s2160 + $0x1c] sm:$0xf]
        %v2169 = vld [vmem:[%s2160 + $0x20] sm:$0xf]
        %v2170 = vld [vmem:[%s2160 + $0x24] sm:$0xf]
        %v2171 = vld [vmem:[%s2160 + $0x28] sm:$0xf]
        %v2172 = vld [vmem:[%s2160 + $0x2c] sm:$0xf]
        %v2173 = vld [vmem:[%s2160 + $0x30] sm:$0xf]
        %v2174 = vld [vmem:[%s2160 + $0x34] sm:$0xf]
        %v2175 = vld [vmem:[%s2160 + $0x38] sm:$0xf]
        %v2176 = vld [vmem:[%s2160 + $0x3c] sm:$0xf]
        %v2193 = vunpack.c.l.b16 %v2161
        %v2194 = vunpack.c.l.b16 %v2162
        %v2195 = vunpack.c.l.b16 %v2163
        %v2196 = vunpack.c.l.b16 %v2164
        %v2197 = vunpack.c.l.b16 %v2165
        %v2198 = vunpack.c.l.b16 %v2166
        %v2199 = vunpack.c.l.b16 %v2167
        %v2200 = vunpack.c.l.b16 %v2168
        %v2201 = vunpack.c.l.b16 %v2169
        %v2202 = vunpack.c.l.b16 %v2170
        %v2203 = vunpack.c.l.b16 %v2171
        %v2204 = vunpack.c.l.b16 %v2172
        %v2205 = vunpack.c.l.b16 %v2173
        %v2206 = vunpack.c.l.b16 %v2174
        %v2207 = vunpack.c.l.b16 %v2175
        %v2208 = vunpack.c.l.b16 %v2176
        %v2209 = vpack.c.b16 %v2194, %v2193
        %v2210 = vpack.c.b16 %v2196, %v2195
        %v2211 = vpack.c.b16 %v2198, %v2197
        %v2212 = vpack.c.b16 %v2200, %v2199
        %v2213 = vpack.c.b16 %v2202, %v2201
        %v2214 = vpack.c.b16 %v2204, %v2203
        %v2215 = vpack.c.b16 %v2206, %v2205
        %v2216 = vpack.c.b16 %v2208, %v2207
        %2225 = vmatprep.subr.bf16.mxu0 0
        %2226 = vmatpush1.bf16.msra.mxu0 %v2209
        %2227 = vmatprep.subr.bf16.mxu0 0
        %2228 = vmatpush1.bf16.msra.mxu0 %v2210
        %2229 = vmatprep.subr.bf16.mxu0 0
        %2230 = vmatpush1.bf16.msra.mxu0 %v2211
        %2231 = vmatprep.subr.bf16.mxu0 0
        %2232 = vmatpush1.bf16.msra.mxu0 %v2212
        %2233 = vmatprep.subr.bf16.mxu0 0
        %2234 = vmatpush1.bf16.msra.mxu0 %v2213
        %2235 = vmatprep.subr.bf16.mxu0 0
        %2236 = vmatpush1.bf16.msra.mxu0 %v2214
        %2237 = vmatprep.subr.bf16.mxu0 0
        %2238 = vmatpush1.bf16.msra.mxu0 %v2215
        %2239 = vmatprep.subr.bf16.mxu0 0
        %2240 = vmatpush1.bf16.msra.mxu0 %v2216
        %2241 = vmatprep.subr.bf16.mxu0 0
        %2242 = vmatpush1.bf16.msra.mxu0 0
        %2243 = vmatprep.subr.bf16.mxu0 0
        %2244 = vmatpush1.bf16.msra.mxu0 0
        %2245 = vmatprep.subr.bf16.mxu0 0
        %2246 = vmatpush1.bf16.msra.mxu0 0
        %2247 = vmatprep.subr.bf16.mxu0 0
        %2248 = vmatpush1.bf16.msra.mxu0 0
        %2249 = vmatprep.subr.bf16.mxu0 0
        %2250 = vmatpush1.bf16.msra.mxu0 0
        %2251 = vmatprep.subr.bf16.mxu0 0
        %2252 = vmatpush1.bf16.msra.mxu0 0
        %2253 = vmatprep.subr.bf16.mxu0 0
        %2254 = vmatpush1.bf16.msra.mxu0 0
        %2255 = vmatprep.subr.bf16.mxu0 0
        %2256 = vmatpush1.bf16.msra.mxu0 0
        %2257 = vmatprep.mubr.bf16.mxu0 0
        %2258 = vmatmul.mubr.bf16.gmra.mrb[0].mxu0 %v2156
        %v2259 = vpop.f32.mrb[0].mxu0
        %v2260 = vadd.f32 0.0, %v2259
        %v2261 = vpop.f32.mrb[0].mxu0
        %v2262 = vpop.f32.mrb[0].mxu0
        %v2263 = vadd.f32 0.0, %v2262
        %v2264 = vpop.f32.mrb[0].mxu0
        %2265 = vmatprep.mubr.bf16.mxu0 0
        %2266 = vmatmul.mubr.bf16.gmra.mrb[0].mxu0 %v2157
        %v2267 = vpop.f32.mrb[0].mxu0
        %v2268 = vadd.f32 0.0, %v2267
        %v2269 = vpop.f32.mrb[0].mxu0
        %v2270 = vpop.f32.mrb[0].mxu0
        %v2271 = vadd.f32 0.0, %v2270
        %v2272 = vpop.f32.mrb[0].mxu0
        %2273 = vmatprep.mubr.bf16.mxu0 0
        %2274 = vmatmul.mubr.bf16.gmra.mrb[0].mxu0 %v2158
        %v2275 = vpop.f32.mrb[0].mxu0
        %v2276 = vadd.f32 0.0, %v2275
        %v2277 = vpop.f32.mrb[0].mxu0
        %v2278 = vpop.f32.mrb[0].mxu0
        %v2279 = vadd.f32 0.0, %v2278
        %v2280 = vpop.f32.mrb[0].mxu0
        %2281 = vmatprep.mubr.bf16.mxu0 0
        %2282 = vmatmul.mubr.bf16.gmra.mrb[0].mxu0 %v2159
        %v2283 = vpop.f32.mrb[0].mxu0
        %v2284 = vadd.f32 0.0, %v2283
        %v2285 = vpop.f32.mrb[0].mxu0
        %v2286 = vpop.f32.mrb[0].mxu0
        %v2287 = vadd.f32 0.0, %v2286
        %v2288 = vpop.f32.mrb[0].mxu0
        %2289 = vdwg.mxu0
        %v2290 = vadd.f32 %v1812, %v2260
        %v2291 = vadd.f32 %v1813, %v2263
        %v2292 = vadd.f32 %v1814, %v2268
        %v2293 = vadd.f32 %v1815, %v2271
        %v2294 = vadd.f32 %v1816, %v2276
        %v2295 = vadd.f32 %v1817, %v2279
        %v2296 = vadd.f32 %v1818, %v2284
        %v2297 = vadd.f32 %v1819, %v2287
        %v2298 = vpack.c.bf16 %v2291, %v2290
        %v2299 = vpack.c.bf16 %v2293, %v2292
        %v2300 = vpack.c.bf16 %v2295, %v2294
        %v2301 = vpack.c.bf16 %v2297, %v2296
        %s2302 = scalar_lea.vmem %s3, 32
        %v2303 = vld [vmem:[%s2302] sm:$0xf]
        %v2304 = vld [vmem:[%s2302 + $0x4] sm:$0xf]
        %v2305 = vld [vmem:[%s2302 + $0x8] sm:$0xf]
        %v2306 = vld [vmem:[%s2302 + $0xc] sm:$0xf]
        %s2307 = scalar_lea.vmem %s4, 2
        %v2308 = vld [vmem:[%s2307] sm:$0x1]
        %v2310 = vlaneseq
        %v2311 = vshrl.u32 %v2310, 7
        %v2312 = vsub.s32 0, %v2311
        %v2313 = vrot.slane %v2308, %v2312
        %v2319 = vunpack.c.l.b16 %v2303
        %v2320 = vunpack.c.l.b16 %v2304
        %v2321 = vunpack.c.l.b16 %v2305
        %v2322 = vunpack.c.l.b16 %v2306
        %v2323 = vpack.c.b16 %v2320, %v2319
        %v2324 = vpack.c.b16 %v2322, %v2321
        %v2328 = vsel %vm403, %v2298, 0
        %v2331 = vsel %vm403, %v2299, 0
        %v2334 = vsel %vm403, %v2300, 0
        %v2337 = vsel %vm403, %v2301, 0
        %2339 = vmatprep.subr.bf16.mxu0 0
        %2340 = vmatpush1.bf16.msra.mxu0 %v2323
        %2341 = vmatprep.subr.bf16.mxu0 0
        %2342 = vmatpush1.bf16.msra.mxu0 %v2324
        %2343 = vmatprep.subr.bf16.mxu0 0
        %2344 = vmatpush1.bf16.msra.mxu0 0
        %2345 = vmatprep.subr.bf16.mxu0 0
        %2346 = vmatpush1.bf16.msra.mxu0 0
        %2347 = vmatprep.subr.bf16.mxu0 0
        %2348 = vmatpush1.bf16.msra.mxu0 0
        %2349 = vmatprep.subr.bf16.mxu0 0
        %2350 = vmatpush1.bf16.msra.mxu0 0
        %2351 = vmatprep.subr.bf16.mxu0 0
        %2352 = vmatpush1.bf16.msra.mxu0 0
        %2353 = vmatprep.subr.bf16.mxu0 0
        %2354 = vmatpush1.bf16.msra.mxu0 0
        %2355 = vmatprep.subr.bf16.mxu0 0
        %2356 = vmatpush1.bf16.msra.mxu0 0
        %2357 = vmatprep.subr.bf16.mxu0 0
        %2358 = vmatpush1.bf16.msra.mxu0 0
        %2359 = vmatprep.subr.bf16.mxu0 0
        %2360 = vmatpush1.bf16.msra.mxu0 0
        %2361 = vmatprep.subr.bf16.mxu0 0
        %2362 = vmatpush1.bf16.msra.mxu0 0
        %2363 = vmatprep.subr.bf16.mxu0 0
        %2364 = vmatpush1.bf16.msra.mxu0 0
        %2365 = vmatprep.subr.bf16.mxu0 0
        %2366 = vmatpush1.bf16.msra.mxu0 0
        %2367 = vmatprep.subr.bf16.mxu0 0
        %2368 = vmatpush1.bf16.msra.mxu0 0
        %2369 = vmatprep.subr.bf16.mxu0 0
        %2370 = vmatpush1.bf16.msra.mxu0 0
        %2371 = vmatprep.mubr.bf16.mxu0 0
        %2372 = vmatmul.mubr.bf16.gmra.mrb[0].mxu0 %v2328
        %v2373 = vpop.f32.mrb[0].mxu0
        %v2374 = vadd.f32 %v2313, %v2373
        %v2375 = vpop.f32.mrb[0].mxu0
        %v2376 = vpop.f32.mrb[0].mxu0
        %v2377 = vadd.f32 %v2313, %v2376
        %v2378 = vpop.f32.mrb[0].mxu0
        %2379 = vmatprep.mubr.bf16.mxu0 0
        %2380 = vmatmul.mubr.bf16.gmra.mrb[0].mxu0 %v2331
        %v2381 = vpop.f32.mrb[0].mxu0
        %v2382 = vadd.f32 %v2313, %v2381
        %v2383 = vpop.f32.mrb[0].mxu0
        %v2384 = vpop.f32.mrb[0].mxu0
        %v2385 = vadd.f32 %v2313, %v2384
        %v2386 = vpop.f32.mrb[0].mxu0
        %2387 = vmatprep.mubr.bf16.mxu0 0
        %2388 = vmatmul.mubr.bf16.gmra.mrb[0].mxu0 %v2334
        %v2389 = vpop.f32.mrb[0].mxu0
        %v2390 = vadd.f32 %v2313, %v2389
        %v2391 = vpop.f32.mrb[0].mxu0
        %v2392 = vpop.f32.mrb[0].mxu0
        %v2393 = vadd.f32 %v2313, %v2392
        %v2394 = vpop.f32.mrb[0].mxu0
        %2395 = vmatprep.mubr.bf16.mxu0 0
        %2396 = vmatmul.mubr.bf16.gmra.mrb[0].mxu0 %v2337
        %v2397 = vpop.f32.mrb[0].mxu0
        %v2398 = vadd.f32 %v2313, %v2397
        %v2399 = vpop.f32.mrb[0].mxu0
        %v2400 = vpop.f32.mrb[0].mxu0
        %v2401 = vadd.f32 %v2313, %v2400
        %v2402 = vpop.f32.mrb[0].mxu0
        %2403 = vdwg.mxu0
        %v2404 = vsel %vm403, %v2374, 0.0
        %2405 = vadd.xlane.f32.xlu0 %v2404
        %v2406 = vpop.xlane.xlu0 %2405
        %v2407 = vsel %vm403, %v2377, 0.0
        %2408 = vadd.xlane.f32.xlu0 %v2407
        %v2409 = vpop.xlane.xlu0 %2408
        %v2410 = vsel %vm403, %v2382, 0.0
        %2411 = vadd.xlane.f32.xlu0 %v2410
        %v2412 = vpop.xlane.xlu0 %2411
        %v2413 = vsel %vm403, %v2385, 0.0
        %2414 = vadd.xlane.f32.xlu0 %v2413
        %v2415 = vpop.xlane.xlu0 %2414
        %v2416 = vsel %vm403, %v2390, 0.0
        %2417 = vadd.xlane.f32.xlu0 %v2416
        %v2418 = vpop.xlane.xlu0 %2417
        %v2419 = vsel %vm403, %v2393, 0.0
        %2420 = vadd.xlane.f32.xlu0 %v2419
        %v2421 = vpop.xlane.xlu0 %2420
        %v2422 = vsel %vm403, %v2398, 0.0
        %2423 = vadd.xlane.f32.xlu0 %v2422
        %v2424 = vpop.xlane.xlu0 %2423
        %v2425 = vsel %vm403, %v2401, 0.0
        %2426 = vadd.xlane.f32.xlu0 %v2425
        %v2427 = vpop.xlane.xlu0 %2426
        %v2428 = vmul.f32 %v2406, 0.03125
        %v2429 = vmul.f32 %v2409, 0.03125
        %v2430 = vmul.f32 %v2412, 0.03125
        %v2431 = vmul.f32 %v2415, 0.03125
        %v2432 = vmul.f32 %v2418, 0.03125
        %v2433 = vmul.f32 %v2421, 0.03125
        %v2434 = vmul.f32 %v2424, 0.03125
        %v2435 = vmul.f32 %v2427, 0.03125
        %v2436 = vsub.f32 %v2374, %v2428
        %v2437 = vsub.f32 %v2377, %v2429
        %v2438 = vsub.f32 %v2382, %v2430
        %v2439 = vsub.f32 %v2385, %v2431
        %v2440 = vsub.f32 %v2390, %v2432
        %v2441 = vsub.f32 %v2393, %v2433
        %v2442 = vsub.f32 %v2398, %v2434
        %v2443 = vsub.f32 %v2401, %v2435
        %v2444 = vmul.f32 %v2436, %v2436
        %v2445 = vmul.f32 %v2437, %v2437
        %v2446 = vmul.f32 %v2438, %v2438
        %v2447 = vmul.f32 %v2439, %v2439
        %v2448 = vmul.f32 %v2440, %v2440
        %v2449 = vmul.f32 %v2441, %v2441
        %v2450 = vmul.f32 %v2442, %v2442
        %v2451 = vmul.f32 %v2443, %v2443
        %v2452 = vsel %vm403, %v2444, 0.0
        %2453 = vadd.xlane.f32.xlu0 %v2452
        %v2454 = vpop.xlane.xlu0 %2453
        %v2455 = vsel %vm403, %v2445, 0.0
        %2456 = vadd.xlane.f32.xlu0 %v2455
        %v2457 = vpop.xlane.xlu0 %2456
        %v2458 = vsel %vm403, %v2446, 0.0
        %2459 = vadd.xlane.f32.xlu0 %v2458
        %v2460 = vpop.xlane.xlu0 %2459
        %v2461 = vsel %vm403, %v2447, 0.0
        %2462 = vadd.xlane.f32.xlu0 %v2461
        %v2463 = vpop.xlane.xlu0 %2462
        %v2464 = vsel %vm403, %v2448, 0.0
        %2465 = vadd.xlane.f32.xlu0 %v2464
        %v2466 = vpop.xlane.xlu0 %2465
        %v2467 = vsel %vm403, %v2449, 0.0
        %2468 = vadd.xlane.f32.xlu0 %v2467
        %v2469 = vpop.xlane.xlu0 %2468
        %v2470 = vsel %vm403, %v2450, 0.0
        %2471 = vadd.xlane.f32.xlu0 %v2470
        %v2472 = vpop.xlane.xlu0 %2471
        %v2473 = vsel %vm403, %v2451, 0.0
        %2474 = vadd.xlane.f32.xlu0 %v2473
        %v2475 = vpop.xlane.xlu0 %2474
        %v2476 = vmul.f32 %v2454, 0.03125
        %v2477 = vmul.f32 %v2457, 0.03125
        %v2478 = vmul.f32 %v2460, 0.03125
        %v2479 = vmul.f32 %v2463, 0.03125
        %v2480 = vmul.f32 %v2466, 0.03125
        %v2481 = vmul.f32 %v2469, 0.03125
        %v2482 = vmul.f32 %v2472, 0.03125
        %v2483 = vmul.f32 %v2475, 0.03125
        %v2484 = vadd.f32 %v2476, 1e-05
        %v2485 = vadd.f32 %v2477, 1e-05
        %v2486 = vadd.f32 %v2478, 1e-05
        %v2487 = vadd.f32 %v2479, 1e-05
        %v2488 = vadd.f32 %v2480, 1e-05
        %v2489 = vadd.f32 %v2481, 1e-05
        %v2490 = vadd.f32 %v2482, 1e-05
        %v2491 = vadd.f32 %v2483, 1e-05
        %v2492 = vrsqrt.pop %v2484
        %v2493 = vrsqrt.pop %v2485
        %v2494 = vrsqrt.pop %v2486
        %v2495 = vrsqrt.pop %v2487
        %v2496 = vrsqrt.pop %v2488
        %v2497 = vrsqrt.pop %v2489
        %v2498 = vrsqrt.pop %v2490
        %v2499 = vrsqrt.pop %v2491
        %v2500 = vmul.f32 %v2436, %v2492
        %v2501 = vmul.f32 %v2437, %v2493
        %v2502 = vmul.f32 %v2438, %v2494
        %v2503 = vmul.f32 %v2439, %v2495
        %v2504 = vmul.f32 %v2440, %v2496
        %v2505 = vmul.f32 %v2441, %v2497
        %v2506 = vmul.f32 %v2442, %v2498
        %v2507 = vmul.f32 %v2443, %v2499
        %s2508 = scalar_lea.vmem %s5, 2
        %v2509 = vld [vmem:[%s2508] sm:$0x1]
        %v2511 = vlaneseq
        %v2512 = vshrl.u32 %v2511, 7
        %v2513 = vsub.s32 0, %v2512
        %v2514 = vrot.slane %v2509, %v2513
        %v2516 = vmul.f32 %v2500, %v2514
        %v2517 = vmul.f32 %v2501, %v2514
        %v2518 = vmul.f32 %v2502, %v2514
        %v2519 = vmul.f32 %v2503, %v2514
        %v2520 = vmul.f32 %v2504, %v2514
        %v2521 = vmul.f32 %v2505, %v2514
        %v2522 = vmul.f32 %v2506, %v2514
        %v2523 = vmul.f32 %v2507, %v2514
        %s2524 = scalar_lea.vmem %s6, 2
        %v2525 = vld [vmem:[%s2524] sm:$0x1]
        %v2527 = vlaneseq
        %v2528 = vshrl.u32 %v2527, 7
        %v2529 = vsub.s32 0, %v2528
        %v2530 = vrot.slane %v2525, %v2529
        %v2532 = vadd.f32 %v2516, %v2530
        %v2533 = vadd.f32 %v2517, %v2530
        %v2534 = vadd.f32 %v2518, %v2530
        %v2535 = vadd.f32 %v2519, %v2530
        %v2536 = vadd.f32 %v2520, %v2530
        %v2537 = vadd.f32 %v2521, %v2530
        %v2538 = vadd.f32 %v2522, %v2530
        %v2539 = vadd.f32 %v2523, %v2530
        %v2540 = vpack.c.bf16 %v2533, %v2532
        %v2541 = vpack.c.bf16 %v2535, %v2534
        %v2542 = vpack.c.bf16 %v2537, %v2536
        %v2543 = vpack.c.bf16 %v2539, %v2538
        %s2544 = scalar_lea.vmem %s1, 48
        %v2545 = vld [vmem:[%s2544] sm:$0xf]
        %v2546 = vld [vmem:[%s2544 + $0x4] sm:$0xf]
        %v2547 = vld [vmem:[%s2544 + $0x8] sm:$0xf]
        %v2548 = vld [vmem:[%s2544 + $0xc] sm:$0xf]
        %v2553 = vunpack.c.l.b16 %v2545
        %v2554 = vunpack.c.l.b16 %v2546
        %v2555 = vunpack.c.l.b16 %v2547
        %v2556 = vunpack.c.l.b16 %v2548
        %v2557 = vpack.c.b16 %v2554, %v2553
        %v2558 = vpack.c.b16 %v2556, %v2555
        %v2562 = vsel %vm403, %v2540, 0
        %v2565 = vsel %vm403, %v2541, 0
        %v2568 = vsel %vm403, %v2542, 0
        %v2571 = vsel %vm403, %v2543, 0
        %2573 = vmatprep.subr.bf16.mxu0 0
        %2574 = vmatpush1.bf16.msra.mxu0 %v2557
        %2575 = vmatprep.subr.bf16.mxu0 0
        %2576 = vmatpush1.bf16.msra.mxu0 %v2558
        %2577 = vmatprep.subr.bf16.mxu0 0
        %2578 = vmatpush1.bf16.msra.mxu0 0
        %2579 = vmatprep.subr.bf16.mxu0 0
        %2580 = vmatpush1.bf16.msra.mxu0 0
        %2581 = vmatprep.subr.bf16.mxu0 0
        %2582 = vmatpush1.bf16.msra.mxu0 0
        %2583 = vmatprep.subr.bf16.mxu0 0
        %2584 = vmatpush1.bf16.msra.mxu0 0
        %2585 = vmatprep.subr.bf16.mxu0 0
        %2586 = vmatpush1.bf16.msra.mxu0 0
        %2587 = vmatprep.subr.bf16.mxu0 0
        %2588 = vmatpush1.bf16.msra.mxu0 0
        %2589 = vmatprep.subr.bf16.mxu0 0
        %2590 = vmatpush1.bf16.msra.mxu0 0
        %2591 = vmatprep.subr.bf16.mxu0 0
        %2592 = vmatpush1.bf16.msra.mxu0 0
        %2593 = vmatprep.subr.bf16.mxu0 0
        %2594 = vmatpush1.bf16.msra.mxu0 0
        %2595 = vmatprep.subr.bf16.mxu0 0
        %2596 = vmatpush1.bf16.msra.mxu0 0
        %2597 = vmatprep.subr.bf16.mxu0 0
        %2598 = vmatpush1.bf16.msra.mxu0 0
        %2599 = vmatprep.subr.bf16.mxu0 0
        %2600 = vmatpush1.bf16.msra.mxu0 0
        %2601 = vmatprep.subr.bf16.mxu0 0
        %2602 = vmatpush1.bf16.msra.mxu0 0
        %2603 = vmatprep.subr.bf16.mxu0 0
        %2604 = vmatpush1.bf16.msra.mxu0 0
        %2605 = vmatprep.mubr.bf16.mxu0 0
        %2606 = vmatmul.mubr.bf16.gmra.mrb[0].mxu0 %v2562
        %v2607 = vpop.f32.mrb[0].mxu0
        %v2608 = vadd.f32 0.0, %v2607
        %v2609 = vpop.f32.mrb[0].mxu0
        %v2610 = vpop.f32.mrb[0].mxu0
        %v2611 = vadd.f32 0.0, %v2610
        %v2612 = vpop.f32.mrb[0].mxu0
        %2613 = vmatprep.mubr.bf16.mxu0 0
        %2614 = vmatmul.mubr.bf16.gmra.mrb[0].mxu0 %v2565
        %v2615 = vpop.f32.mrb[0].mxu0
        %v2616 = vadd.f32 0.0, %v2615
        %v2617 = vpop.f32.mrb[0].mxu0
        %v2618 = vpop.f32.mrb[0].mxu0
        %v2619 = vadd.f32 0.0, %v2618
        %v2620 = vpop.f32.mrb[0].mxu0
        %2621 = vmatprep.mubr.bf16.mxu0 0
        %2622 = vmatmul.mubr.bf16.gmra.mrb[0].mxu0 %v2568
        %v2623 = vpop.f32.mrb[0].mxu0
        %v2624 = vadd.f32 0.0, %v2623
        %v2625 = vpop.f32.mrb[0].mxu0
        %v2626 = vpop.f32.mrb[0].mxu0
        %v2627 = vadd.f32 0.0, %v2626
        %v2628 = vpop.f32.mrb[0].mxu0
        %2629 = vmatprep.mubr.bf16.mxu0 0
        %2630 = vmatmul.mubr.bf16.gmra.mrb[0].mxu0 %v2571
        %v2631 = vpop.f32.mrb[0].mxu0
        %v2632 = vadd.f32 0.0, %v2631
        %v2633 = vpop.f32.mrb[0].mxu0
        %v2634 = vpop.f32.mrb[0].mxu0
        %v2635 = vadd.f32 0.0, %v2634
        %v2636 = vpop.f32.mrb[0].mxu0
        %2637 = vdwg.mxu0
        %v2638 = vmax.f32 %v2608, %v2624
        %v2639 = vmax.f32 %v2611, %v2627
        %v2640 = vmax.f32 %v2616, %v2632
        %v2641 = vmax.f32 %v2619, %v2635
        %v2642 = vmax.f32 %v2638, %v2639
        %v2643 = vmax.f32 %v2640, %v2641
        %v2644 = vmax.f32 %v2642, %v2643
        %v2645 = vrot.slane %v2608, 4
        %v2646 = vmax.f32 %v2608, %v2645
        %v2647 = vrot.slane %v2646, 2
        %v2648 = vmax.f32 %v2646, %v2647
        %v2649 = vrot.slane %v2648, 1
        %v2650 = vmax.f32 %v2648, %v2649
        %v2651 = vrot.slane %v2611, 4
        %v2652 = vmax.f32 %v2611, %v2651
        %v2653 = vrot.slane %v2652, 2
        %v2654 = vmax.f32 %v2652, %v2653
        %v2655 = vrot.slane %v2654, 1
        %v2656 = vmax.f32 %v2654, %v2655
        %v2657 = vrot.slane %v2616, 4
        %v2658 = vmax.f32 %v2616, %v2657
        %v2659 = vrot.slane %v2658, 2
        %v2660 = vmax.f32 %v2658, %v2659
        %v2661 = vrot.slane %v2660, 1
        %v2662 = vmax.f32 %v2660, %v2661
        %v2663 = vrot.slane %v2619, 4
        %v2664 = vmax.f32 %v2619, %v2663
        %v2665 = vrot.slane %v2664, 2
        %v2666 = vmax.f32 %v2664, %v2665
        %v2667 = vrot.slane %v2666, 1
        %v2668 = vmax.f32 %v2666, %v2667
        %v2669 = vrot.slane %v2624, 4
        %v2670 = vmax.f32 %v2624, %v2669
        %v2671 = vrot.slane %v2670, 2
        %v2672 = vmax.f32 %v2670, %v2671
        %v2673 = vrot.slane %v2672, 1
        %v2674 = vmax.f32 %v2672, %v2673
        %v2675 = vrot.slane %v2627, 4
        %v2676 = vmax.f32 %v2627, %v2675
        %v2677 = vrot.slane %v2676, 2
        %v2678 = vmax.f32 %v2676, %v2677
        %v2679 = vrot.slane %v2678, 1
        %v2680 = vmax.f32 %v2678, %v2679
        %v2681 = vrot.slane %v2632, 4
        %v2682 = vmax.f32 %v2632, %v2681
        %v2683 = vrot.slane %v2682, 2
        %v2684 = vmax.f32 %v2682, %v2683
        %v2685 = vrot.slane %v2684, 1
        %v2686 = vmax.f32 %v2684, %v2685
        %v2687 = vrot.slane %v2635, 4
        %v2688 = vmax.f32 %v2635, %v2687
        %v2689 = vrot.slane %v2688, 2
        %v2690 = vmax.f32 %v2688, %v2689
        %v2691 = vrot.slane %v2690, 1
        %v2692 = vmax.f32 %v2690, %v2691
        %v2693 = vsel %vm537, %v2644, %v2650
        %v2694 = vsel %vm537, %v2644, %v2656
        %v2695 = vsel %vm537, %v2644, %v2662
        %v2696 = vsel %vm537, %v2644, %v2668
        %v2697 = vsel %vm537, %v2644, %v2674
        %v2698 = vsel %vm537, %v2644, %v2680
        %v2699 = vsel %vm537, %v2644, %v2686
        %v2700 = vsel %vm537, %v2644, %v2692
        %v2701 = vsub.f32 %v2608, %v2693
        %v2702 = vsub.f32 %v2611, %v2694
        %v2703 = vsub.f32 %v2616, %v2695
        %v2704 = vsub.f32 %v2619, %v2696
        %v2705 = vsub.f32 %v2624, %v2697
        %v2706 = vsub.f32 %v2627, %v2698
        %v2707 = vsub.f32 %v2632, %v2699
        %v2708 = vsub.f32 %v2635, %v2700
        %v2709 = vmul.f32 %v2701, 1.442695
        %v2710 = vpow.pop %v2709
        %v2711 = vmul.f32 %v2702, 1.442695
        %v2712 = vpow.pop %v2711
        %v2713 = vmul.f32 %v2703, 1.442695
        %v2714 = vpow.pop %v2713
        %v2715 = vmul.f32 %v2704, 1.442695
        %v2716 = vpow.pop %v2715
        %v2717 = vmul.f32 %v2705, 1.442695
        %v2718 = vpow.pop %v2717
        %v2719 = vmul.f32 %v2706, 1.442695
        %v2720 = vpow.pop %v2719
        %v2721 = vmul.f32 %v2707, 1.442695
        %v2722 = vpow.pop %v2721
        %v2723 = vmul.f32 %v2708, 1.442695
        %v2724 = vpow.pop %v2723
        %v2725 = vadd.f32 %v2710, %v2712
        %v2726 = vadd.f32 %v2725, %v2714
        %v2727 = vadd.f32 %v2726, %v2716
        %v2728 = vadd.f32 %v2727, %v2718
        %v2729 = vadd.f32 %v2728, %v2720
        %v2730 = vadd.f32 %v2729, %v2722
        %v2731 = vadd.f32 %v2730, %v2724
        %v2732 = vrot.slane %v2710, 4
        %v2733 = vadd.f32 %v2710, %v2732
        %v2734 = vrot.slane %v2733, 2
        %v2735 = vadd.f32 %v2733, %v2734
        %v2736 = vrot.slane %v2735, 1
        %v2737 = vadd.f32 %v2735, %v2736
        %v2738 = vrot.slane %v2712, 4
        %v2739 = vadd.f32 %v2712, %v2738
        %v2740 = vrot.slane %v2739, 2
        %v2741 = vadd.f32 %v2739, %v2740
        %v2742 = vrot.slane %v2741, 1
        %v2743 = vadd.f32 %v2741, %v2742
        %v2744 = vrot.slane %v2714, 4
        %v2745 = vadd.f32 %v2714, %v2744
        %v2746 = vrot.slane %v2745, 2
        %v2747 = vadd.f32 %v2745, %v2746
        %v2748 = vrot.slane %v2747, 1
        %v2749 = vadd.f32 %v2747, %v2748
        %v2750 = vrot.slane %v2716, 4
        %v2751 = vadd.f32 %v2716, %v2750
        %v2752 = vrot.slane %v2751, 2
        %v2753 = vadd.f32 %v2751, %v2752
        %v2754 = vrot.slane %v2753, 1
        %v2755 = vadd.f32 %v2753, %v2754
        %v2756 = vrot.slane %v2718, 4
        %v2757 = vadd.f32 %v2718, %v2756
        %v2758 = vrot.slane %v2757, 2
        %v2759 = vadd.f32 %v2757, %v2758
        %v2760 = vrot.slane %v2759, 1
        %v2761 = vadd.f32 %v2759, %v2760
        %v2762 = vrot.slane %v2720, 4
        %v2763 = vadd.f32 %v2720, %v2762
        %v2764 = vrot.slane %v2763, 2
        %v2765 = vadd.f32 %v2763, %v2764
        %v2766 = vrot.slane %v2765, 1
        %v2767 = vadd.f32 %v2765, %v2766
        %v2768 = vrot.slane %v2722, 4
        %v2769 = vadd.f32 %v2722, %v2768
        %v2770 = vrot.slane %v2769, 2
        %v2771 = vadd.f32 %v2769, %v2770
        %v2772 = vrot.slane %v2771, 1
        %v2773 = vadd.f32 %v2771, %v2772
        %v2774 = vrot.slane %v2724, 4
        %v2775 = vadd.f32 %v2724, %v2774
        %v2776 = vrot.slane %v2775, 2
        %v2777 = vadd.f32 %v2775, %v2776
        %v2778 = vrot.slane %v2777, 1
        %v2779 = vadd.f32 %v2777, %v2778
        %v2780 = vsel %vm537, %v2731, %v2737
        %v2781 = vsel %vm537, %v2731, %v2743
        %v2782 = vsel %vm537, %v2731, %v2749
        %v2783 = vsel %vm537, %v2731, %v2755
        %v2784 = vsel %vm537, %v2731, %v2761
        %v2785 = vsel %vm537, %v2731, %v2767
        %v2786 = vsel %vm537, %v2731, %v2773
        %v2787 = vsel %vm537, %v2731, %v2779
        %v2788 = vrcp.pop %v2780
        %v2789 = vrcp.pop %v2781
        %v2790 = vrcp.pop %v2782
        %v2791 = vrcp.pop %v2783
        %v2792 = vrcp.pop %v2784
        %v2793 = vrcp.pop %v2785
        %v2794 = vrcp.pop %v2786
        %v2795 = vrcp.pop %v2787
        %v2796 = vmul.f32 %v2710, %v2788
        %v2797 = vmul.f32 %v2712, %v2789
        %v2798 = vmul.f32 %v2714, %v2790
        %v2799 = vmul.f32 %v2716, %v2791
        %v2800 = vmul.f32 %v2718, %v2792
        %v2801 = vmul.f32 %v2720, %v2793
        %v2802 = vmul.f32 %v2722, %v2794
        %v2803 = vmul.f32 %v2724, %v2795
        %v2804 = vsel %vm537, %v2796, 0.0
        %v2805 = vsel %vm537, %v2797, 0.0
        %v2806 = vsel %vm537, %v2798, 0.0
        %v2807 = vsel %vm537, %v2799, 0.0
        %v2808 = vsel %vm537, %v2800, 0.0
        %v2809 = vsel %vm537, %v2801, 0.0
        %v2810 = vsel %vm537, %v2802, 0.0
        %v2811 = vsel %vm537, %v2803, 0.0
        %2812 = vadd.xlane.f32.xlu0 %v2804
        %v2813 = vpop.xlane.xlu0 %2812
        %2814 = vadd.xlane.f32.xlu0 %v2805
        %v2815 = vpop.xlane.xlu0 %2814
        %2816 = vadd.xlane.f32.xlu0 %v2806
        %v2817 = vpop.xlane.xlu0 %2816
        %2818 = vadd.xlane.f32.xlu0 %v2807
        %v2819 = vpop.xlane.xlu0 %2818
        %2820 = vadd.xlane.f32.xlu0 %v2808
        %v2821 = vpop.xlane.xlu0 %2820
        %2822 = vadd.xlane.f32.xlu0 %v2809
        %v2823 = vpop.xlane.xlu0 %2822
        %2824 = vadd.xlane.f32.xlu0 %v2810
        %v2825 = vpop.xlane.xlu0 %2824
        %2826 = vadd.xlane.f32.xlu0 %v2811
        %v2827 = vpop.xlane.xlu0 %2826
        %2828 = vadd.xlane.f32.xlu0 %v2796
        %v2829 = vpop.xlane.xlu0 %2828
        %2830 = vadd.xlane.f32.xlu0 %v2797
        %v2831 = vpop.xlane.xlu0 %2830
        %2832 = vadd.xlane.f32.xlu0 %v2798
        %v2833 = vpop.xlane.xlu0 %2832
        %2834 = vadd.xlane.f32.xlu0 %v2799
        %v2835 = vpop.xlane.xlu0 %2834
        %2836 = vadd.xlane.f32.xlu0 %v2800
        %v2837 = vpop.xlane.xlu0 %2836
        %2838 = vadd.xlane.f32.xlu0 %v2801
        %v2839 = vpop.xlane.xlu0 %2838
        %2840 = vadd.xlane.f32.xlu0 %v2802
        %v2841 = vpop.xlane.xlu0 %2840
        %2842 = vadd.xlane.f32.xlu0 %v2803
        %v2843 = vpop.xlane.xlu0 %2842
        %v2844 = vsub.f32 %v2829, %v2813
        %v2845 = vsub.f32 %v2831, %v2815
        %v2846 = vsub.f32 %v2833, %v2817
        %v2847 = vsub.f32 %v2835, %v2819
        %v2848 = vsub.f32 %v2837, %v2821
        %v2849 = vsub.f32 %v2839, %v2823
        %v2850 = vsub.f32 %v2841, %v2825
        %v2851 = vsub.f32 %v2843, %v2827
        %v2852 = vsel %vm537, %v2813, %v2844
        %v2853 = vsel %vm537, %v2815, %v2845
        %v2854 = vsel %vm537, %v2817, %v2846
        %v2855 = vsel %vm537, %v2819, %v2847
        %v2856 = vsel %vm537, %v2821, %v2848
        %v2857 = vsel %vm537, %v2823, %v2849
        %v2858 = vsel %vm537, %v2825, %v2850
        %v2859 = vsel %vm537, %v2827, %v2851
        %v2860 = vrcp.pop %v2852
        %v2861 = vmul.f32 %v2796, %v2860
        %v2862 = vrcp.pop %v2853
        %v2863 = vmul.f32 %v2797, %v2862
        %v2864 = vrcp.pop %v2854
        %v2865 = vmul.f32 %v2798, %v2864
        %v2866 = vrcp.pop %v2855
        %v2867 = vmul.f32 %v2799, %v2866
        %v2868 = vrcp.pop %v2856
        %v2869 = vmul.f32 %v2800, %v2868
        %v2870 = vrcp.pop %v2857
        %v2871 = vmul.f32 %v2801, %v2870
        %v2872 = vrcp.pop %v2858
        %v2873 = vmul.f32 %v2802, %v2872
        %v2874 = vrcp.pop %v2859
        %v2875 = vmul.f32 %v2803, %v2874
        %v2876 = vpack.c.bf16 %v2863, %v2861
        %v2877 = vpack.c.bf16 %v2867, %v2865
        %v2878 = vpack.c.bf16 %v2871, %v2869
        %v2879 = vpack.c.bf16 %v2875, %v2873
        %s2880 = scalar_lea.vmem %s2, 192
        %v2881 = vld [vmem:[%s2880] sm:$0xf]
        %v2882 = vld [vmem:[%s2880 + $0x4] sm:$0xf]
        %v2883 = vld [vmem:[%s2880 + $0x8] sm:$0xf]
        %v2884 = vld [vmem:[%s2880 + $0xc] sm:$0xf]
        %v2885 = vld [vmem:[%s2880 + $0x10] sm:$0xf]
        %v2886 = vld [vmem:[%s2880 + $0x14] sm:$0xf]
        %v2887 = vld [vmem:[%s2880 + $0x18] sm:$0xf]
        %v2888 = vld [vmem:[%s2880 + $0x1c] sm:$0xf]
        %v2889 = vld [vmem:[%s2880 + $0x20] sm:$0xf]
        %v2890 = vld [vmem:[%s2880 + $0x24] sm:$0xf]
        %v2891 = vld [vmem:[%s2880 + $0x28] sm:$0xf]
        %v2892 = vld [vmem:[%s2880 + $0x2c] sm:$0xf]
        %v2893 = vld [vmem:[%s2880 + $0x30] sm:$0xf]
        %v2894 = vld [vmem:[%s2880 + $0x34] sm:$0xf]
        %v2895 = vld [vmem:[%s2880 + $0x38] sm:$0xf]
        %v2896 = vld [vmem:[%s2880 + $0x3c] sm:$0xf]
        %v2913 = vunpack.c.l.b16 %v2881
        %v2914 = vunpack.c.l.b16 %v2882
        %v2915 = vunpack.c.l.b16 %v2883
        %v2916 = vunpack.c.l.b16 %v2884
        %v2917 = vunpack.c.l.b16 %v2885
        %v2918 = vunpack.c.l.b16 %v2886
        %v2919 = vunpack.c.l.b16 %v2887
        %v2920 = vunpack.c.l.b16 %v2888
        %v2921 = vunpack.c.l.b16 %v2889
        %v2922 = vunpack.c.l.b16 %v2890
        %v2923 = vunpack.c.l.b16 %v2891
        %v2924 = vunpack.c.l.b16 %v2892
        %v2925 = vunpack.c.l.b16 %v2893
        %v2926 = vunpack.c.l.b16 %v2894
        %v2927 = vunpack.c.l.b16 %v2895
        %v2928 = vunpack.c.l.b16 %v2896
        %v2929 = vpack.c.b16 %v2914, %v2913
        %v2930 = vpack.c.b16 %v2916, %v2915
        %v2931 = vpack.c.b16 %v2918, %v2917
        %v2932 = vpack.c.b16 %v2920, %v2919
        %v2933 = vpack.c.b16 %v2922, %v2921
        %v2934 = vpack.c.b16 %v2924, %v2923
        %v2935 = vpack.c.b16 %v2926, %v2925
        %v2936 = vpack.c.b16 %v2928, %v2927
        %2945 = vmatprep.subr.bf16.mxu0 0
        %2946 = vmatpush1.bf16.msra.mxu0 %v2929
        %2947 = vmatprep.subr.bf16.mxu0 0
        %2948 = vmatpush1.bf16.msra.mxu0 %v2930
        %2949 = vmatprep.subr.bf16.mxu0 0
        %2950 = vmatpush1.bf16.msra.mxu0 %v2931
        %2951 = vmatprep.subr.bf16.mxu0 0
        %2952 = vmatpush1.bf16.msra.mxu0 %v2932
        %2953 = vmatprep.subr.bf16.mxu0 0
        %2954 = vmatpush1.bf16.msra.mxu0 %v2933
        %2955 = vmatprep.subr.bf16.mxu0 0
        %2956 = vmatpush1.bf16.msra.mxu0 %v2934
        %2957 = vmatprep.subr.bf16.mxu0 0
        %2958 = vmatpush1.bf16.msra.mxu0 %v2935
        %2959 = vmatprep.subr.bf16.mxu0 0
        %2960 = vmatpush1.bf16.msra.mxu0 %v2936
        %2961 = vmatprep.subr.bf16.mxu0 0
        %2962 = vmatpush1.bf16.msra.mxu0 0
        %2963 = vmatprep.subr.bf16.mxu0 0
        %2964 = vmatpush1.bf16.msra.mxu0 0
        %2965 = vmatprep.subr.bf16.mxu0 0
        %2966 = vmatpush1.bf16.msra.mxu0 0
        %2967 = vmatprep.subr.bf16.mxu0 0
        %2968 = vmatpush1.bf16.msra.mxu0 0
        %2969 = vmatprep.subr.bf16.mxu0 0
        %2970 = vmatpush1.bf16.msra.mxu0 0
        %2971 = vmatprep.subr.bf16.mxu0 0
        %2972 = vmatpush1.bf16.msra.mxu0 0
        %2973 = vmatprep.subr.bf16.mxu0 0
        %2974 = vmatpush1.bf16.msra.mxu0 0
        %2975 = vmatprep.subr.bf16.mxu0 0
        %2976 = vmatpush1.bf16.msra.mxu0 0
        %2977 = vmatprep.mubr.bf16.mxu0 0
        %2978 = vmatmul.mubr.bf16.gmra.mrb[0].mxu0 %v2876
        %v2979 = vpop.f32.mrb[0].mxu0
        %v2980 = vadd.f32 0.0, %v2979
        %v2981 = vpop.f32.mrb[0].mxu0
        %v2982 = vpop.f32.mrb[0].mxu0
        %v2983 = vadd.f32 0.0, %v2982
        %v2984 = vpop.f32.mrb[0].mxu0
        %2985 = vmatprep.mubr.bf16.mxu0 0
        %2986 = vmatmul.mubr.bf16.gmra.mrb[0].mxu0 %v2877
        %v2987 = vpop.f32.mrb[0].mxu0
        %v2988 = vadd.f32 0.0, %v2987
        %v2989 = vpop.f32.mrb[0].mxu0
        %v2990 = vpop.f32.mrb[0].mxu0
        %v2991 = vadd.f32 0.0, %v2990
        %v2992 = vpop.f32.mrb[0].mxu0
        %2993 = vmatprep.mubr.bf16.mxu0 0
        %2994 = vmatmul.mubr.bf16.gmra.mrb[0].mxu0 %v2878
        %v2995 = vpop.f32.mrb[0].mxu0
        %v2996 = vadd.f32 0.0, %v2995
        %v2997 = vpop.f32.mrb[0].mxu0
        %v2998 = vpop.f32.mrb[0].mxu0
        %v2999 = vadd.f32 0.0, %v2998
        %v3000 = vpop.f32.mrb[0].mxu0
        %3001 = vmatprep.mubr.bf16.mxu0 0
        %3002 = vmatmul.mubr.bf16.gmra.mrb[0].mxu0 %v2879
        %v3003 = vpop.f32.mrb[0].mxu0
        %v3004 = vadd.f32 0.0, %v3003
        %v3005 = vpop.f32.mrb[0].mxu0
        %v3006 = vpop.f32.mrb[0].mxu0
        %v3007 = vadd.f32 0.0, %v3006
        %v3008 = vpop.f32.mrb[0].mxu0
        %3009 = vdwg.mxu0
        %v3010 = vadd.f32 %v2532, %v2980
        %v3011 = vadd.f32 %v2533, %v2983
        %v3012 = vadd.f32 %v2534, %v2988
        %v3013 = vadd.f32 %v2535, %v2991
        %v3014 = vadd.f32 %v2536, %v2996
        %v3015 = vadd.f32 %v2537, %v2999
        %v3016 = vadd.f32 %v2538, %v3004
        %v3017 = vadd.f32 %v2539, %v3007
        %v3018 = vpack.c.bf16 %v3011, %v3010
        %v3019 = vpack.c.bf16 %v3013, %v3012
        %v3020 = vpack.c.bf16 %v3015, %v3014
        %v3021 = vpack.c.bf16 %v3017, %v3016
        %s3022 = scalar_lea.vmem %s3, 48
        %v3023 = vld [vmem:[%s3022] sm:$0xf]
        %v3024 = vld [vmem:[%s3022 + $0x4] sm:$0xf]
        %v3025 = vld [vmem:[%s3022 + $0x8] sm:$0xf]
        %v3026 = vld [vmem:[%s3022 + $0xc] sm:$0xf]
        %s3027 = scalar_lea.vmem %s4, 3
        %v3028 = vld [vmem:[%s3027] sm:$0x1]
        %v3030 = vlaneseq
        %v3031 = vshrl.u32 %v3030, 7
        %v3032 = vsub.s32 0, %v3031
        %v3033 = vrot.slane %v3028, %v3032
        %v3039 = vunpack.c.l.b16 %v3023
        %v3040 = vunpack.c.l.b16 %v3024
        %v3041 = vunpack.c.l.b16 %v3025
        %v3042 = vunpack.c.l.b16 %v3026
        %v3043 = vpack.c.b16 %v3040, %v3039
        %v3044 = vpack.c.b16 %v3042, %v3041
        %v3048 = vsel %vm403, %v3018, 0
        %v3051 = vsel %vm403, %v3019, 0
        %v3054 = vsel %vm403, %v3020, 0
        %v3057 = vsel %vm403, %v3021, 0
        %3059 = vmatprep.subr.bf16.mxu0 0
        %3060 = vmatpush1.bf16.msra.mxu0 %v3043
        %3061 = vmatprep.subr.bf16.mxu0 0
        %3062 = vmatpush1.bf16.msra.mxu0 %v3044
        %3063 = vmatprep.subr.bf16.mxu0 0
        %3064 = vmatpush1.bf16.msra.mxu0 0
        %3065 = vmatprep.subr.bf16.mxu0 0
        %3066 = vmatpush1.bf16.msra.mxu0 0
        %3067 = vmatprep.subr.bf16.mxu0 0
        %3068 = vmatpush1.bf16.msra.mxu0 0
        %3069 = vmatprep.subr.bf16.mxu0 0
        %3070 = vmatpush1.bf16.msra.mxu0 0
        %3071 = vmatprep.subr.bf16.mxu0 0
        %3072 = vmatpush1.bf16.msra.mxu0 0
        %3073 = vmatprep.subr.bf16.mxu0 0
        %3074 = vmatpush1.bf16.msra.mxu0 0
        %3075 = vmatprep.subr.bf16.mxu0 0
        %3076 = vmatpush1.bf16.msra.mxu0 0
        %3077 = vmatprep.subr.bf16.mxu0 0
        %3078 = vmatpush1.bf16.msra.mxu0 0
        %3079 = vmatprep.subr.bf16.mxu0 0
        %3080 = vmatpush1.bf16.msra.mxu0 0
        %3081 = vmatprep.subr.bf16.mxu0 0
        %3082 = vmatpush1.bf16.msra.mxu0 0
        %3083 = vmatprep.subr.bf16.mxu0 0
        %3084 = vmatpush1.bf16.msra.mxu0 0
        %3085 = vmatprep.subr.bf16.mxu0 0
        %3086 = vmatpush1.bf16.msra.mxu0 0
        %3087 = vmatprep.subr.bf16.mxu0 0
        %3088 = vmatpush1.bf16.msra.mxu0 0
        %3089 = vmatprep.subr.bf16.mxu0 0
        %3090 = vmatpush1.bf16.msra.mxu0 0
        %3091 = vmatprep.mubr.bf16.mxu0 0
        %3092 = vmatmul.mubr.bf16.gmra.mrb[0].mxu0 %v3048
        %v3093 = vpop.f32.mrb[0].mxu0
        %v3094 = vadd.f32 %v3033, %v3093
        %v3095 = vpop.f32.mrb[0].mxu0
        %v3096 = vpop.f32.mrb[0].mxu0
        %v3097 = vadd.f32 %v3033, %v3096
        %v3098 = vpop.f32.mrb[0].mxu0
        %3099 = vmatprep.mubr.bf16.mxu0 0
        %3100 = vmatmul.mubr.bf16.gmra.mrb[0].mxu0 %v3051
        %v3101 = vpop.f32.mrb[0].mxu0
        %v3102 = vadd.f32 %v3033, %v3101
        %v3103 = vpop.f32.mrb[0].mxu0
        %v3104 = vpop.f32.mrb[0].mxu0
        %v3105 = vadd.f32 %v3033, %v3104
        %v3106 = vpop.f32.mrb[0].mxu0
        %3107 = vmatprep.mubr.bf16.mxu0 0
        %3108 = vmatmul.mubr.bf16.gmra.mrb[0].mxu0 %v3054
        %v3109 = vpop.f32.mrb[0].mxu0
        %v3110 = vadd.f32 %v3033, %v3109
        %v3111 = vpop.f32.mrb[0].mxu0
        %v3112 = vpop.f32.mrb[0].mxu0
        %v3113 = vadd.f32 %v3033, %v3112
        %v3114 = vpop.f32.mrb[0].mxu0
        %3115 = vmatprep.mubr.bf16.mxu0 0
        %3116 = vmatmul.mubr.bf16.gmra.mrb[0].mxu0 %v3057
        %v3117 = vpop.f32.mrb[0].mxu0
        %v3118 = vadd.f32 %v3033, %v3117
        %v3119 = vpop.f32.mrb[0].mxu0
        %v3120 = vpop.f32.mrb[0].mxu0
        %v3121 = vadd.f32 %v3033, %v3120
        %v3122 = vpop.f32.mrb[0].mxu0
        %3123 = vdwg.mxu0
        %v3124 = vsel %vm403, %v3094, 0.0
        %3125 = vadd.xlane.f32.xlu0 %v3124
        %v3126 = vpop.xlane.xlu0 %3125
        %v3127 = vsel %vm403, %v3097, 0.0
        %3128 = vadd.xlane.f32.xlu0 %v3127
        %v3129 = vpop.xlane.xlu0 %3128
        %v3130 = vsel %vm403, %v3102, 0.0
        %3131 = vadd.xlane.f32.xlu0 %v3130
        %v3132 = vpop.xlane.xlu0 %3131
        %v3133 = vsel %vm403, %v3105, 0.0
        %3134 = vadd.xlane.f32.xlu0 %v3133
        %v3135 = vpop.xlane.xlu0 %3134
        %v3136 = vsel %vm403, %v3110, 0.0
        %3137 = vadd.xlane.f32.xlu0 %v3136
        %v3138 = vpop.xlane.xlu0 %3137
        %v3139 = vsel %vm403, %v3113, 0.0
        %3140 = vadd.xlane.f32.xlu0 %v3139
        %v3141 = vpop.xlane.xlu0 %3140
        %v3142 = vsel %vm403, %v3118, 0.0
        %3143 = vadd.xlane.f32.xlu0 %v3142
        %v3144 = vpop.xlane.xlu0 %3143
        %v3145 = vsel %vm403, %v3121, 0.0
        %3146 = vadd.xlane.f32.xlu0 %v3145
        %v3147 = vpop.xlane.xlu0 %3146
        %v3148 = vmul.f32 %v3126, 0.03125
        %v3149 = vmul.f32 %v3129, 0.03125
        %v3150 = vmul.f32 %v3132, 0.03125
        %v3151 = vmul.f32 %v3135, 0.03125
        %v3152 = vmul.f32 %v3138, 0.03125
        %v3153 = vmul.f32 %v3141, 0.03125
        %v3154 = vmul.f32 %v3144, 0.03125
        %v3155 = vmul.f32 %v3147, 0.03125
        %v3156 = vsub.f32 %v3094, %v3148
        %v3157 = vsub.f32 %v3097, %v3149
        %v3158 = vsub.f32 %v3102, %v3150
        %v3159 = vsub.f32 %v3105, %v3151
        %v3160 = vsub.f32 %v3110, %v3152
        %v3161 = vsub.f32 %v3113, %v3153
        %v3162 = vsub.f32 %v3118, %v3154
        %v3163 = vsub.f32 %v3121, %v3155
        %v3164 = vmul.f32 %v3156, %v3156
        %v3165 = vmul.f32 %v3157, %v3157
        %v3166 = vmul.f32 %v3158, %v3158
        %v3167 = vmul.f32 %v3159, %v3159
        %v3168 = vmul.f32 %v3160, %v3160
        %v3169 = vmul.f32 %v3161, %v3161
        %v3170 = vmul.f32 %v3162, %v3162
        %v3171 = vmul.f32 %v3163, %v3163
        %v3172 = vsel %vm403, %v3164, 0.0
        %3173 = vadd.xlane.f32.xlu0 %v3172
        %v3174 = vpop.xlane.xlu0 %3173
        %v3175 = vsel %vm403, %v3165, 0.0
        %3176 = vadd.xlane.f32.xlu0 %v3175
        %v3177 = vpop.xlane.xlu0 %3176
        %v3178 = vsel %vm403, %v3166, 0.0
        %3179 = vadd.xlane.f32.xlu0 %v3178
        %v3180 = vpop.xlane.xlu0 %3179
        %v3181 = vsel %vm403, %v3167, 0.0
        %3182 = vadd.xlane.f32.xlu0 %v3181
        %v3183 = vpop.xlane.xlu0 %3182
        %v3184 = vsel %vm403, %v3168, 0.0
        %3185 = vadd.xlane.f32.xlu0 %v3184
        %v3186 = vpop.xlane.xlu0 %3185
        %v3187 = vsel %vm403, %v3169, 0.0
        %3188 = vadd.xlane.f32.xlu0 %v3187
        %v3189 = vpop.xlane.xlu0 %3188
        %v3190 = vsel %vm403, %v3170, 0.0
        %3191 = vadd.xlane.f32.xlu0 %v3190
        %v3192 = vpop.xlane.xlu0 %3191
        %v3193 = vsel %vm403, %v3171, 0.0
        %3194 = vadd.xlane.f32.xlu0 %v3193
        %v3195 = vpop.xlane.xlu0 %3194
        %v3196 = vmul.f32 %v3174, 0.03125
        %v3197 = vmul.f32 %v3177, 0.03125
        %v3198 = vmul.f32 %v3180, 0.03125
        %v3199 = vmul.f32 %v3183, 0.03125
        %v3200 = vmul.f32 %v3186, 0.03125
        %v3201 = vmul.f32 %v3189, 0.03125
        %v3202 = vmul.f32 %v3192, 0.03125
        %v3203 = vmul.f32 %v3195, 0.03125
        %v3204 = vadd.f32 %v3196, 1e-05
        %v3205 = vadd.f32 %v3197, 1e-05
        %v3206 = vadd.f32 %v3198, 1e-05
        %v3207 = vadd.f32 %v3199, 1e-05
        %v3208 = vadd.f32 %v3200, 1e-05
        %v3209 = vadd.f32 %v3201, 1e-05
        %v3210 = vadd.f32 %v3202, 1e-05
        %v3211 = vadd.f32 %v3203, 1e-05
        %v3212 = vrsqrt.pop %v3204
        %v3213 = vrsqrt.pop %v3205
        %v3214 = vrsqrt.pop %v3206
        %v3215 = vrsqrt.pop %v3207
        %v3216 = vrsqrt.pop %v3208
        %v3217 = vrsqrt.pop %v3209
        %v3218 = vrsqrt.pop %v3210
        %v3219 = vrsqrt.pop %v3211
        %v3220 = vmul.f32 %v3156, %v3212
        %v3221 = vmul.f32 %v3157, %v3213
        %v3222 = vmul.f32 %v3158, %v3214
        %v3223 = vmul.f32 %v3159, %v3215
        %v3224 = vmul.f32 %v3160, %v3216
        %v3225 = vmul.f32 %v3161, %v3217
        %v3226 = vmul.f32 %v3162, %v3218
        %v3227 = vmul.f32 %v3163, %v3219
        %s3228 = scalar_lea.vmem %s5, 3
        %v3229 = vld [vmem:[%s3228] sm:$0x1]
        %v3231 = vlaneseq
        %v3232 = vshrl.u32 %v3231, 7
        %v3233 = vsub.s32 0, %v3232
        %v3234 = vrot.slane %v3229, %v3233
        %v3236 = vmul.f32 %v3220, %v3234
        %v3237 = vmul.f32 %v3221, %v3234
        %v3238 = vmul.f32 %v3222, %v3234
        %v3239 = vmul.f32 %v3223, %v3234
        %v3240 = vmul.f32 %v3224, %v3234
        %v3241 = vmul.f32 %v3225, %v3234
        %v3242 = vmul.f32 %v3226, %v3234
        %v3243 = vmul.f32 %v3227, %v3234
        %s3244 = scalar_lea.vmem %s6, 3
        %v3245 = vld [vmem:[%s3244] sm:$0x1]
        %v3247 = vlaneseq
        %v3248 = vshrl.u32 %v3247, 7
        %v3249 = vsub.s32 0, %v3248
        %v3250 = vrot.slane %v3245, %v3249
        %v3252 = vadd.f32 %v3236, %v3250
        %v3253 = vadd.f32 %v3237, %v3250
        %v3254 = vadd.f32 %v3238, %v3250
        %v3255 = vadd.f32 %v3239, %v3250
        %v3256 = vadd.f32 %v3240, %v3250
        %v3257 = vadd.f32 %v3241, %v3250
        %v3258 = vadd.f32 %v3242, %v3250
        %v3259 = vadd.f32 %v3243, %v3250
        %v3260 = vpack.c.bf16 %v3253, %v3252
        %v3261 = vpack.c.bf16 %v3255, %v3254
        %v3262 = vpack.c.bf16 %v3257, %v3256
        %v3263 = vpack.c.bf16 %v3259, %v3258
        %s3264 = scalar_lea.vmem %s1, 64
        %v3265 = vld [vmem:[%s3264] sm:$0xf]
        %v3266 = vld [vmem:[%s3264 + $0x4] sm:$0xf]
        %v3267 = vld [vmem:[%s3264 + $0x8] sm:$0xf]
        %v3268 = vld [vmem:[%s3264 + $0xc] sm:$0xf]
        %v3273 = vunpack.c.l.b16 %v3265
        %v3274 = vunpack.c.l.b16 %v3266
        %v3275 = vunpack.c.l.b16 %v3267
        %v3276 = vunpack.c.l.b16 %v3268
        %v3277 = vpack.c.b16 %v3274, %v3273
        %v3278 = vpack.c.b16 %v3276, %v3275
        %v3282 = vsel %vm403, %v3260, 0
        %v3285 = vsel %vm403, %v3261, 0
        %v3288 = vsel %vm403, %v3262, 0
        %v3291 = vsel %vm403, %v3263, 0
        %3293 = vmatprep.subr.bf16.mxu0 0
        %3294 = vmatpush1.bf16.msra.mxu0 %v3277
        %3295 = vmatprep.subr.bf16.mxu0 0
        %3296 = vmatpush1.bf16.msra.mxu0 %v3278
        %3297 = vmatprep.subr.bf16.mxu0 0
        %3298 = vmatpush1.bf16.msra.mxu0 0
        %3299 = vmatprep.subr.bf16.mxu0 0
        %3300 = vmatpush1.bf16.msra.mxu0 0
        %3301 = vmatprep.subr.bf16.mxu0 0
        %3302 = vmatpush1.bf16.msra.mxu0 0
        %3303 = vmatprep.subr.bf16.mxu0 0
        %3304 = vmatpush1.bf16.msra.mxu0 0
        %3305 = vmatprep.subr.bf16.mxu0 0
        %3306 = vmatpush1.bf16.msra.mxu0 0
        %3307 = vmatprep.subr.bf16.mxu0 0
        %3308 = vmatpush1.bf16.msra.mxu0 0
        %3309 = vmatprep.subr.bf16.mxu0 0
        %3310 = vmatpush1.bf16.msra.mxu0 0
        %3311 = vmatprep.subr.bf16.mxu0 0
        %3312 = vmatpush1.bf16.msra.mxu0 0
        %3313 = vmatprep.subr.bf16.mxu0 0
        %3314 = vmatpush1.bf16.msra.mxu0 0
        %3315 = vmatprep.subr.bf16.mxu0 0
        %3316 = vmatpush1.bf16.msra.mxu0 0
        %3317 = vmatprep.subr.bf16.mxu0 0
        %3318 = vmatpush1.bf16.msra.mxu0 0
        %3319 = vmatprep.subr.bf16.mxu0 0
        %3320 = vmatpush1.bf16.msra.mxu0 0
        %3321 = vmatprep.subr.bf16.mxu0 0
        %3322 = vmatpush1.bf16.msra.mxu0 0
        %3323 = vmatprep.subr.bf16.mxu0 0
        %3324 = vmatpush1.bf16.msra.mxu0 0
        %3325 = vmatprep.mubr.bf16.mxu0 0
        %3326 = vmatmul.mubr.bf16.gmra.mrb[0].mxu0 %v3282
        %v3327 = vpop.f32.mrb[0].mxu0
        %v3328 = vadd.f32 0.0, %v3327
        %v3329 = vpop.f32.mrb[0].mxu0
        %v3330 = vpop.f32.mrb[0].mxu0
        %v3331 = vadd.f32 0.0, %v3330
        %v3332 = vpop.f32.mrb[0].mxu0
        %3333 = vmatprep.mubr.bf16.mxu0 0
        %3334 = vmatmul.mubr.bf16.gmra.mrb[0].mxu0 %v3285
        %v3335 = vpop.f32.mrb[0].mxu0
        %v3336 = vadd.f32 0.0, %v3335
        %v3337 = vpop.f32.mrb[0].mxu0
        %v3338 = vpop.f32.mrb[0].mxu0
        %v3339 = vadd.f32 0.0, %v3338
        %v3340 = vpop.f32.mrb[0].mxu0
        %3341 = vmatprep.mubr.bf16.mxu0 0
        %3342 = vmatmul.mubr.bf16.gmra.mrb[0].mxu0 %v3288
        %v3343 = vpop.f32.mrb[0].mxu0
        %v3344 = vadd.f32 0.0, %v3343
        %v3345 = vpop.f32.mrb[0].mxu0
        %v3346 = vpop.f32.mrb[0].mxu0
        %v3347 = vadd.f32 0.0, %v3346
        %v3348 = vpop.f32.mrb[0].mxu0
        %3349 = vmatprep.mubr.bf16.mxu0 0
        %3350 = vmatmul.mubr.bf16.gmra.mrb[0].mxu0 %v3291
        %v3351 = vpop.f32.mrb[0].mxu0
        %v3352 = vadd.f32 0.0, %v3351
        %v3353 = vpop.f32.mrb[0].mxu0
        %v3354 = vpop.f32.mrb[0].mxu0
        %v3355 = vadd.f32 0.0, %v3354
        %v3356 = vpop.f32.mrb[0].mxu0
        %3357 = vdwg.mxu0
        %v3358 = vmax.f32 %v3328, %v3344
        %v3359 = vmax.f32 %v3331, %v3347
        %v3360 = vmax.f32 %v3336, %v3352
        %v3361 = vmax.f32 %v3339, %v3355
        %v3362 = vmax.f32 %v3358, %v3359
        %v3363 = vmax.f32 %v3360, %v3361
        %v3364 = vmax.f32 %v3362, %v3363
        %v3365 = vrot.slane %v3328, 4
        %v3366 = vmax.f32 %v3328, %v3365
        %v3367 = vrot.slane %v3366, 2
        %v3368 = vmax.f32 %v3366, %v3367
        %v3369 = vrot.slane %v3368, 1
        %v3370 = vmax.f32 %v3368, %v3369
        %v3371 = vrot.slane %v3331, 4
        %v3372 = vmax.f32 %v3331, %v3371
        %v3373 = vrot.slane %v3372, 2
        %v3374 = vmax.f32 %v3372, %v3373
        %v3375 = vrot.slane %v3374, 1
        %v3376 = vmax.f32 %v3374, %v3375
        %v3377 = vrot.slane %v3336, 4
        %v3378 = vmax.f32 %v3336, %v3377
        %v3379 = vrot.slane %v3378, 2
        %v3380 = vmax.f32 %v3378, %v3379
        %v3381 = vrot.slane %v3380, 1
        %v3382 = vmax.f32 %v3380, %v3381
        %v3383 = vrot.slane %v3339, 4
        %v3384 = vmax.f32 %v3339, %v3383
        %v3385 = vrot.slane %v3384, 2
        %v3386 = vmax.f32 %v3384, %v3385
        %v3387 = vrot.slane %v3386, 1
        %v3388 = vmax.f32 %v3386, %v3387
        %v3389 = vrot.slane %v3344, 4
        %v3390 = vmax.f32 %v3344, %v3389
        %v3391 = vrot.slane %v3390, 2
        %v3392 = vmax.f32 %v3390, %v3391
        %v3393 = vrot.slane %v3392, 1
        %v3394 = vmax.f32 %v3392, %v3393
        %v3395 = vrot.slane %v3347, 4
        %v3396 = vmax.f32 %v3347, %v3395
        %v3397 = vrot.slane %v3396, 2
        %v3398 = vmax.f32 %v3396, %v3397
        %v3399 = vrot.slane %v3398, 1
        %v3400 = vmax.f32 %v3398, %v3399
        %v3401 = vrot.slane %v3352, 4
        %v3402 = vmax.f32 %v3352, %v3401
        %v3403 = vrot.slane %v3402, 2
        %v3404 = vmax.f32 %v3402, %v3403
        %v3405 = vrot.slane %v3404, 1
        %v3406 = vmax.f32 %v3404, %v3405
        %v3407 = vrot.slane %v3355, 4
        %v3408 = vmax.f32 %v3355, %v3407
        %v3409 = vrot.slane %v3408, 2
        %v3410 = vmax.f32 %v3408, %v3409
        %v3411 = vrot.slane %v3410, 1
        %v3412 = vmax.f32 %v3410, %v3411
        %v3413 = vsel %vm537, %v3364, %v3370
        %v3414 = vsel %vm537, %v3364, %v3376
        %v3415 = vsel %vm537, %v3364, %v3382
        %v3416 = vsel %vm537, %v3364, %v3388
        %v3417 = vsel %vm537, %v3364, %v3394
        %v3418 = vsel %vm537, %v3364, %v3400
        %v3419 = vsel %vm537, %v3364, %v3406
        %v3420 = vsel %vm537, %v3364, %v3412
        %v3421 = vsub.f32 %v3328, %v3413
        %v3422 = vsub.f32 %v3331, %v3414
        %v3423 = vsub.f32 %v3336, %v3415
        %v3424 = vsub.f32 %v3339, %v3416
        %v3425 = vsub.f32 %v3344, %v3417
        %v3426 = vsub.f32 %v3347, %v3418
        %v3427 = vsub.f32 %v3352, %v3419
        %v3428 = vsub.f32 %v3355, %v3420
        %v3429 = vmul.f32 %v3421, 1.442695
        %v3430 = vpow.pop %v3429
        %v3431 = vmul.f32 %v3422, 1.442695
        %v3432 = vpow.pop %v3431
        %v3433 = vmul.f32 %v3423, 1.442695
        %v3434 = vpow.pop %v3433
        %v3435 = vmul.f32 %v3424, 1.442695
        %v3436 = vpow.pop %v3435
        %v3437 = vmul.f32 %v3425, 1.442695
        %v3438 = vpow.pop %v3437
        %v3439 = vmul.f32 %v3426, 1.442695
        %v3440 = vpow.pop %v3439
        %v3441 = vmul.f32 %v3427, 1.442695
        %v3442 = vpow.pop %v3441
        %v3443 = vmul.f32 %v3428, 1.442695
        %v3444 = vpow.pop %v3443
        %v3445 = vadd.f32 %v3430, %v3432
        %v3446 = vadd.f32 %v3445, %v3434
        %v3447 = vadd.f32 %v3446, %v3436
        %v3448 = vadd.f32 %v3447, %v3438
        %v3449 = vadd.f32 %v3448, %v3440
        %v3450 = vadd.f32 %v3449, %v3442
        %v3451 = vadd.f32 %v3450, %v3444
        %v3452 = vrot.slane %v3430, 4
        %v3453 = vadd.f32 %v3430, %v3452
        %v3454 = vrot.slane %v3453, 2
        %v3455 = vadd.f32 %v3453, %v3454
        %v3456 = vrot.slane %v3455, 1
        %v3457 = vadd.f32 %v3455, %v3456
        %v3458 = vrot.slane %v3432, 4
        %v3459 = vadd.f32 %v3432, %v3458
        %v3460 = vrot.slane %v3459, 2
        %v3461 = vadd.f32 %v3459, %v3460
        %v3462 = vrot.slane %v3461, 1
        %v3463 = vadd.f32 %v3461, %v3462
        %v3464 = vrot.slane %v3434, 4
        %v3465 = vadd.f32 %v3434, %v3464
        %v3466 = vrot.slane %v3465, 2
        %v3467 = vadd.f32 %v3465, %v3466
        %v3468 = vrot.slane %v3467, 1
        %v3469 = vadd.f32 %v3467, %v3468
        %v3470 = vrot.slane %v3436, 4
        %v3471 = vadd.f32 %v3436, %v3470
        %v3472 = vrot.slane %v3471, 2
        %v3473 = vadd.f32 %v3471, %v3472
        %v3474 = vrot.slane %v3473, 1
        %v3475 = vadd.f32 %v3473, %v3474
        %v3476 = vrot.slane %v3438, 4
        %v3477 = vadd.f32 %v3438, %v3476
        %v3478 = vrot.slane %v3477, 2
        %v3479 = vadd.f32 %v3477, %v3478
        %v3480 = vrot.slane %v3479, 1
        %v3481 = vadd.f32 %v3479, %v3480
        %v3482 = vrot.slane %v3440, 4
        %v3483 = vadd.f32 %v3440, %v3482
        %v3484 = vrot.slane %v3483, 2
        %v3485 = vadd.f32 %v3483, %v3484
        %v3486 = vrot.slane %v3485, 1
        %v3487 = vadd.f32 %v3485, %v3486
        %v3488 = vrot.slane %v3442, 4
        %v3489 = vadd.f32 %v3442, %v3488
        %v3490 = vrot.slane %v3489, 2
        %v3491 = vadd.f32 %v3489, %v3490
        %v3492 = vrot.slane %v3491, 1
        %v3493 = vadd.f32 %v3491, %v3492
        %v3494 = vrot.slane %v3444, 4
        %v3495 = vadd.f32 %v3444, %v3494
        %v3496 = vrot.slane %v3495, 2
        %v3497 = vadd.f32 %v3495, %v3496
        %v3498 = vrot.slane %v3497, 1
        %v3499 = vadd.f32 %v3497, %v3498
        %v3500 = vsel %vm537, %v3451, %v3457
        %v3501 = vsel %vm537, %v3451, %v3463
        %v3502 = vsel %vm537, %v3451, %v3469
        %v3503 = vsel %vm537, %v3451, %v3475
        %v3504 = vsel %vm537, %v3451, %v3481
        %v3505 = vsel %vm537, %v3451, %v3487
        %v3506 = vsel %vm537, %v3451, %v3493
        %v3507 = vsel %vm537, %v3451, %v3499
        %v3508 = vrcp.pop %v3500
        %v3509 = vrcp.pop %v3501
        %v3510 = vrcp.pop %v3502
        %v3511 = vrcp.pop %v3503
        %v3512 = vrcp.pop %v3504
        %v3513 = vrcp.pop %v3505
        %v3514 = vrcp.pop %v3506
        %v3515 = vrcp.pop %v3507
        %v3516 = vmul.f32 %v3430, %v3508
        %v3517 = vmul.f32 %v3432, %v3509
        %v3518 = vmul.f32 %v3434, %v3510
        %v3519 = vmul.f32 %v3436, %v3511
        %v3520 = vmul.f32 %v3438, %v3512
        %v3521 = vmul.f32 %v3440, %v3513
        %v3522 = vmul.f32 %v3442, %v3514
        %v3523 = vmul.f32 %v3444, %v3515
        %v3524 = vsel %vm537, %v3516, 0.0
        %v3525 = vsel %vm537, %v3517, 0.0
        %v3526 = vsel %vm537, %v3518, 0.0
        %v3527 = vsel %vm537, %v3519, 0.0
        %v3528 = vsel %vm537, %v3520, 0.0
        %v3529 = vsel %vm537, %v3521, 0.0
        %v3530 = vsel %vm537, %v3522, 0.0
        %v3531 = vsel %vm537, %v3523, 0.0
        %3532 = vadd.xlane.f32.xlu0 %v3524
        %v3533 = vpop.xlane.xlu0 %3532
        %3534 = vadd.xlane.f32.xlu0 %v3525
        %v3535 = vpop.xlane.xlu0 %3534
        %3536 = vadd.xlane.f32.xlu0 %v3526
        %v3537 = vpop.xlane.xlu0 %3536
        %3538 = vadd.xlane.f32.xlu0 %v3527
        %v3539 = vpop.xlane.xlu0 %3538
        %3540 = vadd.xlane.f32.xlu0 %v3528
        %v3541 = vpop.xlane.xlu0 %3540
        %3542 = vadd.xlane.f32.xlu0 %v3529
        %v3543 = vpop.xlane.xlu0 %3542
        %3544 = vadd.xlane.f32.xlu0 %v3530
        %v3545 = vpop.xlane.xlu0 %3544
        %3546 = vadd.xlane.f32.xlu0 %v3531
        %v3547 = vpop.xlane.xlu0 %3546
        %3548 = vadd.xlane.f32.xlu0 %v3516
        %v3549 = vpop.xlane.xlu0 %3548
        %3550 = vadd.xlane.f32.xlu0 %v3517
        %v3551 = vpop.xlane.xlu0 %3550
        %3552 = vadd.xlane.f32.xlu0 %v3518
        %v3553 = vpop.xlane.xlu0 %3552
        %3554 = vadd.xlane.f32.xlu0 %v3519
        %v3555 = vpop.xlane.xlu0 %3554
        %3556 = vadd.xlane.f32.xlu0 %v3520
        %v3557 = vpop.xlane.xlu0 %3556
        %3558 = vadd.xlane.f32.xlu0 %v3521
        %v3559 = vpop.xlane.xlu0 %3558
        %3560 = vadd.xlane.f32.xlu0 %v3522
        %v3561 = vpop.xlane.xlu0 %3560
        %3562 = vadd.xlane.f32.xlu0 %v3523
        %v3563 = vpop.xlane.xlu0 %3562
        %v3564 = vsub.f32 %v3549, %v3533
        %v3565 = vsub.f32 %v3551, %v3535
        %v3566 = vsub.f32 %v3553, %v3537
        %v3567 = vsub.f32 %v3555, %v3539
        %v3568 = vsub.f32 %v3557, %v3541
        %v3569 = vsub.f32 %v3559, %v3543
        %v3570 = vsub.f32 %v3561, %v3545
        %v3571 = vsub.f32 %v3563, %v3547
        %v3572 = vsel %vm537, %v3533, %v3564
        %v3573 = vsel %vm537, %v3535, %v3565
        %v3574 = vsel %vm537, %v3537, %v3566
        %v3575 = vsel %vm537, %v3539, %v3567
        %v3576 = vsel %vm537, %v3541, %v3568
        %v3577 = vsel %vm537, %v3543, %v3569
        %v3578 = vsel %vm537, %v3545, %v3570
        %v3579 = vsel %vm537, %v3547, %v3571
        %v3580 = vrcp.pop %v3572
        %v3581 = vmul.f32 %v3516, %v3580
        %v3582 = vrcp.pop %v3573
        %v3583 = vmul.f32 %v3517, %v3582
        %v3584 = vrcp.pop %v3574
        %v3585 = vmul.f32 %v3518, %v3584
        %v3586 = vrcp.pop %v3575
        %v3587 = vmul.f32 %v3519, %v3586
        %v3588 = vrcp.pop %v3576
        %v3589 = vmul.f32 %v3520, %v3588
        %v3590 = vrcp.pop %v3577
        %v3591 = vmul.f32 %v3521, %v3590
        %v3592 = vrcp.pop %v3578
        %v3593 = vmul.f32 %v3522, %v3592
        %v3594 = vrcp.pop %v3579
        %v3595 = vmul.f32 %v3523, %v3594
        %v3596 = vpack.c.bf16 %v3583, %v3581
        %v3597 = vpack.c.bf16 %v3587, %v3585
        %v3598 = vpack.c.bf16 %v3591, %v3589
        %v3599 = vpack.c.bf16 %v3595, %v3593
        %s3600 = scalar_lea.vmem %s2, 256
        %v3601 = vld [vmem:[%s3600] sm:$0xf]
        %v3602 = vld [vmem:[%s3600 + $0x4] sm:$0xf]
        %v3603 = vld [vmem:[%s3600 + $0x8] sm:$0xf]
        %v3604 = vld [vmem:[%s3600 + $0xc] sm:$0xf]
        %v3605 = vld [vmem:[%s3600 + $0x10] sm:$0xf]
        %v3606 = vld [vmem:[%s3600 + $0x14] sm:$0xf]
        %v3607 = vld [vmem:[%s3600 + $0x18] sm:$0xf]
        %v3608 = vld [vmem:[%s3600 + $0x1c] sm:$0xf]
        %v3609 = vld [vmem:[%s3600 + $0x20] sm:$0xf]
        %v3610 = vld [vmem:[%s3600 + $0x24] sm:$0xf]
        %v3611 = vld [vmem:[%s3600 + $0x28] sm:$0xf]
        %v3612 = vld [vmem:[%s3600 + $0x2c] sm:$0xf]
        %v3613 = vld [vmem:[%s3600 + $0x30] sm:$0xf]
        %v3614 = vld [vmem:[%s3600 + $0x34] sm:$0xf]
        %v3615 = vld [vmem:[%s3600 + $0x38] sm:$0xf]
        %v3616 = vld [vmem:[%s3600 + $0x3c] sm:$0xf]
        %v3633 = vunpack.c.l.b16 %v3601
        %v3634 = vunpack.c.l.b16 %v3602
        %v3635 = vunpack.c.l.b16 %v3603
        %v3636 = vunpack.c.l.b16 %v3604
        %v3637 = vunpack.c.l.b16 %v3605
        %v3638 = vunpack.c.l.b16 %v3606
        %v3639 = vunpack.c.l.b16 %v3607
        %v3640 = vunpack.c.l.b16 %v3608
        %v3641 = vunpack.c.l.b16 %v3609
        %v3642 = vunpack.c.l.b16 %v3610
        %v3643 = vunpack.c.l.b16 %v3611
        %v3644 = vunpack.c.l.b16 %v3612
        %v3645 = vunpack.c.l.b16 %v3613
        %v3646 = vunpack.c.l.b16 %v3614
        %v3647 = vunpack.c.l.b16 %v3615
        %v3648 = vunpack.c.l.b16 %v3616
        %v3649 = vpack.c.b16 %v3634, %v3633
        %v3650 = vpack.c.b16 %v3636, %v3635
        %v3651 = vpack.c.b16 %v3638, %v3637
        %v3652 = vpack.c.b16 %v3640, %v3639
        %v3653 = vpack.c.b16 %v3642, %v3641
        %v3654 = vpack.c.b16 %v3644, %v3643
        %v3655 = vpack.c.b16 %v3646, %v3645
        %v3656 = vpack.c.b16 %v3648, %v3647
        %3665 = vmatprep.subr.bf16.mxu0 0
        %3666 = vmatpush1.bf16.msra.mxu0 %v3649
        %3667 = vmatprep.subr.bf16.mxu0 0
        %3668 = vmatpush1.bf16.msra.mxu0 %v3650
        %3669 = vmatprep.subr.bf16.mxu0 0
        %3670 = vmatpush1.bf16.msra.mxu0 %v3651
        %3671 = vmatprep.subr.bf16.mxu0 0
        %3672 = vmatpush1.bf16.msra.mxu0 %v3652
        %3673 = vmatprep.subr.bf16.mxu0 0
        %3674 = vmatpush1.bf16.msra.mxu0 %v3653
        %3675 = vmatprep.subr.bf16.mxu0 0
        %3676 = vmatpush1.bf16.msra.mxu0 %v3654
        %3677 = vmatprep.subr.bf16.mxu0 0
        %3678 = vmatpush1.bf16.msra.mxu0 %v3655
        %3679 = vmatprep.subr.bf16.mxu0 0
        %3680 = vmatpush1.bf16.msra.mxu0 %v3656
        %3681 = vmatprep.subr.bf16.mxu0 0
        %3682 = vmatpush1.bf16.msra.mxu0 0
        %3683 = vmatprep.subr.bf16.mxu0 0
        %3684 = vmatpush1.bf16.msra.mxu0 0
        %3685 = vmatprep.subr.bf16.mxu0 0
        %3686 = vmatpush1.bf16.msra.mxu0 0
        %3687 = vmatprep.subr.bf16.mxu0 0
        %3688 = vmatpush1.bf16.msra.mxu0 0
        %3689 = vmatprep.subr.bf16.mxu0 0
        %3690 = vmatpush1.bf16.msra.mxu0 0
        %3691 = vmatprep.subr.bf16.mxu0 0
        %3692 = vmatpush1.bf16.msra.mxu0 0
        %3693 = vmatprep.subr.bf16.mxu0 0
        %3694 = vmatpush1.bf16.msra.mxu0 0
        %3695 = vmatprep.subr.bf16.mxu0 0
        %3696 = vmatpush1.bf16.msra.mxu0 0
        %3697 = vmatprep.mubr.bf16.mxu0 0
        %3698 = vmatmul.mubr.bf16.gmra.mrb[0].mxu0 %v3596
        %v3699 = vpop.f32.mrb[0].mxu0
        %v3700 = vadd.f32 0.0, %v3699
        %v3701 = vpop.f32.mrb[0].mxu0
        %v3702 = vpop.f32.mrb[0].mxu0
        %v3703 = vadd.f32 0.0, %v3702
        %v3704 = vpop.f32.mrb[0].mxu0
        %3705 = vmatprep.mubr.bf16.mxu0 0
        %3706 = vmatmul.mubr.bf16.gmra.mrb[0].mxu0 %v3597
        %v3707 = vpop.f32.mrb[0].mxu0
        %v3708 = vadd.f32 0.0, %v3707
        %v3709 = vpop.f32.mrb[0].mxu0
        %v3710 = vpop.f32.mrb[0].mxu0
        %v3711 = vadd.f32 0.0, %v3710
        %v3712 = vpop.f32.mrb[0].mxu0
        %3713 = vmatprep.mubr.bf16.mxu0 0
        %3714 = vmatmul.mubr.bf16.gmra.mrb[0].mxu0 %v3598
        %v3715 = vpop.f32.mrb[0].mxu0
        %v3716 = vadd.f32 0.0, %v3715
        %v3717 = vpop.f32.mrb[0].mxu0
        %v3718 = vpop.f32.mrb[0].mxu0
        %v3719 = vadd.f32 0.0, %v3718
        %v3720 = vpop.f32.mrb[0].mxu0
        %3721 = vmatprep.mubr.bf16.mxu0 0
        %3722 = vmatmul.mubr.bf16.gmra.mrb[0].mxu0 %v3599
        %v3723 = vpop.f32.mrb[0].mxu0
        %v3724 = vadd.f32 0.0, %v3723
        %v3725 = vpop.f32.mrb[0].mxu0
        %v3726 = vpop.f32.mrb[0].mxu0
        %v3727 = vadd.f32 0.0, %v3726
        %v3728 = vpop.f32.mrb[0].mxu0
        %3729 = vdwg.mxu0
        %v3730 = vadd.f32 %v3252, %v3700
        %v3731 = vadd.f32 %v3253, %v3703
        %v3732 = vadd.f32 %v3254, %v3708
        %v3733 = vadd.f32 %v3255, %v3711
        %v3734 = vadd.f32 %v3256, %v3716
        %v3735 = vadd.f32 %v3257, %v3719
        %v3736 = vadd.f32 %v3258, %v3724
        %v3737 = vadd.f32 %v3259, %v3727
        %v3738 = vpack.c.bf16 %v3731, %v3730
        %v3739 = vpack.c.bf16 %v3733, %v3732
        %v3740 = vpack.c.bf16 %v3735, %v3734
        %v3741 = vpack.c.bf16 %v3737, %v3736
        %s3742 = scalar_lea.vmem %s3, 64
        %v3743 = vld [vmem:[%s3742] sm:$0xf]
        %v3744 = vld [vmem:[%s3742 + $0x4] sm:$0xf]
        %v3745 = vld [vmem:[%s3742 + $0x8] sm:$0xf]
        %v3746 = vld [vmem:[%s3742 + $0xc] sm:$0xf]
        %s3747 = scalar_lea.vmem %s4, 4
        %v3748 = vld [vmem:[%s3747] sm:$0x1]
        %v3750 = vlaneseq
        %v3751 = vshrl.u32 %v3750, 7
        %v3752 = vsub.s32 0, %v3751
        %v3753 = vrot.slane %v3748, %v3752
        %v3759 = vunpack.c.l.b16 %v3743
        %v3760 = vunpack.c.l.b16 %v3744
        %v3761 = vunpack.c.l.b16 %v3745
        %v3762 = vunpack.c.l.b16 %v3746
        %v3763 = vpack.c.b16 %v3760, %v3759
        %v3764 = vpack.c.b16 %v3762, %v3761
        %v3768 = vsel %vm403, %v3738, 0
        %v3771 = vsel %vm403, %v3739, 0
        %v3774 = vsel %vm403, %v3740, 0
        %v3777 = vsel %vm403, %v3741, 0
        %3779 = vmatprep.subr.bf16.mxu0 0
        %3780 = vmatpush1.bf16.msra.mxu0 %v3763
        %3781 = vmatprep.subr.bf16.mxu0 0
        %3782 = vmatpush1.bf16.msra.mxu0 %v3764
        %3783 = vmatprep.subr.bf16.mxu0 0
        %3784 = vmatpush1.bf16.msra.mxu0 0
        %3785 = vmatprep.subr.bf16.mxu0 0
        %3786 = vmatpush1.bf16.msra.mxu0 0
        %3787 = vmatprep.subr.bf16.mxu0 0
        %3788 = vmatpush1.bf16.msra.mxu0 0
        %3789 = vmatprep.subr.bf16.mxu0 0
        %3790 = vmatpush1.bf16.msra.mxu0 0
        %3791 = vmatprep.subr.bf16.mxu0 0
        %3792 = vmatpush1.bf16.msra.mxu0 0
        %3793 = vmatprep.subr.bf16.mxu0 0
        %3794 = vmatpush1.bf16.msra.mxu0 0
        %3795 = vmatprep.subr.bf16.mxu0 0
        %3796 = vmatpush1.bf16.msra.mxu0 0
        %3797 = vmatprep.subr.bf16.mxu0 0
        %3798 = vmatpush1.bf16.msra.mxu0 0
        %3799 = vmatprep.subr.bf16.mxu0 0
        %3800 = vmatpush1.bf16.msra.mxu0 0
        %3801 = vmatprep.subr.bf16.mxu0 0
        %3802 = vmatpush1.bf16.msra.mxu0 0
        %3803 = vmatprep.subr.bf16.mxu0 0
        %3804 = vmatpush1.bf16.msra.mxu0 0
        %3805 = vmatprep.subr.bf16.mxu0 0
        %3806 = vmatpush1.bf16.msra.mxu0 0
        %3807 = vmatprep.subr.bf16.mxu0 0
        %3808 = vmatpush1.bf16.msra.mxu0 0
        %3809 = vmatprep.subr.bf16.mxu0 0
        %3810 = vmatpush1.bf16.msra.mxu0 0
        %3811 = vmatprep.mubr.bf16.mxu0 0
        %3812 = vmatmul.mubr.bf16.gmra.mrb[0].mxu0 %v3768
        %v3813 = vpop.f32.mrb[0].mxu0
        %v3814 = vadd.f32 %v3753, %v3813
        %v3815 = vpop.f32.mrb[0].mxu0
        %v3816 = vpop.f32.mrb[0].mxu0
        %v3817 = vadd.f32 %v3753, %v3816
        %v3818 = vpop.f32.mrb[0].mxu0
        %3819 = vmatprep.mubr.bf16.mxu0 0
        %3820 = vmatmul.mubr.bf16.gmra.mrb[0].mxu0 %v3771
        %v3821 = vpop.f32.mrb[0].mxu0
        %v3822 = vadd.f32 %v3753, %v3821
        %v3823 = vpop.f32.mrb[0].mxu0
        %v3824 = vpop.f32.mrb[0].mxu0
        %v3825 = vadd.f32 %v3753, %v3824
        %v3826 = vpop.f32.mrb[0].mxu0
        %3827 = vmatprep.mubr.bf16.mxu0 0
        %3828 = vmatmul.mubr.bf16.gmra.mrb[0].mxu0 %v3774
        %v3829 = vpop.f32.mrb[0].mxu0
        %v3830 = vadd.f32 %v3753, %v3829
        %v3831 = vpop.f32.mrb[0].mxu0
        %v3832 = vpop.f32.mrb[0].mxu0
        %v3833 = vadd.f32 %v3753, %v3832
        %v3834 = vpop.f32.mrb[0].mxu0
        %3835 = vmatprep.mubr.bf16.mxu0 0
        %3836 = vmatmul.mubr.bf16.gmra.mrb[0].mxu0 %v3777
        %v3837 = vpop.f32.mrb[0].mxu0
        %v3838 = vadd.f32 %v3753, %v3837
        %v3839 = vpop.f32.mrb[0].mxu0
        %v3840 = vpop.f32.mrb[0].mxu0
        %v3841 = vadd.f32 %v3753, %v3840
        %v3842 = vpop.f32.mrb[0].mxu0
        %3843 = vdwg.mxu0
        %v3844 = vsel %vm403, %v3814, 0.0
        %3845 = vadd.xlane.f32.xlu0 %v3844
        %v3846 = vpop.xlane.xlu0 %3845
        %v3847 = vsel %vm403, %v3817, 0.0
        %3848 = vadd.xlane.f32.xlu0 %v3847
        %v3849 = vpop.xlane.xlu0 %3848
        %v3850 = vsel %vm403, %v3822, 0.0
        %3851 = vadd.xlane.f32.xlu0 %v3850
        %v3852 = vpop.xlane.xlu0 %3851
        %v3853 = vsel %vm403, %v3825, 0.0
        %3854 = vadd.xlane.f32.xlu0 %v3853
        %v3855 = vpop.xlane.xlu0 %3854
        %v3856 = vsel %vm403, %v3830, 0.0
        %3857 = vadd.xlane.f32.xlu0 %v3856
        %v3858 = vpop.xlane.xlu0 %3857
        %v3859 = vsel %vm403, %v3833, 0.0
        %3860 = vadd.xlane.f32.xlu0 %v3859
        %v3861 = vpop.xlane.xlu0 %3860
        %v3862 = vsel %vm403, %v3838, 0.0
        %3863 = vadd.xlane.f32.xlu0 %v3862
        %v3864 = vpop.xlane.xlu0 %3863
        %v3865 = vsel %vm403, %v3841, 0.0
        %3866 = vadd.xlane.f32.xlu0 %v3865
        %v3867 = vpop.xlane.xlu0 %3866
        %v3868 = vmul.f32 %v3846, 0.03125
        %v3869 = vmul.f32 %v3849, 0.03125
        %v3870 = vmul.f32 %v3852, 0.03125
        %v3871 = vmul.f32 %v3855, 0.03125
        %v3872 = vmul.f32 %v3858, 0.03125
        %v3873 = vmul.f32 %v3861, 0.03125
        %v3874 = vmul.f32 %v3864, 0.03125
        %v3875 = vmul.f32 %v3867, 0.03125
        %v3876 = vsub.f32 %v3814, %v3868
        %v3877 = vsub.f32 %v3817, %v3869
        %v3878 = vsub.f32 %v3822, %v3870
        %v3879 = vsub.f32 %v3825, %v3871
        %v3880 = vsub.f32 %v3830, %v3872
        %v3881 = vsub.f32 %v3833, %v3873
        %v3882 = vsub.f32 %v3838, %v3874
        %v3883 = vsub.f32 %v3841, %v3875
        %v3884 = vmul.f32 %v3876, %v3876
        %v3885 = vmul.f32 %v3877, %v3877
        %v3886 = vmul.f32 %v3878, %v3878
        %v3887 = vmul.f32 %v3879, %v3879
        %v3888 = vmul.f32 %v3880, %v3880
        %v3889 = vmul.f32 %v3881, %v3881
        %v3890 = vmul.f32 %v3882, %v3882
        %v3891 = vmul.f32 %v3883, %v3883
        %v3892 = vsel %vm403, %v3884, 0.0
        %3893 = vadd.xlane.f32.xlu0 %v3892
        %v3894 = vpop.xlane.xlu0 %3893
        %v3895 = vsel %vm403, %v3885, 0.0
        %3896 = vadd.xlane.f32.xlu0 %v3895
        %v3897 = vpop.xlane.xlu0 %3896
        %v3898 = vsel %vm403, %v3886, 0.0
        %3899 = vadd.xlane.f32.xlu0 %v3898
        %v3900 = vpop.xlane.xlu0 %3899
        %v3901 = vsel %vm403, %v3887, 0.0
        %3902 = vadd.xlane.f32.xlu0 %v3901
        %v3903 = vpop.xlane.xlu0 %3902
        %v3904 = vsel %vm403, %v3888, 0.0
        %3905 = vadd.xlane.f32.xlu0 %v3904
        %v3906 = vpop.xlane.xlu0 %3905
        %v3907 = vsel %vm403, %v3889, 0.0
        %3908 = vadd.xlane.f32.xlu0 %v3907
        %v3909 = vpop.xlane.xlu0 %3908
        %v3910 = vsel %vm403, %v3890, 0.0
        %3911 = vadd.xlane.f32.xlu0 %v3910
        %v3912 = vpop.xlane.xlu0 %3911
        %v3913 = vsel %vm403, %v3891, 0.0
        %3914 = vadd.xlane.f32.xlu0 %v3913
        %v3915 = vpop.xlane.xlu0 %3914
        %v3916 = vmul.f32 %v3894, 0.03125
        %v3917 = vmul.f32 %v3897, 0.03125
        %v3918 = vmul.f32 %v3900, 0.03125
        %v3919 = vmul.f32 %v3903, 0.03125
        %v3920 = vmul.f32 %v3906, 0.03125
        %v3921 = vmul.f32 %v3909, 0.03125
        %v3922 = vmul.f32 %v3912, 0.03125
        %v3923 = vmul.f32 %v3915, 0.03125
        %v3924 = vadd.f32 %v3916, 1e-05
        %v3925 = vadd.f32 %v3917, 1e-05
        %v3926 = vadd.f32 %v3918, 1e-05
        %v3927 = vadd.f32 %v3919, 1e-05
        %v3928 = vadd.f32 %v3920, 1e-05
        %v3929 = vadd.f32 %v3921, 1e-05
        %v3930 = vadd.f32 %v3922, 1e-05
        %v3931 = vadd.f32 %v3923, 1e-05
        %v3932 = vrsqrt.pop %v3924
        %v3933 = vrsqrt.pop %v3925
        %v3934 = vrsqrt.pop %v3926
        %v3935 = vrsqrt.pop %v3927
        %v3936 = vrsqrt.pop %v3928
        %v3937 = vrsqrt.pop %v3929
        %v3938 = vrsqrt.pop %v3930
        %v3939 = vrsqrt.pop %v3931
        %v3940 = vmul.f32 %v3876, %v3932
        %v3941 = vmul.f32 %v3877, %v3933
        %v3942 = vmul.f32 %v3878, %v3934
        %v3943 = vmul.f32 %v3879, %v3935
        %v3944 = vmul.f32 %v3880, %v3936
        %v3945 = vmul.f32 %v3881, %v3937
        %v3946 = vmul.f32 %v3882, %v3938
        %v3947 = vmul.f32 %v3883, %v3939
        %s3948 = scalar_lea.vmem %s5, 4
        %v3949 = vld [vmem:[%s3948] sm:$0x1]
        %v3951 = vlaneseq
        %v3952 = vshrl.u32 %v3951, 7
        %v3953 = vsub.s32 0, %v3952
        %v3954 = vrot.slane %v3949, %v3953
        %v3956 = vmul.f32 %v3940, %v3954
        %v3957 = vmul.f32 %v3941, %v3954
        %v3958 = vmul.f32 %v3942, %v3954
        %v3959 = vmul.f32 %v3943, %v3954
        %v3960 = vmul.f32 %v3944, %v3954
        %v3961 = vmul.f32 %v3945, %v3954
        %v3962 = vmul.f32 %v3946, %v3954
        %v3963 = vmul.f32 %v3947, %v3954
        %s3964 = scalar_lea.vmem %s6, 4
        %v3965 = vld [vmem:[%s3964] sm:$0x1]
        %v3967 = vlaneseq
        %v3968 = vshrl.u32 %v3967, 7
        %v3969 = vsub.s32 0, %v3968
        %v3970 = vrot.slane %v3965, %v3969
        %v3972 = vadd.f32 %v3956, %v3970
        %v3973 = vadd.f32 %v3957, %v3970
        %v3974 = vadd.f32 %v3958, %v3970
        %v3975 = vadd.f32 %v3959, %v3970
        %v3976 = vadd.f32 %v3960, %v3970
        %v3977 = vadd.f32 %v3961, %v3970
        %v3978 = vadd.f32 %v3962, %v3970
        %v3979 = vadd.f32 %v3963, %v3970
        %v3980 = vpack.c.bf16 %v3973, %v3972
        %v3981 = vpack.c.bf16 %v3975, %v3974
        %v3982 = vpack.c.bf16 %v3977, %v3976
        %v3983 = vpack.c.bf16 %v3979, %v3978
        %s3984 = scalar_lea.vmem %s1, 80
        %v3985 = vld [vmem:[%s3984] sm:$0xf]
        %v3986 = vld [vmem:[%s3984 + $0x4] sm:$0xf]
        %v3987 = vld [vmem:[%s3984 + $0x8] sm:$0xf]
        %v3988 = vld [vmem:[%s3984 + $0xc] sm:$0xf]
        %v3993 = vunpack.c.l.b16 %v3985
        %v3994 = vunpack.c.l.b16 %v3986
        %v3995 = vunpack.c.l.b16 %v3987
        %v3996 = vunpack.c.l.b16 %v3988
        %v3997 = vpack.c.b16 %v3994, %v3993
        %v3998 = vpack.c.b16 %v3996, %v3995
        %v4002 = vsel %vm403, %v3980, 0
        %v4005 = vsel %vm403, %v3981, 0
        %v4008 = vsel %vm403, %v3982, 0
        %v4011 = vsel %vm403, %v3983, 0
        %4013 = vmatprep.subr.bf16.mxu0 0
        %4014 = vmatpush1.bf16.msra.mxu0 %v3997
        %4015 = vmatprep.subr.bf16.mxu0 0
        %4016 = vmatpush1.bf16.msra.mxu0 %v3998
        %4017 = vmatprep.subr.bf16.mxu0 0
        %4018 = vmatpush1.bf16.msra.mxu0 0
        %4019 = vmatprep.subr.bf16.mxu0 0
        %4020 = vmatpush1.bf16.msra.mxu0 0
        %4021 = vmatprep.subr.bf16.mxu0 0
        %4022 = vmatpush1.bf16.msra.mxu0 0
        %4023 = vmatprep.subr.bf16.mxu0 0
        %4024 = vmatpush1.bf16.msra.mxu0 0
        %4025 = vmatprep.subr.bf16.mxu0 0
        %4026 = vmatpush1.bf16.msra.mxu0 0
        %4027 = vmatprep.subr.bf16.mxu0 0
        %4028 = vmatpush1.bf16.msra.mxu0 0
        %4029 = vmatprep.subr.bf16.mxu0 0
        %4030 = vmatpush1.bf16.msra.mxu0 0
        %4031 = vmatprep.subr.bf16.mxu0 0
        %4032 = vmatpush1.bf16.msra.mxu0 0
        %4033 = vmatprep.subr.bf16.mxu0 0
        %4034 = vmatpush1.bf16.msra.mxu0 0
        %4035 = vmatprep.subr.bf16.mxu0 0
        %4036 = vmatpush1.bf16.msra.mxu0 0
        %4037 = vmatprep.subr.bf16.mxu0 0
        %4038 = vmatpush1.bf16.msra.mxu0 0
        %4039 = vmatprep.subr.bf16.mxu0 0
        %4040 = vmatpush1.bf16.msra.mxu0 0
        %4041 = vmatprep.subr.bf16.mxu0 0
        %4042 = vmatpush1.bf16.msra.mxu0 0
        %4043 = vmatprep.subr.bf16.mxu0 0
        %4044 = vmatpush1.bf16.msra.mxu0 0
        %4045 = vmatprep.mubr.bf16.mxu0 0
        %4046 = vmatmul.mubr.bf16.gmra.mrb[0].mxu0 %v4002
        %v4047 = vpop.f32.mrb[0].mxu0
        %v4048 = vadd.f32 0.0, %v4047
        %v4049 = vpop.f32.mrb[0].mxu0
        %v4050 = vpop.f32.mrb[0].mxu0
        %v4051 = vadd.f32 0.0, %v4050
        %v4052 = vpop.f32.mrb[0].mxu0
        %4053 = vmatprep.mubr.bf16.mxu0 0
        %4054 = vmatmul.mubr.bf16.gmra.mrb[0].mxu0 %v4005
        %v4055 = vpop.f32.mrb[0].mxu0
        %v4056 = vadd.f32 0.0, %v4055
        %v4057 = vpop.f32.mrb[0].mxu0
        %v4058 = vpop.f32.mrb[0].mxu0
        %v4059 = vadd.f32 0.0, %v4058
        %v4060 = vpop.f32.mrb[0].mxu0
        %4061 = vmatprep.mubr.bf16.mxu0 0
        %4062 = vmatmul.mubr.bf16.gmra.mrb[0].mxu0 %v4008
        %v4063 = vpop.f32.mrb[0].mxu0
        %v4064 = vadd.f32 0.0, %v4063
        %v4065 = vpop.f32.mrb[0].mxu0
        %v4066 = vpop.f32.mrb[0].mxu0
        %v4067 = vadd.f32 0.0, %v4066
        %v4068 = vpop.f32.mrb[0].mxu0
        %4069 = vmatprep.mubr.bf16.mxu0 0
        %4070 = vmatmul.mubr.bf16.gmra.mrb[0].mxu0 %v4011
        %v4071 = vpop.f32.mrb[0].mxu0
        %v4072 = vadd.f32 0.0, %v4071
        %v4073 = vpop.f32.mrb[0].mxu0
        %v4074 = vpop.f32.mrb[0].mxu0
        %v4075 = vadd.f32 0.0, %v4074
        %v4076 = vpop.f32.mrb[0].mxu0
        %4077 = vdwg.mxu0
        %v4078 = vmax.f32 %v4048, %v4064
        %v4079 = vmax.f32 %v4051, %v4067
        %v4080 = vmax.f32 %v4056, %v4072
        %v4081 = vmax.f32 %v4059, %v4075
        %v4082 = vmax.f32 %v4078, %v4079
        %v4083 = vmax.f32 %v4080, %v4081
        %v4084 = vmax.f32 %v4082, %v4083
        %v4085 = vrot.slane %v4048, 4
        %v4086 = vmax.f32 %v4048, %v4085
        %v4087 = vrot.slane %v4086, 2
        %v4088 = vmax.f32 %v4086, %v4087
        %v4089 = vrot.slane %v4088, 1
        %v4090 = vmax.f32 %v4088, %v4089
        %v4091 = vrot.slane %v4051, 4
        %v4092 = vmax.f32 %v4051, %v4091
        %v4093 = vrot.slane %v4092, 2
        %v4094 = vmax.f32 %v4092, %v4093
        %v4095 = vrot.slane %v4094, 1
        %v4096 = vmax.f32 %v4094, %v4095
        %v4097 = vrot.slane %v4056, 4
        %v4098 = vmax.f32 %v4056, %v4097
        %v4099 = vrot.slane %v4098, 2
        %v4100 = vmax.f32 %v4098, %v4099
        %v4101 = vrot.slane %v4100, 1
        %v4102 = vmax.f32 %v4100, %v4101
        %v4103 = vrot.slane %v4059, 4
        %v4104 = vmax.f32 %v4059, %v4103
        %v4105 = vrot.slane %v4104, 2
        %v4106 = vmax.f32 %v4104, %v4105
        %v4107 = vrot.slane %v4106, 1
        %v4108 = vmax.f32 %v4106, %v4107
        %v4109 = vrot.slane %v4064, 4
        %v4110 = vmax.f32 %v4064, %v4109
        %v4111 = vrot.slane %v4110, 2
        %v4112 = vmax.f32 %v4110, %v4111
        %v4113 = vrot.slane %v4112, 1
        %v4114 = vmax.f32 %v4112, %v4113
        %v4115 = vrot.slane %v4067, 4
        %v4116 = vmax.f32 %v4067, %v4115
        %v4117 = vrot.slane %v4116, 2
        %v4118 = vmax.f32 %v4116, %v4117
        %v4119 = vrot.slane %v4118, 1
        %v4120 = vmax.f32 %v4118, %v4119
        %v4121 = vrot.slane %v4072, 4
        %v4122 = vmax.f32 %v4072, %v4121
        %v4123 = vrot.slane %v4122, 2
        %v4124 = vmax.f32 %v4122, %v4123
        %v4125 = vrot.slane %v4124, 1
        %v4126 = vmax.f32 %v4124, %v4125
        %v4127 = vrot.slane %v4075, 4
        %v4128 = vmax.f32 %v4075, %v4127
        %v4129 = vrot.slane %v4128, 2
        %v4130 = vmax.f32 %v4128, %v4129
        %v4131 = vrot.slane %v4130, 1
        %v4132 = vmax.f32 %v4130, %v4131
        %v4133 = vsel %vm537, %v4084, %v4090
        %v4134 = vsel %vm537, %v4084, %v4096
        %v4135 = vsel %vm537, %v4084, %v4102
        %v4136 = vsel %vm537, %v4084, %v4108
        %v4137 = vsel %vm537, %v4084, %v4114
        %v4138 = vsel %vm537, %v4084, %v4120
        %v4139 = vsel %vm537, %v4084, %v4126
        %v4140 = vsel %vm537, %v4084, %v4132
        %v4141 = vsub.f32 %v4048, %v4133
        %v4142 = vsub.f32 %v4051, %v4134
        %v4143 = vsub.f32 %v4056, %v4135
        %v4144 = vsub.f32 %v4059, %v4136
        %v4145 = vsub.f32 %v4064, %v4137
        %v4146 = vsub.f32 %v4067, %v4138
        %v4147 = vsub.f32 %v4072, %v4139
        %v4148 = vsub.f32 %v4075, %v4140
        %v4149 = vmul.f32 %v4141, 1.442695
        %v4150 = vpow.pop %v4149
        %v4151 = vmul.f32 %v4142, 1.442695
        %v4152 = vpow.pop %v4151
        %v4153 = vmul.f32 %v4143, 1.442695
        %v4154 = vpow.pop %v4153
        %v4155 = vmul.f32 %v4144, 1.442695
        %v4156 = vpow.pop %v4155
        %v4157 = vmul.f32 %v4145, 1.442695
        %v4158 = vpow.pop %v4157
        %v4159 = vmul.f32 %v4146, 1.442695
        %v4160 = vpow.pop %v4159
        %v4161 = vmul.f32 %v4147, 1.442695
        %v4162 = vpow.pop %v4161
        %v4163 = vmul.f32 %v4148, 1.442695
        %v4164 = vpow.pop %v4163
        %v4165 = vadd.f32 %v4150, %v4152
        %v4166 = vadd.f32 %v4165, %v4154
        %v4167 = vadd.f32 %v4166, %v4156
        %v4168 = vadd.f32 %v4167, %v4158
        %v4169 = vadd.f32 %v4168, %v4160
        %v4170 = vadd.f32 %v4169, %v4162
        %v4171 = vadd.f32 %v4170, %v4164
        %v4172 = vrot.slane %v4150, 4
        %v4173 = vadd.f32 %v4150, %v4172
        %v4174 = vrot.slane %v4173, 2
        %v4175 = vadd.f32 %v4173, %v4174
        %v4176 = vrot.slane %v4175, 1
        %v4177 = vadd.f32 %v4175, %v4176
        %v4178 = vrot.slane %v4152, 4
        %v4179 = vadd.f32 %v4152, %v4178
        %v4180 = vrot.slane %v4179, 2
        %v4181 = vadd.f32 %v4179, %v4180
        %v4182 = vrot.slane %v4181, 1
        %v4183 = vadd.f32 %v4181, %v4182
        %v4184 = vrot.slane %v4154, 4
        %v4185 = vadd.f32 %v4154, %v4184
        %v4186 = vrot.slane %v4185, 2
        %v4187 = vadd.f32 %v4185, %v4186
        %v4188 = vrot.slane %v4187, 1
        %v4189 = vadd.f32 %v4187, %v4188
        %v4190 = vrot.slane %v4156, 4
        %v4191 = vadd.f32 %v4156, %v4190
        %v4192 = vrot.slane %v4191, 2
        %v4193 = vadd.f32 %v4191, %v4192
        %v4194 = vrot.slane %v4193, 1
        %v4195 = vadd.f32 %v4193, %v4194
        %v4196 = vrot.slane %v4158, 4
        %v4197 = vadd.f32 %v4158, %v4196
        %v4198 = vrot.slane %v4197, 2
        %v4199 = vadd.f32 %v4197, %v4198
        %v4200 = vrot.slane %v4199, 1
        %v4201 = vadd.f32 %v4199, %v4200
        %v4202 = vrot.slane %v4160, 4
        %v4203 = vadd.f32 %v4160, %v4202
        %v4204 = vrot.slane %v4203, 2
        %v4205 = vadd.f32 %v4203, %v4204
        %v4206 = vrot.slane %v4205, 1
        %v4207 = vadd.f32 %v4205, %v4206
        %v4208 = vrot.slane %v4162, 4
        %v4209 = vadd.f32 %v4162, %v4208
        %v4210 = vrot.slane %v4209, 2
        %v4211 = vadd.f32 %v4209, %v4210
        %v4212 = vrot.slane %v4211, 1
        %v4213 = vadd.f32 %v4211, %v4212
        %v4214 = vrot.slane %v4164, 4
        %v4215 = vadd.f32 %v4164, %v4214
        %v4216 = vrot.slane %v4215, 2
        %v4217 = vadd.f32 %v4215, %v4216
        %v4218 = vrot.slane %v4217, 1
        %v4219 = vadd.f32 %v4217, %v4218
        %v4220 = vsel %vm537, %v4171, %v4177
        %v4221 = vsel %vm537, %v4171, %v4183
        %v4222 = vsel %vm537, %v4171, %v4189
        %v4223 = vsel %vm537, %v4171, %v4195
        %v4224 = vsel %vm537, %v4171, %v4201
        %v4225 = vsel %vm537, %v4171, %v4207
        %v4226 = vsel %vm537, %v4171, %v4213
        %v4227 = vsel %vm537, %v4171, %v4219
        %v4228 = vrcp.pop %v4220
        %v4229 = vrcp.pop %v4221
        %v4230 = vrcp.pop %v4222
        %v4231 = vrcp.pop %v4223
        %v4232 = vrcp.pop %v4224
        %v4233 = vrcp.pop %v4225
        %v4234 = vrcp.pop %v4226
        %v4235 = vrcp.pop %v4227
        %v4236 = vmul.f32 %v4150, %v4228
        %v4237 = vmul.f32 %v4152, %v4229
        %v4238 = vmul.f32 %v4154, %v4230
        %v4239 = vmul.f32 %v4156, %v4231
        %v4240 = vmul.f32 %v4158, %v4232
        %v4241 = vmul.f32 %v4160, %v4233
        %v4242 = vmul.f32 %v4162, %v4234
        %v4243 = vmul.f32 %v4164, %v4235
        %v4244 = vsel %vm537, %v4236, 0.0
        %v4245 = vsel %vm537, %v4237, 0.0
        %v4246 = vsel %vm537, %v4238, 0.0
        %v4247 = vsel %vm537, %v4239, 0.0
        %v4248 = vsel %vm537, %v4240, 0.0
        %v4249 = vsel %vm537, %v4241, 0.0
        %v4250 = vsel %vm537, %v4242, 0.0
        %v4251 = vsel %vm537, %v4243, 0.0
        %4252 = vadd.xlane.f32.xlu0 %v4244
        %v4253 = vpop.xlane.xlu0 %4252
        %4254 = vadd.xlane.f32.xlu0 %v4245
        %v4255 = vpop.xlane.xlu0 %4254
        %4256 = vadd.xlane.f32.xlu0 %v4246
        %v4257 = vpop.xlane.xlu0 %4256
        %4258 = vadd.xlane.f32.xlu0 %v4247
        %v4259 = vpop.xlane.xlu0 %4258
        %4260 = vadd.xlane.f32.xlu0 %v4248
        %v4261 = vpop.xlane.xlu0 %4260
        %4262 = vadd.xlane.f32.xlu0 %v4249
        %v4263 = vpop.xlane.xlu0 %4262
        %4264 = vadd.xlane.f32.xlu0 %v4250
        %v4265 = vpop.xlane.xlu0 %4264
        %4266 = vadd.xlane.f32.xlu0 %v4251
        %v4267 = vpop.xlane.xlu0 %4266
        %4268 = vadd.xlane.f32.xlu0 %v4236
        %v4269 = vpop.xlane.xlu0 %4268
        %4270 = vadd.xlane.f32.xlu0 %v4237
        %v4271 = vpop.xlane.xlu0 %4270
        %4272 = vadd.xlane.f32.xlu0 %v4238
        %v4273 = vpop.xlane.xlu0 %4272
        %4274 = vadd.xlane.f32.xlu0 %v4239
        %v4275 = vpop.xlane.xlu0 %4274
        %4276 = vadd.xlane.f32.xlu0 %v4240
        %v4277 = vpop.xlane.xlu0 %4276
        %4278 = vadd.xlane.f32.xlu0 %v4241
        %v4279 = vpop.xlane.xlu0 %4278
        %4280 = vadd.xlane.f32.xlu0 %v4242
        %v4281 = vpop.xlane.xlu0 %4280
        %4282 = vadd.xlane.f32.xlu0 %v4243
        %v4283 = vpop.xlane.xlu0 %4282
        %v4284 = vsub.f32 %v4269, %v4253
        %v4285 = vsub.f32 %v4271, %v4255
        %v4286 = vsub.f32 %v4273, %v4257
        %v4287 = vsub.f32 %v4275, %v4259
        %v4288 = vsub.f32 %v4277, %v4261
        %v4289 = vsub.f32 %v4279, %v4263
        %v4290 = vsub.f32 %v4281, %v4265
        %v4291 = vsub.f32 %v4283, %v4267
        %v4292 = vsel %vm537, %v4253, %v4284
        %v4293 = vsel %vm537, %v4255, %v4285
        %v4294 = vsel %vm537, %v4257, %v4286
        %v4295 = vsel %vm537, %v4259, %v4287
        %v4296 = vsel %vm537, %v4261, %v4288
        %v4297 = vsel %vm537, %v4263, %v4289
        %v4298 = vsel %vm537, %v4265, %v4290
        %v4299 = vsel %vm537, %v4267, %v4291
        %v4300 = vrcp.pop %v4292
        %v4301 = vmul.f32 %v4236, %v4300
        %v4302 = vrcp.pop %v4293
        %v4303 = vmul.f32 %v4237, %v4302
        %v4304 = vrcp.pop %v4294
        %v4305 = vmul.f32 %v4238, %v4304
        %v4306 = vrcp.pop %v4295
        %v4307 = vmul.f32 %v4239, %v4306
        %v4308 = vrcp.pop %v4296
        %v4309 = vmul.f32 %v4240, %v4308
        %v4310 = vrcp.pop %v4297
        %v4311 = vmul.f32 %v4241, %v4310
        %v4312 = vrcp.pop %v4298
        %v4313 = vmul.f32 %v4242, %v4312
        %v4314 = vrcp.pop %v4299
        %v4315 = vmul.f32 %v4243, %v4314
        %v4316 = vpack.c.bf16 %v4303, %v4301
        %v4317 = vpack.c.bf16 %v4307, %v4305
        %v4318 = vpack.c.bf16 %v4311, %v4309
        %v4319 = vpack.c.bf16 %v4315, %v4313
        %s4320 = scalar_lea.vmem %s2, 320
        %v4321 = vld [vmem:[%s4320] sm:$0xf]
        %v4322 = vld [vmem:[%s4320 + $0x4] sm:$0xf]
        %v4323 = vld [vmem:[%s4320 + $0x8] sm:$0xf]
        %v4324 = vld [vmem:[%s4320 + $0xc] sm:$0xf]
        %v4325 = vld [vmem:[%s4320 + $0x10] sm:$0xf]
        %v4326 = vld [vmem:[%s4320 + $0x14] sm:$0xf]
        %v4327 = vld [vmem:[%s4320 + $0x18] sm:$0xf]
        %v4328 = vld [vmem:[%s4320 + $0x1c] sm:$0xf]
        %v4329 = vld [vmem:[%s4320 + $0x20] sm:$0xf]
        %v4330 = vld [vmem:[%s4320 + $0x24] sm:$0xf]
        %v4331 = vld [vmem:[%s4320 + $0x28] sm:$0xf]
        %v4332 = vld [vmem:[%s4320 + $0x2c] sm:$0xf]
        %v4333 = vld [vmem:[%s4320 + $0x30] sm:$0xf]
        %v4334 = vld [vmem:[%s4320 + $0x34] sm:$0xf]
        %v4335 = vld [vmem:[%s4320 + $0x38] sm:$0xf]
        %v4336 = vld [vmem:[%s4320 + $0x3c] sm:$0xf]
        %v4353 = vunpack.c.l.b16 %v4321
        %v4354 = vunpack.c.l.b16 %v4322
        %v4355 = vunpack.c.l.b16 %v4323
        %v4356 = vunpack.c.l.b16 %v4324
        %v4357 = vunpack.c.l.b16 %v4325
        %v4358 = vunpack.c.l.b16 %v4326
        %v4359 = vunpack.c.l.b16 %v4327
        %v4360 = vunpack.c.l.b16 %v4328
        %v4361 = vunpack.c.l.b16 %v4329
        %v4362 = vunpack.c.l.b16 %v4330
        %v4363 = vunpack.c.l.b16 %v4331
        %v4364 = vunpack.c.l.b16 %v4332
        %v4365 = vunpack.c.l.b16 %v4333
        %v4366 = vunpack.c.l.b16 %v4334
        %v4367 = vunpack.c.l.b16 %v4335
        %v4368 = vunpack.c.l.b16 %v4336
        %v4369 = vpack.c.b16 %v4354, %v4353
        %v4370 = vpack.c.b16 %v4356, %v4355
        %v4371 = vpack.c.b16 %v4358, %v4357
        %v4372 = vpack.c.b16 %v4360, %v4359
        %v4373 = vpack.c.b16 %v4362, %v4361
        %v4374 = vpack.c.b16 %v4364, %v4363
        %v4375 = vpack.c.b16 %v4366, %v4365
        %v4376 = vpack.c.b16 %v4368, %v4367
        %4385 = vmatprep.subr.bf16.mxu0 0
        %4386 = vmatpush1.bf16.msra.mxu0 %v4369
        %4387 = vmatprep.subr.bf16.mxu0 0
        %4388 = vmatpush1.bf16.msra.mxu0 %v4370
        %4389 = vmatprep.subr.bf16.mxu0 0
        %4390 = vmatpush1.bf16.msra.mxu0 %v4371
        %4391 = vmatprep.subr.bf16.mxu0 0
        %4392 = vmatpush1.bf16.msra.mxu0 %v4372
        %4393 = vmatprep.subr.bf16.mxu0 0
        %4394 = vmatpush1.bf16.msra.mxu0 %v4373
        %4395 = vmatprep.subr.bf16.mxu0 0
        %4396 = vmatpush1.bf16.msra.mxu0 %v4374
        %4397 = vmatprep.subr.bf16.mxu0 0
        %4398 = vmatpush1.bf16.msra.mxu0 %v4375
        %4399 = vmatprep.subr.bf16.mxu0 0
        %4400 = vmatpush1.bf16.msra.mxu0 %v4376
        %4401 = vmatprep.subr.bf16.mxu0 0
        %4402 = vmatpush1.bf16.msra.mxu0 0
        %4403 = vmatprep.subr.bf16.mxu0 0
        %4404 = vmatpush1.bf16.msra.mxu0 0
        %4405 = vmatprep.subr.bf16.mxu0 0
        %4406 = vmatpush1.bf16.msra.mxu0 0
        %4407 = vmatprep.subr.bf16.mxu0 0
        %4408 = vmatpush1.bf16.msra.mxu0 0
        %4409 = vmatprep.subr.bf16.mxu0 0
        %4410 = vmatpush1.bf16.msra.mxu0 0
        %4411 = vmatprep.subr.bf16.mxu0 0
        %4412 = vmatpush1.bf16.msra.mxu0 0
        %4413 = vmatprep.subr.bf16.mxu0 0
        %4414 = vmatpush1.bf16.msra.mxu0 0
        %4415 = vmatprep.subr.bf16.mxu0 0
        %4416 = vmatpush1.bf16.msra.mxu0 0
        %4417 = vmatprep.mubr.bf16.mxu0 0
        %4418 = vmatmul.mubr.bf16.gmra.mrb[0].mxu0 %v4316
        %v4419 = vpop.f32.mrb[0].mxu0
        %v4420 = vadd.f32 0.0, %v4419
        %v4421 = vpop.f32.mrb[0].mxu0
        %v4422 = vpop.f32.mrb[0].mxu0
        %v4423 = vadd.f32 0.0, %v4422
        %v4424 = vpop.f32.mrb[0].mxu0
        %4425 = vmatprep.mubr.bf16.mxu0 0
        %4426 = vmatmul.mubr.bf16.gmra.mrb[0].mxu0 %v4317
        %v4427 = vpop.f32.mrb[0].mxu0
        %v4428 = vadd.f32 0.0, %v4427
        %v4429 = vpop.f32.mrb[0].mxu0
        %v4430 = vpop.f32.mrb[0].mxu0
        %v4431 = vadd.f32 0.0, %v4430
        %v4432 = vpop.f32.mrb[0].mxu0
        %4433 = vmatprep.mubr.bf16.mxu0 0
        %4434 = vmatmul.mubr.bf16.gmra.mrb[0].mxu0 %v4318
        %v4435 = vpop.f32.mrb[0].mxu0
        %v4436 = vadd.f32 0.0, %v4435
        %v4437 = vpop.f32.mrb[0].mxu0
        %v4438 = vpop.f32.mrb[0].mxu0
        %v4439 = vadd.f32 0.0, %v4438
        %v4440 = vpop.f32.mrb[0].mxu0
        %4441 = vmatprep.mubr.bf16.mxu0 0
        %4442 = vmatmul.mubr.bf16.gmra.mrb[0].mxu0 %v4319
        %v4443 = vpop.f32.mrb[0].mxu0
        %v4444 = vadd.f32 0.0, %v4443
        %v4445 = vpop.f32.mrb[0].mxu0
        %v4446 = vpop.f32.mrb[0].mxu0
        %v4447 = vadd.f32 0.0, %v4446
        %v4448 = vpop.f32.mrb[0].mxu0
        %4449 = vdwg.mxu0
        %v4450 = vadd.f32 %v3972, %v4420
        %v4451 = vadd.f32 %v3973, %v4423
        %v4452 = vadd.f32 %v3974, %v4428
        %v4453 = vadd.f32 %v3975, %v4431
        %v4454 = vadd.f32 %v3976, %v4436
        %v4455 = vadd.f32 %v3977, %v4439
        %v4456 = vadd.f32 %v3978, %v4444
        %v4457 = vadd.f32 %v3979, %v4447
        %v4458 = vpack.c.bf16 %v4451, %v4450
        %v4459 = vpack.c.bf16 %v4453, %v4452
        %v4460 = vpack.c.bf16 %v4455, %v4454
        %v4461 = vpack.c.bf16 %v4457, %v4456
        %s4462 = scalar_lea.vmem %s3, 80
        %v4463 = vld [vmem:[%s4462] sm:$0xf]
        %v4464 = vld [vmem:[%s4462 + $0x4] sm:$0xf]
        %v4465 = vld [vmem:[%s4462 + $0x8] sm:$0xf]
        %v4466 = vld [vmem:[%s4462 + $0xc] sm:$0xf]
        %s4467 = scalar_lea.vmem %s4, 5
        %v4468 = vld [vmem:[%s4467] sm:$0x1]
        %v4470 = vlaneseq
        %v4471 = vshrl.u32 %v4470, 7
        %v4472 = vsub.s32 0, %v4471
        %v4473 = vrot.slane %v4468, %v4472
        %v4479 = vunpack.c.l.b16 %v4463
        %v4480 = vunpack.c.l.b16 %v4464
        %v4481 = vunpack.c.l.b16 %v4465
        %v4482 = vunpack.c.l.b16 %v4466
        %v4483 = vpack.c.b16 %v4480, %v4479
        %v4484 = vpack.c.b16 %v4482, %v4481
        %v4488 = vsel %vm403, %v4458, 0
        %v4491 = vsel %vm403, %v4459, 0
        %v4494 = vsel %vm403, %v4460, 0
        %v4497 = vsel %vm403, %v4461, 0
        %4499 = vmatprep.subr.bf16.mxu0 0
        %4500 = vmatpush1.bf16.msra.mxu0 %v4483
        %4501 = vmatprep.subr.bf16.mxu0 0
        %4502 = vmatpush1.bf16.msra.mxu0 %v4484
        %4503 = vmatprep.subr.bf16.mxu0 0
        %4504 = vmatpush1.bf16.msra.mxu0 0
        %4505 = vmatprep.subr.bf16.mxu0 0
        %4506 = vmatpush1.bf16.msra.mxu0 0
        %4507 = vmatprep.subr.bf16.mxu0 0
        %4508 = vmatpush1.bf16.msra.mxu0 0
        %4509 = vmatprep.subr.bf16.mxu0 0
        %4510 = vmatpush1.bf16.msra.mxu0 0
        %4511 = vmatprep.subr.bf16.mxu0 0
        %4512 = vmatpush1.bf16.msra.mxu0 0
        %4513 = vmatprep.subr.bf16.mxu0 0
        %4514 = vmatpush1.bf16.msra.mxu0 0
        %4515 = vmatprep.subr.bf16.mxu0 0
        %4516 = vmatpush1.bf16.msra.mxu0 0
        %4517 = vmatprep.subr.bf16.mxu0 0
        %4518 = vmatpush1.bf16.msra.mxu0 0
        %4519 = vmatprep.subr.bf16.mxu0 0
        %4520 = vmatpush1.bf16.msra.mxu0 0
        %4521 = vmatprep.subr.bf16.mxu0 0
        %4522 = vmatpush1.bf16.msra.mxu0 0
        %4523 = vmatprep.subr.bf16.mxu0 0
        %4524 = vmatpush1.bf16.msra.mxu0 0
        %4525 = vmatprep.subr.bf16.mxu0 0
        %4526 = vmatpush1.bf16.msra.mxu0 0
        %4527 = vmatprep.subr.bf16.mxu0 0
        %4528 = vmatpush1.bf16.msra.mxu0 0
        %4529 = vmatprep.subr.bf16.mxu0 0
        %4530 = vmatpush1.bf16.msra.mxu0 0
        %4531 = vmatprep.mubr.bf16.mxu0 0
        %4532 = vmatmul.mubr.bf16.gmra.mrb[0].mxu0 %v4488
        %v4533 = vpop.f32.mrb[0].mxu0
        %v4534 = vadd.f32 %v4473, %v4533
        %v4535 = vpop.f32.mrb[0].mxu0
        %v4536 = vpop.f32.mrb[0].mxu0
        %v4537 = vadd.f32 %v4473, %v4536
        %v4538 = vpop.f32.mrb[0].mxu0
        %4539 = vmatprep.mubr.bf16.mxu0 0
        %4540 = vmatmul.mubr.bf16.gmra.mrb[0].mxu0 %v4491
        %v4541 = vpop.f32.mrb[0].mxu0
        %v4542 = vadd.f32 %v4473, %v4541
        %v4543 = vpop.f32.mrb[0].mxu0
        %v4544 = vpop.f32.mrb[0].mxu0
        %v4545 = vadd.f32 %v4473, %v4544
        %v4546 = vpop.f32.mrb[0].mxu0
        %4547 = vmatprep.mubr.bf16.mxu0 0
        %4548 = vmatmul.mubr.bf16.gmra.mrb[0].mxu0 %v4494
        %v4549 = vpop.f32.mrb[0].mxu0
        %v4550 = vadd.f32 %v4473, %v4549
        %v4551 = vpop.f32.mrb[0].mxu0
        %v4552 = vpop.f32.mrb[0].mxu0
        %v4553 = vadd.f32 %v4473, %v4552
        %v4554 = vpop.f32.mrb[0].mxu0
        %4555 = vmatprep.mubr.bf16.mxu0 0
        %4556 = vmatmul.mubr.bf16.gmra.mrb[0].mxu0 %v4497
        %v4557 = vpop.f32.mrb[0].mxu0
        %v4558 = vadd.f32 %v4473, %v4557
        %v4559 = vpop.f32.mrb[0].mxu0
        %v4560 = vpop.f32.mrb[0].mxu0
        %v4561 = vadd.f32 %v4473, %v4560
        %v4562 = vpop.f32.mrb[0].mxu0
        %4563 = vdwg.mxu0
        %v4564 = vsel %vm403, %v4534, 0.0
        %4565 = vadd.xlane.f32.xlu0 %v4564
        %v4566 = vpop.xlane.xlu0 %4565
        %v4567 = vsel %vm403, %v4537, 0.0
        %4568 = vadd.xlane.f32.xlu0 %v4567
        %v4569 = vpop.xlane.xlu0 %4568
        %v4570 = vsel %vm403, %v4542, 0.0
        %4571 = vadd.xlane.f32.xlu0 %v4570
        %v4572 = vpop.xlane.xlu0 %4571
        %v4573 = vsel %vm403, %v4545, 0.0
        %4574 = vadd.xlane.f32.xlu0 %v4573
        %v4575 = vpop.xlane.xlu0 %4574
        %v4576 = vsel %vm403, %v4550, 0.0
        %4577 = vadd.xlane.f32.xlu0 %v4576
        %v4578 = vpop.xlane.xlu0 %4577
        %v4579 = vsel %vm403, %v4553, 0.0
        %4580 = vadd.xlane.f32.xlu0 %v4579
        %v4581 = vpop.xlane.xlu0 %4580
        %v4582 = vsel %vm403, %v4558, 0.0
        %4583 = vadd.xlane.f32.xlu0 %v4582
        %v4584 = vpop.xlane.xlu0 %4583
        %v4585 = vsel %vm403, %v4561, 0.0
        %4586 = vadd.xlane.f32.xlu0 %v4585
        %v4587 = vpop.xlane.xlu0 %4586
        %v4588 = vmul.f32 %v4566, 0.03125
        %v4589 = vmul.f32 %v4569, 0.03125
        %v4590 = vmul.f32 %v4572, 0.03125
        %v4591 = vmul.f32 %v4575, 0.03125
        %v4592 = vmul.f32 %v4578, 0.03125
        %v4593 = vmul.f32 %v4581, 0.03125
        %v4594 = vmul.f32 %v4584, 0.03125
        %v4595 = vmul.f32 %v4587, 0.03125
        %v4596 = vsub.f32 %v4534, %v4588
        %v4597 = vsub.f32 %v4537, %v4589
        %v4598 = vsub.f32 %v4542, %v4590
        %v4599 = vsub.f32 %v4545, %v4591
        %v4600 = vsub.f32 %v4550, %v4592
        %v4601 = vsub.f32 %v4553, %v4593
        %v4602 = vsub.f32 %v4558, %v4594
        %v4603 = vsub.f32 %v4561, %v4595
        %v4604 = vmul.f32 %v4596, %v4596
        %v4605 = vmul.f32 %v4597, %v4597
        %v4606 = vmul.f32 %v4598, %v4598
        %v4607 = vmul.f32 %v4599, %v4599
        %v4608 = vmul.f32 %v4600, %v4600
        %v4609 = vmul.f32 %v4601, %v4601
        %v4610 = vmul.f32 %v4602, %v4602
        %v4611 = vmul.f32 %v4603, %v4603
        %v4612 = vsel %vm403, %v4604, 0.0
        %4613 = vadd.xlane.f32.xlu0 %v4612
        %v4614 = vpop.xlane.xlu0 %4613
        %v4615 = vsel %vm403, %v4605, 0.0
        %4616 = vadd.xlane.f32.xlu0 %v4615
        %v4617 = vpop.xlane.xlu0 %4616
        %v4618 = vsel %vm403, %v4606, 0.0
        %4619 = vadd.xlane.f32.xlu0 %v4618
        %v4620 = vpop.xlane.xlu0 %4619
        %v4621 = vsel %vm403, %v4607, 0.0
        %4622 = vadd.xlane.f32.xlu0 %v4621
        %v4623 = vpop.xlane.xlu0 %4622
        %v4624 = vsel %vm403, %v4608, 0.0
        %4625 = vadd.xlane.f32.xlu0 %v4624
        %v4626 = vpop.xlane.xlu0 %4625
        %v4627 = vsel %vm403, %v4609, 0.0
        %4628 = vadd.xlane.f32.xlu0 %v4627
        %v4629 = vpop.xlane.xlu0 %4628
        %v4630 = vsel %vm403, %v4610, 0.0
        %4631 = vadd.xlane.f32.xlu0 %v4630
        %v4632 = vpop.xlane.xlu0 %4631
        %v4633 = vsel %vm403, %v4611, 0.0
        %4634 = vadd.xlane.f32.xlu0 %v4633
        %v4635 = vpop.xlane.xlu0 %4634
        %v4636 = vmul.f32 %v4614, 0.03125
        %v4637 = vmul.f32 %v4617, 0.03125
        %v4638 = vmul.f32 %v4620, 0.03125
        %v4639 = vmul.f32 %v4623, 0.03125
        %v4640 = vmul.f32 %v4626, 0.03125
        %v4641 = vmul.f32 %v4629, 0.03125
        %v4642 = vmul.f32 %v4632, 0.03125
        %v4643 = vmul.f32 %v4635, 0.03125
        %v4644 = vadd.f32 %v4636, 1e-05
        %v4645 = vadd.f32 %v4637, 1e-05
        %v4646 = vadd.f32 %v4638, 1e-05
        %v4647 = vadd.f32 %v4639, 1e-05
        %v4648 = vadd.f32 %v4640, 1e-05
        %v4649 = vadd.f32 %v4641, 1e-05
        %v4650 = vadd.f32 %v4642, 1e-05
        %v4651 = vadd.f32 %v4643, 1e-05
        %v4652 = vrsqrt.pop %v4644
        %v4653 = vrsqrt.pop %v4645
        %v4654 = vrsqrt.pop %v4646
        %v4655 = vrsqrt.pop %v4647
        %v4656 = vrsqrt.pop %v4648
        %v4657 = vrsqrt.pop %v4649
        %v4658 = vrsqrt.pop %v4650
        %v4659 = vrsqrt.pop %v4651
        %v4660 = vmul.f32 %v4596, %v4652
        %v4661 = vmul.f32 %v4597, %v4653
        %v4662 = vmul.f32 %v4598, %v4654
        %v4663 = vmul.f32 %v4599, %v4655
        %v4664 = vmul.f32 %v4600, %v4656
        %v4665 = vmul.f32 %v4601, %v4657
        %v4666 = vmul.f32 %v4602, %v4658
        %v4667 = vmul.f32 %v4603, %v4659
        %s4668 = scalar_lea.vmem %s5, 5
        %v4669 = vld [vmem:[%s4668] sm:$0x1]
        %v4671 = vlaneseq
        %v4672 = vshrl.u32 %v4671, 7
        %v4673 = vsub.s32 0, %v4672
        %v4674 = vrot.slane %v4669, %v4673
        %v4676 = vmul.f32 %v4660, %v4674
        %v4677 = vmul.f32 %v4661, %v4674
        %v4678 = vmul.f32 %v4662, %v4674
        %v4679 = vmul.f32 %v4663, %v4674
        %v4680 = vmul.f32 %v4664, %v4674
        %v4681 = vmul.f32 %v4665, %v4674
        %v4682 = vmul.f32 %v4666, %v4674
        %v4683 = vmul.f32 %v4667, %v4674
        %s4684 = scalar_lea.vmem %s6, 5
        %v4685 = vld [vmem:[%s4684] sm:$0x1]
        %v4687 = vlaneseq
        %v4688 = vshrl.u32 %v4687, 7
        %v4689 = vsub.s32 0, %v4688
        %v4690 = vrot.slane %v4685, %v4689
        %v4692 = vadd.f32 %v4676, %v4690
        %v4693 = vadd.f32 %v4677, %v4690
        %v4694 = vadd.f32 %v4678, %v4690
        %v4695 = vadd.f32 %v4679, %v4690
        %v4696 = vadd.f32 %v4680, %v4690
        %v4697 = vadd.f32 %v4681, %v4690
        %v4698 = vadd.f32 %v4682, %v4690
        %v4699 = vadd.f32 %v4683, %v4690
        %v4700 = vadd.f32 %v4692, %v372
        %v4701 = vadd.f32 %v4693, %v373
        %v4702 = vadd.f32 %v4694, %v374
        %v4703 = vadd.f32 %v4695, %v375
        %v4704 = vadd.f32 %v4696, %v376
        %v4705 = vadd.f32 %v4697, %v377
        %v4706 = vadd.f32 %v4698, %v378
        %v4707 = vadd.f32 %v4699, %v379
        %4708 = vst.msk [vmem:[%s353] sm:$0xff] %vm403, %v4700
        %4709 = vst.msk [vmem:[%s353 + $0x8] sm:$0xff] %vm403, %v4701
        %4710 = vst.msk [vmem:[%s353 + $0x10] sm:$0xff] %vm403, %v4702
        %4711 = vst.msk [vmem:[%s353 + $0x18] sm:$0xff] %vm403, %v4703
        %4712 = vst.msk [vmem:[%s353 + $0x20] sm:$0xff] %vm403, %v4704
        %4713 = vst.msk [vmem:[%s353 + $0x28] sm:$0xff] %vm403, %v4705
        %4714 = vst.msk [vmem:[%s353 + $0x30] sm:$0xff] %vm403, %v4706
        %4715 = vst.msk [vmem:[%s353 + $0x38] sm:$0xff] %vm403, %v4707
        %v4716 = vpack.c.bf16 %v4701, %v4700
        %v4717 = vpack.c.bf16 %v4703, %v4702
        %v4718 = vpack.c.bf16 %v4705, %v4704
        %v4719 = vpack.c.bf16 %v4707, %v4706
        %v4720 = vld [vmem:[%s7] sm:$0xf]
        %v4721 = vld [vmem:[%s7 + $0x4] sm:$0xf]
        %v4722 = vld [vmem:[%s7 + $0x8] sm:$0xf]
        %v4723 = vld [vmem:[%s7 + $0xc] sm:$0xf]
        %v4724 = vld [vmem:[%s8] sm:$0x1]
        %v4726 = vlaneseq
        %v4727 = vshrl.u32 %v4726, 7
        %v4728 = vsub.s32 0, %v4727
        %v4729 = vrot.slane %v4724, %v4728
        %v4735 = vunpack.c.l.b16 %v4720
        %v4736 = vunpack.c.l.b16 %v4721
        %v4737 = vunpack.c.l.b16 %v4722
        %v4738 = vunpack.c.l.b16 %v4723
        %v4739 = vpack.c.b16 %v4736, %v4735
        %v4740 = vpack.c.b16 %v4738, %v4737
        %v4744 = vsel %vm403, %v4716, 0
        %v4747 = vsel %vm403, %v4717, 0
        %v4750 = vsel %vm403, %v4718, 0
        %v4753 = vsel %vm403, %v4719, 0
        %4755 = vmatprep.subr.bf16.mxu0 0
        %4756 = vmatpush1.bf16.msra.mxu0 %v4739
        %4757 = vmatprep.subr.bf16.mxu0 0
        %4758 = vmatpush1.bf16.msra.mxu0 %v4740
        %4759 = vmatprep.subr.bf16.mxu0 0
        %4760 = vmatpush1.bf16.msra.mxu0 0
        %4761 = vmatprep.subr.bf16.mxu0 0
        %4762 = vmatpush1.bf16.msra.mxu0 0
        %4763 = vmatprep.subr.bf16.mxu0 0
        %4764 = vmatpush1.bf16.msra.mxu0 0
        %4765 = vmatprep.subr.bf16.mxu0 0
        %4766 = vmatpush1.bf16.msra.mxu0 0
        %4767 = vmatprep.subr.bf16.mxu0 0
        %4768 = vmatpush1.bf16.msra.mxu0 0
        %4769 = vmatprep.subr.bf16.mxu0 0
        %4770 = vmatpush1.bf16.msra.mxu0 0
        %4771 = vmatprep.subr.bf16.mxu0 0
        %4772 = vmatpush1.bf16.msra.mxu0 0
        %4773 = vmatprep.subr.bf16.mxu0 0
        %4774 = vmatpush1.bf16.msra.mxu0 0
        %4775 = vmatprep.subr.bf16.mxu0 0
        %4776 = vmatpush1.bf16.msra.mxu0 0
        %4777 = vmatprep.subr.bf16.mxu0 0
        %4778 = vmatpush1.bf16.msra.mxu0 0
        %4779 = vmatprep.subr.bf16.mxu0 0
        %4780 = vmatpush1.bf16.msra.mxu0 0
        %4781 = vmatprep.subr.bf16.mxu0 0
        %4782 = vmatpush1.bf16.msra.mxu0 0
        %4783 = vmatprep.subr.bf16.mxu0 0
        %4784 = vmatpush1.bf16.msra.mxu0 0
        %4785 = vmatprep.subr.bf16.mxu0 0
        %4786 = vmatpush1.bf16.msra.mxu0 0
        %4787 = vmatprep.mubr.bf16.mxu0 0
        %4788 = vmatmul.mubr.bf16.gmra.mrb[0].mxu0 %v4744
        %v4789 = vpop.f32.mrb[0].mxu0
        %v4790 = vadd.f32 %v4729, %v4789
        %v4791 = vpop.f32.mrb[0].mxu0
        %v4792 = vpop.f32.mrb[0].mxu0
        %v4793 = vadd.f32 %v4729, %v4792
        %v4794 = vpop.f32.mrb[0].mxu0
        %4795 = vmatprep.mubr.bf16.mxu0 0
        %4796 = vmatmul.mubr.bf16.gmra.mrb[0].mxu0 %v4747
        %v4797 = vpop.f32.mrb[0].mxu0
        %v4798 = vadd.f32 %v4729, %v4797
        %v4799 = vpop.f32.mrb[0].mxu0
        %v4800 = vpop.f32.mrb[0].mxu0
        %v4801 = vadd.f32 %v4729, %v4800
        %v4802 = vpop.f32.mrb[0].mxu0
        %4803 = vmatprep.mubr.bf16.mxu0 0
        %4804 = vmatmul.mubr.bf16.gmra.mrb[0].mxu0 %v4750
        %v4805 = vpop.f32.mrb[0].mxu0
        %v4806 = vadd.f32 %v4729, %v4805
        %v4807 = vpop.f32.mrb[0].mxu0
        %v4808 = vpop.f32.mrb[0].mxu0
        %v4809 = vadd.f32 %v4729, %v4808
        %v4810 = vpop.f32.mrb[0].mxu0
        %4811 = vmatprep.mubr.bf16.mxu0 0
        %4812 = vmatmul.mubr.bf16.gmra.mrb[0].mxu0 %v4753
        %v4813 = vpop.f32.mrb[0].mxu0
        %v4814 = vadd.f32 %v4729, %v4813
        %v4815 = vpop.f32.mrb[0].mxu0
        %v4816 = vpop.f32.mrb[0].mxu0
        %v4817 = vadd.f32 %v4729, %v4816
        %v4818 = vpop.f32.mrb[0].mxu0
        %4819 = vdwg.mxu0
        %v4820 = vlaneseq
        %v4821 = vshrl.u32 %v4820, 7
        %vm4822 = vcmp.eq.s32.totalorder %v4821, 0
        %vm4823 = vcmp.eq.s32.totalorder %v4821, 1
        %vm4824 = vcmp.eq.s32.totalorder %v4821, 2
        %vm4825 = vcmp.eq.s32.totalorder %v4821, 3
        %vm4826 = vcmp.eq.s32.totalorder %v4821, 4
        %vm4827 = vcmp.eq.s32.totalorder %v4821, 5
        %vm4828 = vcmp.eq.s32.totalorder %v4821, 6
        %vm4829 = vcmp.eq.s32.totalorder %v4821, 7
        %v4830 = vsel %vm4822, 0.0, %v4790
        %v4831 = vsel %vm4823, 0.0, %v4793
        %v4832 = vsel %vm4824, 0.0, %v4798
        %v4833 = vsel %vm4825, 0.0, %v4801
        %v4834 = vsel %vm4826, 0.0, %v4806
        %v4835 = vsel %vm4827, 0.0, %v4809
        %v4836 = vsel %vm4828, 0.0, %v4814
        %v4837 = vsel %vm4829, 0.0, %v4817
        %vm4838 = vcmask 31744
        %4839 = vst.msk [vmem:[%s370] sm:$0xff] %vm4838, %v4830
        %4840 = vst.msk [vmem:[%s370 + $0x8] sm:$0xff] %vm4838, %v4831
        %4841 = vst.msk [vmem:[%s370 + $0x10] sm:$0xff] %vm4838, %v4832
        %4842 = vst.msk [vmem:[%s370 + $0x18] sm:$0xff] %vm4838, %v4833
        %4843 = vst.msk [vmem:[%s370 + $0x20] sm:$0xff] %vm4838, %v4834
        %4844 = vst.msk [vmem:[%s370 + $0x28] sm:$0xff] %vm4838, %v4835
        %4845 = vst.msk [vmem:[%s370 + $0x30] sm:$0xff] %vm4838, %v4836
        %4846 = vst.msk [vmem:[%s370 + $0x38] sm:$0xff] %vm4838, %v4837
        %s4847 = sand.u32 %s227, 1
        %s4848 = scalar_lea.sflag [#allocation3], %s4847
        %s4849 = sand.u32 %s227, 1
        %s4850 = smul.addr %s4849, 64
        %s4851 = scalar_lea.vmem [#allocation2], %s4850
        %p4852 = scmp.lt.s32.totalorder %s25, 1
        %s4853 = scalar_select %p4852, %s25, 1
        %s4854 = smul.addr %s4853, 8
        %s4855 = smul.addr %s4854, 8
        %s4856 = scalar_lea.vmem %s10, %s4855
        // Predicated region
        $region57: #{tpu_custom_call.1} parent=55 // pred_check
          %p4857 = pneg %p237
        $region58: #{tpu_custom_call.1} parent=55 // pred_check_branch
          %4859 = sbr.rel (%p4857) target = $region60
        $region59: #{tpu_custom_call.1} parent=55 // pred_region
          %s4861 = ssub.s32 1024, 1024
          %4862 = vsyncadd %s4848, %s4861
          %s4863 = smul.addr %s25, 8
          %s4864 = smul.addr %s4863, 128
          %s4865 = scalar_lea.hbm %s9, %s4864
          %s4866 = sshll.u32 %s4851, 4
          %s4867 = int_to_ptr.vmem [resolvable:$true] %s4866
          %4872 = dma.vmem_to_hbm [thread:$0]  %s4867, 1024, %s4865, %s4848, 128, 128, 8
        $region60: #{tpu_custom_call.1} parent=55 // pred_fallthru
          _
        // Predicated region
        $region61: #{tpu_custom_call.1} parent=55 // pred_check
          %p4873 = pneg %p263
        $region62: #{tpu_custom_call.1} parent=55 // pred_check_branch
          %4875 = sbr.rel (%p4873) target = $region64
        $region63: #{tpu_custom_call.1} parent=55 // pred_region
          _
        $region64: #{tpu_custom_call.1} parent=55 // pred_fallthru
          _
      $region56: #{tpu_custom_call.1} parent=5 // pred_fallthru
        _
      %p4876 = scmp.le.s32.totalorder 2, %s20
      // Predicated region
      $region65: #{tpu_custom_call.1} parent=5 // pred_check
        %p4877 = pneg %p4876
      $region66: #{tpu_custom_call.1} parent=5 // pred_check_branch
        %4879 = sbr.rel (%p4877) target = $region68
      $region67: #{tpu_custom_call.1} parent=5 // pred_region
        %s4880 = ssub.s32 %s20, 2
        // Predicated region
        $region69: #{tpu_custom_call.1} parent=67 // pred_check
          %p4881 = pneg %p243
        $region70: #{tpu_custom_call.1} parent=67 // pred_check_branch
          %4883 = sbr.rel (%p4881) target = $region72
        $region71: #{tpu_custom_call.1} parent=67 // pred_region
          %s4884 = sand.u32 %s228, 1
          %s4885 = scalar_lea.sflag [#allocation3], %s4884
          %s4886 = sand.u32 %s228, 1
          %s4887 = smul.addr %s4886, 64
          %s4888 = scalar_lea.vmem [#allocation2], %s4887
          %4889 = dma.done %s4885, 1024
        $region72: #{tpu_custom_call.1} parent=67 // pred_fallthru
          _
        // Predicated region
        $region73: #{tpu_custom_call.1} parent=67 // pred_check
          %p4890 = pneg %p269
        $region74: #{tpu_custom_call.1} parent=67 // pred_check_branch
          %4892 = sbr.rel (%p4890) target = $region76
        $region75: #{tpu_custom_call.1} parent=67 // pred_region
          %p4893 = scmp.lt.s32.totalorder %s26, 1
          %s4894 = scalar_select %p4893, %s26, 1
          %s4895 = smul.addr %s4894, 8
          %s4896 = smul.addr %s4895, 8
          %s4897 = scalar_lea.vmem %s10, %s4896
        $region76: #{tpu_custom_call.1} parent=67 // pred_fallthru
          _
      $region68: #{tpu_custom_call.1} parent=5 // pred_fallthru
        _
    $region6: #{tpu_custom_call.1} parent=1 // loop_footer
      %s24 = sadd.s32 1, %s20
    $region7: #{tpu_custom_call.1} parent=1 // loop_footer_branch
      %19 = sbr.rel target = $region3
    $region8: #{tpu_custom_call.1} parent=1 // loop_exit
      _
    %4898 = vsyncpa [#allocation3], 1
    %s4899 = scalar_lea.sflag [#allocation3], 1
    %4900 = vsyncpa %s4899, 1

</llo_original>
